<compile_context>
chip_gen: v7x
topology: tpu7x:2x2x1
jax: 0.10.0
libtpu: 0.0.40
codegen_flags: <defaults>
</compile_context>

<pallas_src>
import functools

import jax
import jax.numpy as jnp
from jax.experimental import pallas as pl
from jax.experimental.pallas import tpu as pltpu

# ---------------- model hyper-params (synthetic, deterministic init) -----------
DIM = 32
DIM_HEAD = 16
HEADS = 4
INNER = DIM_HEAD * HEADS          # 64
LN_EPS = 1e-5
SCALE = DIM_HEAD ** (-0.5)


def _layernorm(t, w, b):
    # PyTorch LayerNorm: biased variance, eps inside sqrt; f32 elementwise math.
    m = jnp.mean(t, axis=-1, keepdims=True)
    v = jnp.mean((t - m) ** 2, axis=-1, keepdims=True)
    return (t - m) * jax.lax.rsqrt(v + LN_EPS) * w + b


def _bmm(a, b):
    # (g, m, k) @ (g, k, n) -> (g, m, n), f32 accumulation on the MXU.
    return jax.lax.dot_general(
        a, b, dimension_numbers=(((2,), (1,)), ((0,), (0,))),
        preferred_element_type=jnp.float32)


def _bmm_nt(a, b):
    # (g, m, k) @ (g, n, k)^T -> (g, m, n), f32 accumulation on the MXU.
    return jax.lax.dot_general(
        a, b, dimension_numbers=(((2,), (2,)), ((0,), (0,))),
        preferred_element_type=jnp.float32)


def _perceiver_attn_kernel(x_ref, lat_ref, ln_ref, wkv_ref, wqkv_ref, wout_ref,
                           out_ref, *, bt, n_x, n_l):
    d = x_ref.shape[-1]
    h, dh, inner = HEADS, DIM_HEAD, INNER

    ln = ln_ref[...]                                            # (8, D) f32
    xn = _layernorm(x_ref[...], ln[0:1, :], ln[1:2, :])         # (bt*N_x, D) f32
    latn = _layernorm(lat_ref[...], ln[2:3, :], ln[3:4, :])     # (bt*N_l, D) f32

    # Two lane-wide projection matmuls (bf16 inputs, f32 accumulation).
    kv_x = jnp.dot(xn.astype(jnp.bfloat16), wkv_ref[...],
                   preferred_element_type=jnp.float32)          # (bt*N_x, 2*INNER)
    qkv_l = jnp.dot(latn.astype(jnp.bfloat16), wqkv_ref[...],
                    preferred_element_type=jnp.float32)         # (bt*N_l, 3*INNER)

    # Fold the module's double scaling (q*scale then sim*scale) into one mul.
    q2 = qkv_l[:, :inner] * (SCALE * SCALE)                     # (bt*N_l, INNER)
    kl2 = qkv_l[:, inner:2 * inner]
    vl2 = qkv_l[:, 2 * inner:]
    kx2 = kv_x[:, :inner]
    vx2 = kv_x[:, inner:]

    def split_heads(t2, n):
        # (bt*n, h*dh) -> (h*bt, n, dh); group index g = head*bt + batch.
        # Static lane slices + leading-dim reshapes + leading-axis concat only.
        parts = [t2[:, i * dh:(i + 1) * dh].reshape(bt, n, dh) for i in range(h)]
        return jnp.concatenate(parts, axis=0)

    qh = split_heads(q2, n_l).astype(jnp.bfloat16)              # (h*bt, N_l, dh)
    kxh = split_heads(kx2, n_x).astype(jnp.bfloat16)            # (h*bt, N_x, dh)
    vxh = split_heads(vx2, n_x).astype(jnp.bfloat16)
    klh = split_heads(kl2, n_l).astype(jnp.bfloat16)            # (h*bt, N_l, dh)
    vlh = split_heads(vl2, n_l).astype(jnp.bfloat16)

    # Joint two-block softmax over [x tokens ; latent tokens] (== softmax over
    # the concatenated kv axis, without materializing the concatenation).
    sim_x = _bmm_nt(qh, kxh)                                    # (h*bt, N_l, N_x) f32
    sim_l = _bmm_nt(qh, klh)                                    # (h*bt, N_l, N_l) f32
    m = jnp.maximum(jnp.max(sim_x, axis=-1, keepdims=True),
                    jnp.max(sim_l, axis=-1, keepdims=True))
    px = jnp.exp(sim_x - m)
    pl_ = jnp.exp(sim_l - m)
    denom = (jnp.sum(px, axis=-1, keepdims=True)
             + jnp.sum(pl_, axis=-1, keepdims=True))
    num = (_bmm(px.astype(jnp.bfloat16), vxh)
           + _bmm(pl_.astype(jnp.bfloat16), vlh))               # (h*bt, N_l, dh) f32
    o_h = num * pl.reciprocal(denom, approx=True)

    # Merge heads back onto lanes: (h*bt, N_l, dh) -> (bt*N_l, h*dh).
    o_parts = [o_h[i * bt:(i + 1) * bt].reshape(bt * n_l, dh) for i in range(h)]
    o_cat = jnp.concatenate(o_parts, axis=-1)                   # (bt*N_l, INNER) f32

    # Single output projection (K=64) + final LayerNorm, single full-block store.
    o = jnp.dot(o_cat.astype(jnp.bfloat16), wout_ref[...],
                preferred_element_type=jnp.float32)             # (bt*N_l, D)
    o = _layernorm(o, ln[4:5, :], ln[5:6, :])
    out_ref[...] = o.astype(out_ref.dtype)


def _choose_batch_tile(batch, max_tile=256):
    # Largest divisor of `batch` <= max_tile. No forced >=2 grid steps: for
    # small batches one big grid step beats splitting overhead-bound steps
    # across TensorCores. Input/output blocks at bt=256 are ~1 MiB, well within
    # every generation's VMEM (incl. v7x's 64 MiB) and the scoped defaults.
    divisors = [t for t in range(1, batch + 1) if batch % t == 0 and t <= max_tile]
    return max(divisors)


def perceiver_attention(x, latents, params, batch_tile=None):
    B, N_x, D = x.shape
    _, N_l, _ = latents.shape
    assert D == DIM

    bt = batch_tile if batch_tile is not None else _choose_batch_tile(B)
    assert B % bt == 0, "batch_tile must divide the batch size"

    # Flatten tokens into rows so every block's HBM footprint is contiguous and
    # the kernel needs no in-kernel input reshapes.
    x2 = x.reshape(B * N_x, D)
    lat2 = latents.reshape(B * N_l, D)

    # Pack the six (1, D) LayerNorm params into a single (8, D) stream.
    ln_packed = jnp.concatenate(
        [params["ln_x_w"], params["ln_x_b"],
         params["ln_l_w"], params["ln_l_b"],
         params["ln_o_w"], params["ln_o_b"],
         jnp.zeros((2, D), jnp.float32)], axis=0)               # (8, D)

    # Lane-concatenated projection weights (bf16 at the MXU boundary).
    wkv_b = params["wkv"].astype(jnp.bfloat16)                                   # (D, 2*INNER)
    wqkv_b = jnp.concatenate([params["wq"], params["wkv"]], axis=1).astype(jnp.bfloat16)  # (D, 3*INNER)
    wout_b = params["wout"].astype(jnp.bfloat16)                                 # (INNER, D)

    kernel = functools.partial(_perceiver_attn_kernel, bt=bt, n_x=N_x, n_l=N_l)

    grid_spec = pltpu.PrefetchScalarGridSpec(
        num_scalar_prefetch=0,
        grid=(B // bt,),
        in_specs=[
            pl.BlockSpec((bt * N_x, D), lambda b: (b, 0)),       # x rows
            pl.BlockSpec((bt * N_l, D), lambda b: (b, 0)),       # latent rows
            pl.BlockSpec((8, D), lambda b: (0, 0)),              # packed LN params
            pl.BlockSpec((D, 2 * INNER), lambda b: (0, 0)),      # [Wk || Wv]
            pl.BlockSpec((D, 3 * INNER), lambda b: (0, 0)),      # [Wq || Wk || Wv]
            pl.BlockSpec((INNER, D), lambda b: (0, 0)),          # W_out
        ],
        out_specs=pl.BlockSpec((bt * N_l, D), lambda b: (b, 0)),
    )

    out2 = pl.pallas_call(
        kernel,
        out_shape=jax.ShapeDtypeStruct((B * N_l, D), x.dtype),
        grid_spec=grid_spec,
        compiler_params=pltpu.CompilerParams(dimension_semantics=("parallel",)),
    )(x2, lat2, ln_packed, wkv_b, wqkv_b, wout_b)

    return out2.reshape(B, N_l, D)


# --------------------------- pure-JAX reference ---------------------------------
def perceiver_attention_ref(x, latents, params):
    xn = _layernorm(x, params["ln_x_w"], params["ln_x_b"])
    latn = _layernorm(latents, params["ln_l_w"], params["ln_l_b"])
    q = jnp.einsum("bnd,de->bne", latn, params["wq"])
    kv_in = jnp.concatenate([xn, latn], axis=1)
    kv = jnp.einsum("bnd,de->bne", kv_in, params["wkv"])
    k, v = kv[..., :INNER], kv[..., INNER:]

    def split_heads(t):
        b, n, _ = t.shape
        return t.reshape(b, n, HEADS, DIM_HEAD).transpose(0, 2, 1, 3)

    q, k, v = map(split_heads, (q, k, v))
    q = q * SCALE
    sim = jnp.einsum("bhid,bhjd->bhij", q, k) * SCALE
    attn = jax.nn.softmax(sim.astype(jnp.float32), axis=-1)
    out = jnp.einsum("bhij,bhjd->bhid", attn, v)
    out = out.transpose(0, 2, 1, 3).reshape(x.shape[0], latents.shape[1], INNER)
    out = jnp.einsum("bne,ed->bnd", out, params["wout"])
    return _layernorm(out, params["ln_o_w"], params["ln_o_b"])


if __name__ == "__main__":
    key = jax.random.PRNGKey(0)
    kx, kl, k1, k2, k3 = jax.random.split(key, 5)

    B, N_X, N_L = 4, 16, 8
    x = jax.random.normal(kx, (B, N_X, DIM), dtype=jnp.float32)
    latents = jax.random.normal(kl, (B, N_L, DIM), dtype=jnp.float32)

    params = {
        # LayerNorms: init like PyTorch (weight=1, bias=0); kept 2-D (1, D).
        "ln_x_w": jnp.ones((1, DIM), jnp.float32),
        "ln_x_b": jnp.zeros((1, DIM), jnp.float32),
        "ln_l_w": jnp.ones((1, DIM), jnp.float32),
        "ln_l_b": jnp.zeros((1, DIM), jnp.float32),
        "ln_o_w": jnp.ones((1, DIM), jnp.float32),
        "ln_o_b": jnp.zeros((1, DIM), jnp.float32),
        # Linear layers (bias=False); deterministic random init.
        "wq": jax.random.normal(k1, (DIM, INNER), jnp.float32) * 0.05,
        "wkv": jax.random.normal(k2, (DIM, 2 * INNER), jnp.float32) * 0.05,
        "wout": jax.random.normal(k3, (INNER, DIM), jnp.float32) * 0.05,
    }

    out = perceiver_attention(x, latents, params)   # bt=4 -> single grid step
    out = jax.block_until_ready(out)

    ref = perceiver_attention_ref(x, latents, params)
    assert out.shape == (B, N_L, DIM)
    max_err = float(jnp.max(jnp.abs(out - ref)))
    # Tolerance covers bf16 MXU inputs (with f32 accumulation) and the approx
    # reciprocal vs the all-f32 module reference; outputs are LayerNorm'd to
    # unit scale so absolute error ~= accumulated relative error of bf16 math.
    assert jnp.allclose(out, ref, atol=4e-2, rtol=4e-2), (
        f"mismatch vs reference (max abs err {max_err})")

    print("KERNEL_OK")
</pallas_src>

<mosaic_0001>
module attributes {stable_mosaic.version = 11 : i64} {
  func.func @_perceiver_attn_kernel(%arg0: i32, %arg1: memref<64x32xf32, #tpu.memory_space<vmem>>, %arg2: memref<32x32xf32, #tpu.memory_space<vmem>>, %arg3: memref<8x32xf32, #tpu.memory_space<vmem>>, %arg4: memref<32x128xbf16, #tpu.memory_space<vmem>>, %arg5: memref<32x192xbf16, #tpu.memory_space<vmem>>, %arg6: memref<64x32xbf16, #tpu.memory_space<vmem>>, %arg7: memref<32x32xf32, #tpu.memory_space<vmem>>) attributes {dimension_semantics = [#tpu.dimension_semantics<parallel>], iteration_bounds = array<i64: 1>, scalar_prefetch = 0 : i64, scratch_operands = 0 : i64, tpu.core_type = #tpu.core_type<tc>, window_params = [{transform_indices = @transform_0, window_bounds = array<i64: 64, 32>}, {transform_indices = @transform_1, window_bounds = array<i64: 32, 32>}, {pipeline_mode = #tpu.pipeline_mode<synchronous>, transform_indices = @transform_2, window_bounds = array<i64: 8, 32>}, {pipeline_mode = #tpu.pipeline_mode<synchronous>, transform_indices = @transform_3, window_bounds = array<i64: 32, 128>}, {pipeline_mode = #tpu.pipeline_mode<synchronous>, transform_indices = @transform_4, window_bounds = array<i64: 32, 192>}, {pipeline_mode = #tpu.pipeline_mode<synchronous>, transform_indices = @transform_5, window_bounds = array<i64: 64, 32>}, {transform_indices = @transform_6, window_bounds = array<i64: 32, 32>}]} {
    %c0 = arith.constant 0 : index
    %c0_0 = arith.constant 0 : index
    %0 = vector.load %arg3[%c0, %c0_0] : memref<8x32xf32, #tpu.memory_space<vmem>>, vector<8x32xf32>
    %c0_1 = arith.constant 0 : index
    %c0_2 = arith.constant 0 : index
    %1 = vector.load %arg1[%c0_1, %c0_2] : memref<64x32xf32, #tpu.memory_space<vmem>>, vector<64x32xf32>
    %2 = vector.extract_strided_slice %0 {offsets = [0, 0], sizes = [1, 32], strides = [1, 1]} : vector<8x32xf32> to vector<1x32xf32>
    %3 = vector.extract_strided_slice %0 {offsets = [1, 0], sizes = [1, 32], strides = [1, 1]} : vector<8x32xf32> to vector<1x32xf32>
    %cst = arith.constant dense<0.000000e+00> : vector<64xf32>
    %4 = vector.multi_reduction <add>, %1, %cst [1] : vector<64x32xf32> to vector<64xf32>
    %5 = vector.shape_cast %4 : vector<64xf32> to vector<64x1xf32>
    %cst_3 = arith.constant 3.200000e+01 : f32
    %6 = vector.broadcast %cst_3 : f32 to vector<64x1xf32>
    %7 = arith.divf %5, %6 : vector<64x1xf32>
    %8 = vector.broadcast %7 : vector<64x1xf32> to vector<64x32xf32>
    %9 = arith.subf %1, %8 : vector<64x32xf32>
    %10 = arith.mulf %9, %9 : vector<64x32xf32>
    %cst_4 = arith.constant dense<0.000000e+00> : vector<64xf32>
    %11 = vector.multi_reduction <add>, %10, %cst_4 [1] : vector<64x32xf32> to vector<64xf32>
    %12 = vector.shape_cast %11 : vector<64xf32> to vector<64x1xf32>
    %cst_5 = arith.constant 3.200000e+01 : f32
    %13 = vector.broadcast %cst_5 : f32 to vector<64x1xf32>
    %14 = arith.divf %12, %13 : vector<64x1xf32>
    %15 = vector.broadcast %7 : vector<64x1xf32> to vector<64x32xf32>
    %16 = arith.subf %1, %15 : vector<64x32xf32>
    %cst_6 = arith.constant 9.99999974E-6 : f32
    %17 = vector.broadcast %cst_6 : f32 to vector<64x1xf32>
    %18 = arith.addf %14, %17 : vector<64x1xf32>
    %19 = math.rsqrt %18 : vector<64x1xf32>
    %20 = vector.broadcast %19 : vector<64x1xf32> to vector<64x32xf32>
    %21 = arith.mulf %16, %20 : vector<64x32xf32>
    %22 = vector.broadcast %2 : vector<1x32xf32> to vector<64x32xf32>
    %23 = arith.mulf %21, %22 : vector<64x32xf32>
    %24 = vector.broadcast %3 : vector<1x32xf32> to vector<64x32xf32>
    %25 = arith.addf %23, %24 : vector<64x32xf32>
    %c0_7 = arith.constant 0 : index
    %c0_8 = arith.constant 0 : index
    %26 = vector.load %arg2[%c0_7, %c0_8] : memref<32x32xf32, #tpu.memory_space<vmem>>, vector<32x32xf32>
    %27 = vector.extract_strided_slice %0 {offsets = [2, 0], sizes = [1, 32], strides = [1, 1]} : vector<8x32xf32> to vector<1x32xf32>
    %28 = vector.extract_strided_slice %0 {offsets = [3, 0], sizes = [1, 32], strides = [1, 1]} : vector<8x32xf32> to vector<1x32xf32>
    %cst_9 = arith.constant dense<0.000000e+00> : vector<32xf32>
    %29 = vector.multi_reduction <add>, %26, %cst_9 [1] : vector<32x32xf32> to vector<32xf32>
    %30 = vector.shape_cast %29 : vector<32xf32> to vector<32x1xf32>
    %cst_10 = arith.constant 3.200000e+01 : f32
    %31 = vector.broadcast %cst_10 : f32 to vector<32x1xf32>
    %32 = arith.divf %30, %31 : vector<32x1xf32>
    %33 = vector.broadcast %32 : vector<32x1xf32> to vector<32x32xf32>
    %34 = arith.subf %26, %33 : vector<32x32xf32>
    %35 = arith.mulf %34, %34 : vector<32x32xf32>
    %cst_11 = arith.constant dense<0.000000e+00> : vector<32xf32>
    %36 = vector.multi_reduction <add>, %35, %cst_11 [1] : vector<32x32xf32> to vector<32xf32>
    %37 = vector.shape_cast %36 : vector<32xf32> to vector<32x1xf32>
    %cst_12 = arith.constant 3.200000e+01 : f32
    %38 = vector.broadcast %cst_12 : f32 to vector<32x1xf32>
    %39 = arith.divf %37, %38 : vector<32x1xf32>
    %40 = vector.broadcast %32 : vector<32x1xf32> to vector<32x32xf32>
    %41 = arith.subf %26, %40 : vector<32x32xf32>
    %cst_13 = arith.constant 9.99999974E-6 : f32
    %42 = vector.broadcast %cst_13 : f32 to vector<32x1xf32>
    %43 = arith.addf %39, %42 : vector<32x1xf32>
    %44 = math.rsqrt %43 : vector<32x1xf32>
    %45 = vector.broadcast %44 : vector<32x1xf32> to vector<32x32xf32>
    %46 = arith.mulf %41, %45 : vector<32x32xf32>
    %47 = vector.broadcast %27 : vector<1x32xf32> to vector<32x32xf32>
    %48 = arith.mulf %46, %47 : vector<32x32xf32>
    %49 = vector.broadcast %28 : vector<1x32xf32> to vector<32x32xf32>
    %50 = arith.addf %48, %49 : vector<32x32xf32>
    %51 = arith.truncf %25 : vector<64x32xf32> to vector<64x32xbf16>
    %c0_14 = arith.constant 0 : index
    %c0_15 = arith.constant 0 : index
    %52 = vector.load %arg4[%c0_14, %c0_15] : memref<32x128xbf16, #tpu.memory_space<vmem>>, vector<32x128xbf16>
    %cst_16 = arith.constant dense<0.000000e+00> : vector<64x128xf32>
    %53 = tpu.matmul %51, %52, %cst_16 {dimension_numbers = #tpu.dot_dimension_numbers<[1], [0], [0], [1], [0, 0, 1, 1], [], []>} : vector<64x32xbf16>, vector<32x128xbf16>, vector<64x128xf32> -> vector<64x128xf32>
    %54 = arith.truncf %50 : vector<32x32xf32> to vector<32x32xbf16>
    %c0_17 = arith.constant 0 : index
    %c0_18 = arith.constant 0 : index
    %55 = vector.load %arg5[%c0_17, %c0_18] : memref<32x192xbf16, #tpu.memory_space<vmem>>, vector<32x192xbf16>
    %cst_19 = arith.constant dense<0.000000e+00> : vector<32x192xf32>
    %56 = tpu.matmul %54, %55, %cst_19 {dimension_numbers = #tpu.dot_dimension_numbers<[1], [0], [0], [1], [0, 0, 1, 1], [], []>} : vector<32x32xbf16>, vector<32x192xbf16>, vector<32x192xf32> -> vector<32x192xf32>
    %57 = vector.extract_strided_slice %56 {offsets = [0, 0], sizes = [32, 64], strides = [1, 1]} : vector<32x192xf32> to vector<32x64xf32>
    %cst_20 = arith.constant 6.250000e-02 : f32
    %58 = vector.broadcast %cst_20 : f32 to vector<32x64xf32>
    %59 = arith.mulf %57, %58 : vector<32x64xf32>
    %60 = vector.extract_strided_slice %56 {offsets = [0, 64], sizes = [32, 64], strides = [1, 1]} : vector<32x192xf32> to vector<32x64xf32>
    %61 = vector.extract_strided_slice %56 {offsets = [0, 128], sizes = [32, 64], strides = [1, 1]} : vector<32x192xf32> to vector<32x64xf32>
    %62 = vector.extract_strided_slice %53 {offsets = [0, 0], sizes = [64, 64], strides = [1, 1]} : vector<64x128xf32> to vector<64x64xf32>
    %63 = vector.extract_strided_slice %53 {offsets = [0, 64], sizes = [64, 64], strides = [1, 1]} : vector<64x128xf32> to vector<64x64xf32>
    %64 = vector.extract_strided_slice %59 {offsets = [0, 0], sizes = [32, 16], strides = [1, 1]} : vector<32x64xf32> to vector<32x16xf32>
    %65 = vector.shape_cast %64 : vector<32x16xf32> to vector<4x8x16xf32>
    %66 = vector.extract_strided_slice %59 {offsets = [0, 16], sizes = [32, 16], strides = [1, 1]} : vector<32x64xf32> to vector<32x16xf32>
    %67 = vector.shape_cast %66 : vector<32x16xf32> to vector<4x8x16xf32>
    %68 = vector.extract_strided_slice %59 {offsets = [0, 32], sizes = [32, 16], strides = [1, 1]} : vector<32x64xf32> to vector<32x16xf32>
    %69 = vector.shape_cast %68 : vector<32x16xf32> to vector<4x8x16xf32>
    %70 = vector.extract_strided_slice %59 {offsets = [0, 48], sizes = [32, 16], strides = [1, 1]} : vector<32x64xf32> to vector<32x16xf32>
    %71 = vector.shape_cast %70 : vector<32x16xf32> to vector<4x8x16xf32>
    %72 = tpu.concatenate %65, %67, %69, %71 in 0 : vector<4x8x16xf32>, vector<4x8x16xf32>, vector<4x8x16xf32>, vector<4x8x16xf32> -> vector<16x8x16xf32>
    %73 = arith.truncf %72 : vector<16x8x16xf32> to vector<16x8x16xbf16>
    %74 = vector.extract_strided_slice %62 {offsets = [0, 0], sizes = [64, 16], strides = [1, 1]} : vector<64x64xf32> to vector<64x16xf32>
    %75 = vector.shape_cast %74 : vector<64x16xf32> to vector<4x16x16xf32>
    %76 = vector.extract_strided_slice %62 {offsets = [0, 16], sizes = [64, 16], strides = [1, 1]} : vector<64x64xf32> to vector<64x16xf32>
    %77 = vector.shape_cast %76 : vector<64x16xf32> to vector<4x16x16xf32>
    %78 = vector.extract_strided_slice %62 {offsets = [0, 32], sizes = [64, 16], strides = [1, 1]} : vector<64x64xf32> to vector<64x16xf32>
    %79 = vector.shape_cast %78 : vector<64x16xf32> to vector<4x16x16xf32>
    %80 = vector.extract_strided_slice %62 {offsets = [0, 48], sizes = [64, 16], strides = [1, 1]} : vector<64x64xf32> to vector<64x16xf32>
    %81 = vector.shape_cast %80 : vector<64x16xf32> to vector<4x16x16xf32>
    %82 = tpu.concatenate %75, %77, %79, %81 in 0 : vector<4x16x16xf32>, vector<4x16x16xf32>, vector<4x16x16xf32>, vector<4x16x16xf32> -> vector<16x16x16xf32>
    %83 = arith.truncf %82 : vector<16x16x16xf32> to vector<16x16x16xbf16>
    %84 = vector.extract_strided_slice %63 {offsets = [0, 0], sizes = [64, 16], strides = [1, 1]} : vector<64x64xf32> to vector<64x16xf32>
    %85 = vector.shape_cast %84 : vector<64x16xf32> to vector<4x16x16xf32>
    %86 = vector.extract_strided_slice %63 {offsets = [0, 16], sizes = [64, 16], strides = [1, 1]} : vector<64x64xf32> to vector<64x16xf32>
    %87 = vector.shape_cast %86 : vector<64x16xf32> to vector<4x16x16xf32>
    %88 = vector.extract_strided_slice %63 {offsets = [0, 32], sizes = [64, 16], strides = [1, 1]} : vector<64x64xf32> to vector<64x16xf32>
    %89 = vector.shape_cast %88 : vector<64x16xf32> to vector<4x16x16xf32>
    %90 = vector.extract_strided_slice %63 {offsets = [0, 48], sizes = [64, 16], strides = [1, 1]} : vector<64x64xf32> to vector<64x16xf32>
    %91 = vector.shape_cast %90 : vector<64x16xf32> to vector<4x16x16xf32>
    %92 = tpu.concatenate %85, %87, %89, %91 in 0 : vector<4x16x16xf32>, vector<4x16x16xf32>, vector<4x16x16xf32>, vector<4x16x16xf32> -> vector<16x16x16xf32>
    %93 = arith.truncf %92 : vector<16x16x16xf32> to vector<16x16x16xbf16>
    %94 = vector.extract_strided_slice %60 {offsets = [0, 0], sizes = [32, 16], strides = [1, 1]} : vector<32x64xf32> to vector<32x16xf32>
    %95 = vector.shape_cast %94 : vector<32x16xf32> to vector<4x8x16xf32>
    %96 = vector.extract_strided_slice %60 {offsets = [0, 16], sizes = [32, 16], strides = [1, 1]} : vector<32x64xf32> to vector<32x16xf32>
    %97 = vector.shape_cast %96 : vector<32x16xf32> to vector<4x8x16xf32>
    %98 = vector.extract_strided_slice %60 {offsets = [0, 32], sizes = [32, 16], strides = [1, 1]} : vector<32x64xf32> to vector<32x16xf32>
    %99 = vector.shape_cast %98 : vector<32x16xf32> to vector<4x8x16xf32>
    %100 = vector.extract_strided_slice %60 {offsets = [0, 48], sizes = [32, 16], strides = [1, 1]} : vector<32x64xf32> to vector<32x16xf32>
    %101 = vector.shape_cast %100 : vector<32x16xf32> to vector<4x8x16xf32>
    %102 = tpu.concatenate %95, %97, %99, %101 in 0 : vector<4x8x16xf32>, vector<4x8x16xf32>, vector<4x8x16xf32>, vector<4x8x16xf32> -> vector<16x8x16xf32>
    %103 = arith.truncf %102 : vector<16x8x16xf32> to vector<16x8x16xbf16>
    %104 = vector.extract_strided_slice %61 {offsets = [0, 0], sizes = [32, 16], strides = [1, 1]} : vector<32x64xf32> to vector<32x16xf32>
    %105 = vector.shape_cast %104 : vector<32x16xf32> to vector<4x8x16xf32>
    %106 = vector.extract_strided_slice %61 {offsets = [0, 16], sizes = [32, 16], strides = [1, 1]} : vector<32x64xf32> to vector<32x16xf32>
    %107 = vector.shape_cast %106 : vector<32x16xf32> to vector<4x8x16xf32>
    %108 = vector.extract_strided_slice %61 {offsets = [0, 32], sizes = [32, 16], strides = [1, 1]} : vector<32x64xf32> to vector<32x16xf32>
    %109 = vector.shape_cast %108 : vector<32x16xf32> to vector<4x8x16xf32>
    %110 = vector.extract_strided_slice %61 {offsets = [0, 48], sizes = [32, 16], strides = [1, 1]} : vector<32x64xf32> to vector<32x16xf32>
    %111 = vector.shape_cast %110 : vector<32x16xf32> to vector<4x8x16xf32>
    %112 = tpu.concatenate %105, %107, %109, %111 in 0 : vector<4x8x16xf32>, vector<4x8x16xf32>, vector<4x8x16xf32>, vector<4x8x16xf32> -> vector<16x8x16xf32>
    %113 = arith.truncf %112 : vector<16x8x16xf32> to vector<16x8x16xbf16>
    %cst_21 = arith.constant dense<0.000000e+00> : vector<16x8x16xf32>
    %114 = tpu.matmul %73, %83, %cst_21 {dimension_numbers = #tpu.dot_dimension_numbers<[2], [2], [1], [1], [0, 0, 0, 1, 1, 1], [0], [0]>} : vector<16x8x16xbf16>, vector<16x16x16xbf16>, vector<16x8x16xf32> -> vector<16x8x16xf32>
    %cst_22 = arith.constant dense<0.000000e+00> : vector<16x8x8xf32>
    %115 = tpu.matmul %73, %103, %cst_22 {dimension_numbers = #tpu.dot_dimension_numbers<[2], [2], [1], [1], [0, 0, 0, 1, 1, 1], [0], [0]>} : vector<16x8x16xbf16>, vector<16x8x16xbf16>, vector<16x8x8xf32> -> vector<16x8x8xf32>
    %cst_23 = arith.constant dense<0xFF800000> : vector<16x8xf32>
    %116 = vector.multi_reduction <maximumf>, %114, %cst_23 [2] : vector<16x8x16xf32> to vector<16x8xf32>
    %117 = vector.shape_cast %116 : vector<16x8xf32> to vector<16x8x1xf32>
    %cst_24 = arith.constant dense<0xFF800000> : vector<16x8xf32>
    %118 = vector.multi_reduction <maximumf>, %115, %cst_24 [2] : vector<16x8x8xf32> to vector<16x8xf32>
    %119 = vector.shape_cast %118 : vector<16x8xf32> to vector<16x8x1xf32>
    %120 = arith.maximumf %117, %119 : vector<16x8x1xf32>
    %121 = vector.broadcast %120 : vector<16x8x1xf32> to vector<16x8x16xf32>
    %122 = arith.subf %114, %121 : vector<16x8x16xf32>
    %123 = math.exp %122 : vector<16x8x16xf32>
    %124 = vector.broadcast %120 : vector<16x8x1xf32> to vector<16x8x8xf32>
    %125 = arith.subf %115, %124 : vector<16x8x8xf32>
    %126 = math.exp %125 : vector<16x8x8xf32>
    %cst_25 = arith.constant dense<0.000000e+00> : vector<16x8xf32>
    %127 = vector.multi_reduction <add>, %123, %cst_25 [2] : vector<16x8x16xf32> to vector<16x8xf32>
    %128 = vector.shape_cast %127 : vector<16x8xf32> to vector<16x8x1xf32>
    %cst_26 = arith.constant dense<0.000000e+00> : vector<16x8xf32>
    %129 = vector.multi_reduction <add>, %126, %cst_26 [2] : vector<16x8x8xf32> to vector<16x8xf32>
    %130 = vector.shape_cast %129 : vector<16x8xf32> to vector<16x8x1xf32>
    %131 = arith.addf %128, %130 : vector<16x8x1xf32>
    %132 = arith.truncf %123 : vector<16x8x16xf32> to vector<16x8x16xbf16>
    %cst_27 = arith.constant dense<0.000000e+00> : vector<16x8x16xf32>
    %133 = tpu.matmul %132, %93, %cst_27 {dimension_numbers = #tpu.dot_dimension_numbers<[2], [1], [1], [2], [0, 0, 0, 1, 1, 2], [0], [0]>} : vector<16x8x16xbf16>, vector<16x16x16xbf16>, vector<16x8x16xf32> -> vector<16x8x16xf32>
    %134 = arith.truncf %126 : vector<16x8x8xf32> to vector<16x8x8xbf16>
    %cst_28 = arith.constant dense<0.000000e+00> : vector<16x8x16xf32>
    %135 = tpu.matmul %134, %113, %cst_28 {dimension_numbers = #tpu.dot_dimension_numbers<[2], [1], [1], [2], [0, 0, 0, 1, 1, 2], [0], [0]>} : vector<16x8x8xbf16>, vector<16x8x16xbf16>, vector<16x8x16xf32> -> vector<16x8x16xf32>
    %136 = arith.addf %133, %135 : vector<16x8x16xf32>
    %137 = tpu.reciprocal %131 {approx = true} : vector<16x8x1xf32> -> vector<16x8x1xf32>
    %138 = vector.broadcast %137 : vector<16x8x1xf32> to vector<16x8x16xf32>
    %139 = arith.mulf %136, %138 : vector<16x8x16xf32>
    %140 = vector.extract_strided_slice %139 {offsets = [0, 0, 0], sizes = [4, 8, 16], strides = [1, 1, 1]} : vector<16x8x16xf32> to vector<4x8x16xf32>
    %141 = vector.shape_cast %140 : vector<4x8x16xf32> to vector<32x16xf32>
    %142 = vector.extract_strided_slice %139 {offsets = [4, 0, 0], sizes = [4, 8, 16], strides = [1, 1, 1]} : vector<16x8x16xf32> to vector<4x8x16xf32>
    %143 = vector.shape_cast %142 : vector<4x8x16xf32> to vector<32x16xf32>
    %144 = vector.extract_strided_slice %139 {offsets = [8, 0, 0], sizes = [4, 8, 16], strides = [1, 1, 1]} : vector<16x8x16xf32> to vector<4x8x16xf32>
    %145 = vector.shape_cast %144 : vector<4x8x16xf32> to vector<32x16xf32>
    %146 = vector.extract_strided_slice %139 {offsets = [12, 0, 0], sizes = [4, 8, 16], strides = [1, 1, 1]} : vector<16x8x16xf32> to vector<4x8x16xf32>
    %147 = vector.shape_cast %146 : vector<4x8x16xf32> to vector<32x16xf32>
    %148 = tpu.concatenate %141, %143, %145, %147 in 1 : vector<32x16xf32>, vector<32x16xf32>, vector<32x16xf32>, vector<32x16xf32> -> vector<32x64xf32>
    %149 = arith.truncf %148 : vector<32x64xf32> to vector<32x64xbf16>
    %c0_29 = arith.constant 0 : index
    %c0_30 = arith.constant 0 : index
    %150 = vector.load %arg6[%c0_29, %c0_30] : memref<64x32xbf16, #tpu.memory_space<vmem>>, vector<64x32xbf16>
    %cst_31 = arith.constant dense<0.000000e+00> : vector<32x32xf32>
    %151 = tpu.matmul %149, %150, %cst_31 {dimension_numbers = #tpu.dot_dimension_numbers<[1], [0], [0], [1], [0, 0, 1, 1], [], []>} : vector<32x64xbf16>, vector<64x32xbf16>, vector<32x32xf32> -> vector<32x32xf32>
    %152 = vector.extract_strided_slice %0 {offsets = [4, 0], sizes = [1, 32], strides = [1, 1]} : vector<8x32xf32> to vector<1x32xf32>
    %153 = vector.extract_strided_slice %0 {offsets = [5, 0], sizes = [1, 32], strides = [1, 1]} : vector<8x32xf32> to vector<1x32xf32>
    %cst_32 = arith.constant dense<0.000000e+00> : vector<32xf32>
    %154 = vector.multi_reduction <add>, %151, %cst_32 [1] : vector<32x32xf32> to vector<32xf32>
    %155 = vector.shape_cast %154 : vector<32xf32> to vector<32x1xf32>
    %cst_33 = arith.constant 3.200000e+01 : f32
    %156 = vector.broadcast %cst_33 : f32 to vector<32x1xf32>
    %157 = arith.divf %155, %156 : vector<32x1xf32>
    %158 = vector.broadcast %157 : vector<32x1xf32> to vector<32x32xf32>
    %159 = arith.subf %151, %158 : vector<32x32xf32>
    %160 = arith.mulf %159, %159 : vector<32x32xf32>
    %cst_34 = arith.constant dense<0.000000e+00> : vector<32xf32>
    %161 = vector.multi_reduction <add>, %160, %cst_34 [1] : vector<32x32xf32> to vector<32xf32>
    %162 = vector.shape_cast %161 : vector<32xf32> to vector<32x1xf32>
    %cst_35 = arith.constant 3.200000e+01 : f32
    %163 = vector.broadcast %cst_35 : f32 to vector<32x1xf32>
    %164 = arith.divf %162, %163 : vector<32x1xf32>
    %165 = vector.broadcast %157 : vector<32x1xf32> to vector<32x32xf32>
    %166 = arith.subf %151, %165 : vector<32x32xf32>
    %cst_36 = arith.constant 9.99999974E-6 : f32
    %167 = vector.broadcast %cst_36 : f32 to vector<32x1xf32>
    %168 = arith.addf %164, %167 : vector<32x1xf32>
    %169 = math.rsqrt %168 : vector<32x1xf32>
    %170 = vector.broadcast %169 : vector<32x1xf32> to vector<32x32xf32>
    %171 = arith.mulf %166, %170 : vector<32x32xf32>
    %172 = vector.broadcast %152 : vector<1x32xf32> to vector<32x32xf32>
    %173 = arith.mulf %171, %172 : vector<32x32xf32>
    %174 = vector.broadcast %153 : vector<1x32xf32> to vector<32x32xf32>
    %175 = arith.addf %173, %174 : vector<32x32xf32>
    %c0_37 = arith.constant 0 : index
    %c0_38 = arith.constant 0 : index
    %176 = vector.load %arg7[%c0_37, %c0_38] : memref<32x32xf32, #tpu.memory_space<vmem>>, vector<32x32xf32>
    tpu.vector_store %arg7[%c0_37, %c0_38], %175 {strides = array<i32>} : memref<32x32xf32, #tpu.memory_space<vmem>>, vector<32x32xf32>,
    return
  }
  func.func @transform_0(%arg0: i32) -> (i32, i32) {
    %c0_i32 = arith.constant 0 : i32
    %c0_i32_0 = arith.constant 0 : i32
    return %arg0, %c0_i32 : i32, i32
  }
  func.func @transform_1(%arg0: i32) -> (i32, i32) {
    %c0_i32 = arith.constant 0 : i32
    %c0_i32_0 = arith.constant 0 : i32
    return %arg0, %c0_i32 : i32, i32
  }
  func.func @transform_2(%arg0: i32) -> (i32, i32) {
    %c0_i32 = arith.constant 0 : i32
    %c0_i32_0 = arith.constant 0 : i32
    %c0_i32_1 = arith.constant 0 : i32
    return %c0_i32, %c0_i32_0 : i32, i32
  }
  func.func @transform_3(%arg0: i32) -> (i32, i32) {
    %c0_i32 = arith.constant 0 : i32
    %c0_i32_0 = arith.constant 0 : i32
    %c0_i32_1 = arith.constant 0 : i32
    return %c0_i32, %c0_i32_0 : i32, i32
  }
  func.func @transform_4(%arg0: i32) -> (i32, i32) {
    %c0_i32 = arith.constant 0 : i32
    %c0_i32_0 = arith.constant 0 : i32
    %c0_i32_1 = arith.constant 0 : i32
    return %c0_i32, %c0_i32_0 : i32, i32
  }
  func.func @transform_5(%arg0: i32) -> (i32, i32) {
    %c0_i32 = arith.constant 0 : i32
    %c0_i32_0 = arith.constant 0 : i32
    %c0_i32_1 = arith.constant 0 : i32
    return %c0_i32, %c0_i32_0 : i32, i32
  }
  func.func @transform_6(%arg0: i32) -> (i32, i32) {
    %c0_i32 = arith.constant 0 : i32
    %c0_i32_0 = arith.constant 0 : i32
    return %arg0, %c0_i32 : i32, i32
  }
}

</mosaic_0001>

<llo_original>
// kernel: tpu_custom_call.1
$region0: #{tpu_custom_call.1}
  #allocation0 [shape = 'u32[]', space=smem, size = 0x4, offset = 0x4, fixed_abs, tag = 'smem constant byte address 0x4 - core index']
  #allocation1 [shape = 'u32[144,128]{1,0:T(1,128)}', space=vmem, size = 0x12000, scoped, tag = 'internal scratch']
  %s0 = inlined_call_operand.vmem [shape: f32[64,32], index: 0, kind: input, shape index: {}]
  %s1 = inlined_call_operand.vmem [shape: f32[32,32], index: 1, kind: input, shape index: {}]
  %s2 = inlined_call_operand.vmem [shape: f32[8,32], index: 2, kind: input, shape index: {}]
  %s3 = inlined_call_operand.vmem [shape: bf16[32,128], index: 3, kind: input, shape index: {}]
  %s4 = inlined_call_operand.vmem [shape: bf16[32,192], index: 4, kind: input, shape index: {}]
  %s5 = inlined_call_operand.vmem [shape: bf16[64,32], index: 5, kind: input, shape index: {}]
  %s6 = inlined_call_operand.hbm [shape: f32[32,32], index: 6, kind: output, shape index: {}]
  %s7 = sld [smem:[#allocation0]]
  $region34: #{tpu_custom_call.1} parent=0
    _
  %s9 = ssub.s32 1, %s7
  %s10 = scalar_select 0, %s9, %s7
  $region1: #{tpu_custom_call.1} parent=0
    #allocation2 [shape = 'u8[16384]{0}', space=vmem, size = 0x4000, scoped, tag = 'output window, operand 0, single buffered']
    #allocation3 [shape = 's32[1]{0}', space=sflag, size = 0x4, scoped, tag = 'scoped memory for tpu_custom_call.1']
    %11 = vsyncpa [#allocation3], 0
    // Predicated region
    $region2: #{tpu_custom_call.1} parent=1 // pred_check
      _
    $region3: #{tpu_custom_call.1} parent=1 // pred_check_branch
      %13 = sbr.rel (0) target = $region5
    $region4: #{tpu_custom_call.1} parent=1 // pred_region
      _
    $region5: #{tpu_custom_call.1} parent=1 // pred_fallthru
      _
    // Predicated region
    $region6: #{tpu_custom_call.1} parent=1 // pred_check
      _
    $region7: #{tpu_custom_call.1} parent=1 // pred_check_branch
      %15 = sbr.rel (0) target = $region9
    $region8: #{tpu_custom_call.1} parent=1 // pred_region
      _
    $region9: #{tpu_custom_call.1} parent=1 // pred_fallthru
      _
    // Predicated region
    $region10: #{tpu_custom_call.1} parent=1 // pred_check
      _
    $region11: #{tpu_custom_call.1} parent=1 // pred_check_branch
      %17 = sbr.rel (0) target = $region13
    $region12: #{tpu_custom_call.1} parent=1 // pred_region
      _
    $region13: #{tpu_custom_call.1} parent=1 // pred_fallthru
      _
    // Predicated region
    $region14: #{tpu_custom_call.1} parent=1 // pred_check
      _
    $region15: #{tpu_custom_call.1} parent=1 // pred_check_branch
      %19 = sbr.rel (0) target = $region17
    $region16: #{tpu_custom_call.1} parent=1 // pred_region
      _
    $region17: #{tpu_custom_call.1} parent=1 // pred_fallthru
      _
    // Predicated region
    $region18: #{tpu_custom_call.1} parent=1 // pred_check
      _
    $region19: #{tpu_custom_call.1} parent=1 // pred_check_branch
      %21 = sbr.rel (0) target = $region21
    $region20: #{tpu_custom_call.1} parent=1 // pred_region
      _
    $region21: #{tpu_custom_call.1} parent=1 // pred_fallthru
      _
    // Predicated region
    $region22: #{tpu_custom_call.1} parent=1 // pred_check
      _
    $region23: #{tpu_custom_call.1} parent=1 // pred_check_branch
      %23 = sbr.rel (0) target = $region25
    $region24: #{tpu_custom_call.1} parent=1 // pred_region
      _
    $region25: #{tpu_custom_call.1} parent=1 // pred_fallthru
      _
    %v25 = vld [vmem:[%s2] sm:$0xff]
    %v26 = vld [vmem:[%s0] sm:$0xff]
    %v27 = vld [vmem:[%s0 + $0x8] sm:$0xff]
    %v28 = vld [vmem:[%s0 + $0x10] sm:$0xff]
    %v29 = vld [vmem:[%s0 + $0x18] sm:$0xff]
    %v30 = vld [vmem:[%s0 + $0x20] sm:$0xff]
    %v31 = vld [vmem:[%s0 + $0x28] sm:$0xff]
    %v32 = vld [vmem:[%s0 + $0x30] sm:$0xff]
    %v33 = vld [vmem:[%s0 + $0x38] sm:$0xff]
    %vm34 = vcmask 261120
    %v35 = vsel %vm34, %v26, 0.0
    %36 = vadd.xlane.f32.xlu0 %v35
    %v37 = vpop.xlane.xlu0 %36
    %v38 = vsel %vm34, %v27, 0.0
    %39 = vadd.xlane.f32.xlu0 %v38
    %v40 = vpop.xlane.xlu0 %39
    %v41 = vsel %vm34, %v28, 0.0
    %42 = vadd.xlane.f32.xlu0 %v41
    %v43 = vpop.xlane.xlu0 %42
    %v44 = vsel %vm34, %v29, 0.0
    %45 = vadd.xlane.f32.xlu0 %v44
    %v46 = vpop.xlane.xlu0 %45
    %v47 = vsel %vm34, %v30, 0.0
    %48 = vadd.xlane.f32.xlu0 %v47
    %v49 = vpop.xlane.xlu0 %48
    %v50 = vsel %vm34, %v31, 0.0
    %51 = vadd.xlane.f32.xlu0 %v50
    %v52 = vpop.xlane.xlu0 %51
    %v53 = vsel %vm34, %v32, 0.0
    %54 = vadd.xlane.f32.xlu0 %v53
    %v55 = vpop.xlane.xlu0 %54
    %v56 = vsel %vm34, %v33, 0.0
    %57 = vadd.xlane.f32.xlu0 %v56
    %v58 = vpop.xlane.xlu0 %57
    %v59 = vrcp.pop 32.0
    %v60 = vmul.f32 %v37, %v59
    %v61 = vmul.f32 %v40, %v59
    %v62 = vmul.f32 %v43, %v59
    %v63 = vmul.f32 %v46, %v59
    %v64 = vmul.f32 %v49, %v59
    %v65 = vmul.f32 %v52, %v59
    %v66 = vmul.f32 %v55, %v59
    %v67 = vmul.f32 %v58, %v59
    %v68 = vsub.f32 %v26, %v60
    %v69 = vsub.f32 %v27, %v61
    %v70 = vsub.f32 %v28, %v62
    %v71 = vsub.f32 %v29, %v63
    %v72 = vsub.f32 %v30, %v64
    %v73 = vsub.f32 %v31, %v65
    %v74 = vsub.f32 %v32, %v66
    %v75 = vsub.f32 %v33, %v67
    %v76 = vmul.f32 %v68, %v68
    %v77 = vmul.f32 %v69, %v69
    %v78 = vmul.f32 %v70, %v70
    %v79 = vmul.f32 %v71, %v71
    %v80 = vmul.f32 %v72, %v72
    %v81 = vmul.f32 %v73, %v73
    %v82 = vmul.f32 %v74, %v74
    %v83 = vmul.f32 %v75, %v75
    %v84 = vsel %vm34, %v76, 0.0
    %85 = vadd.xlane.f32.xlu0 %v84
    %v86 = vpop.xlane.xlu0 %85
    %v87 = vsel %vm34, %v77, 0.0
    %88 = vadd.xlane.f32.xlu0 %v87
    %v89 = vpop.xlane.xlu0 %88
    %v90 = vsel %vm34, %v78, 0.0
    %91 = vadd.xlane.f32.xlu0 %v90
    %v92 = vpop.xlane.xlu0 %91
    %v93 = vsel %vm34, %v79, 0.0
    %94 = vadd.xlane.f32.xlu0 %v93
    %v95 = vpop.xlane.xlu0 %94
    %v96 = vsel %vm34, %v80, 0.0
    %97 = vadd.xlane.f32.xlu0 %v96
    %v98 = vpop.xlane.xlu0 %97
    %v99 = vsel %vm34, %v81, 0.0
    %100 = vadd.xlane.f32.xlu0 %v99
    %v101 = vpop.xlane.xlu0 %100
    %v102 = vsel %vm34, %v82, 0.0
    %103 = vadd.xlane.f32.xlu0 %v102
    %v104 = vpop.xlane.xlu0 %103
    %v105 = vsel %vm34, %v83, 0.0
    %106 = vadd.xlane.f32.xlu0 %v105
    %v107 = vpop.xlane.xlu0 %106
    %v108 = vmul.f32 %v86, %v59
    %v109 = vmul.f32 %v89, %v59
    %v110 = vmul.f32 %v92, %v59
    %v111 = vmul.f32 %v95, %v59
    %v112 = vmul.f32 %v98, %v59
    %v113 = vmul.f32 %v101, %v59
    %v114 = vmul.f32 %v104, %v59
    %v115 = vmul.f32 %v107, %v59
    %v116 = vadd.f32 %v108, 1e-05
    %v117 = vadd.f32 %v109, 1e-05
    %v118 = vadd.f32 %v110, 1e-05
    %v119 = vadd.f32 %v111, 1e-05
    %v120 = vadd.f32 %v112, 1e-05
    %v121 = vadd.f32 %v113, 1e-05
    %v122 = vadd.f32 %v114, 1e-05
    %v123 = vadd.f32 %v115, 1e-05
    %v124 = vrsqrt.pop %v116
    %v125 = vrsqrt.pop %v117
    %v126 = vrsqrt.pop %v118
    %v127 = vrsqrt.pop %v119
    %v128 = vrsqrt.pop %v120
    %v129 = vrsqrt.pop %v121
    %v130 = vrsqrt.pop %v122
    %v131 = vrsqrt.pop %v123
    %v132 = vmul.f32 %v68, %v124
    %v133 = vmul.f32 %v69, %v125
    %v134 = vmul.f32 %v70, %v126
    %v135 = vmul.f32 %v71, %v127
    %v136 = vmul.f32 %v72, %v128
    %v137 = vmul.f32 %v73, %v129
    %v138 = vmul.f32 %v74, %v130
    %v139 = vmul.f32 %v75, %v131
    %v140 = vlaneseq
    %v141 = vshrl.u32 %v140, 7
    %v142 = vsub.s32 0, %v141
    %v143 = vrot.slane %v25, %v142
    %v144 = vmul.f32 %v132, %v143
    %v145 = vmul.f32 %v133, %v143
    %v146 = vmul.f32 %v134, %v143
    %v147 = vmul.f32 %v135, %v143
    %v148 = vmul.f32 %v136, %v143
    %v149 = vmul.f32 %v137, %v143
    %v150 = vmul.f32 %v138, %v143
    %v151 = vmul.f32 %v139, %v143
    %v152 = vlaneseq
    %v153 = vshrl.u32 %v152, 7
    %v154 = vsub.s32 1, %v153
    %v155 = vrot.slane %v25, %v154
    %v156 = vadd.f32 %v144, %v155
    %v157 = vadd.f32 %v145, %v155
    %v158 = vadd.f32 %v146, %v155
    %v159 = vadd.f32 %v147, %v155
    %v160 = vadd.f32 %v148, %v155
    %v161 = vadd.f32 %v149, %v155
    %v162 = vadd.f32 %v150, %v155
    %v163 = vadd.f32 %v151, %v155
    %v164 = vld [vmem:[%s1] sm:$0xff]
    %v165 = vld [vmem:[%s1 + $0x8] sm:$0xff]
    %v166 = vld [vmem:[%s1 + $0x10] sm:$0xff]
    %v167 = vld [vmem:[%s1 + $0x18] sm:$0xff]
    %v168 = vsel %vm34, %v164, 0.0
    %169 = vadd.xlane.f32.xlu0 %v168
    %v170 = vpop.xlane.xlu0 %169
    %v171 = vsel %vm34, %v165, 0.0
    %172 = vadd.xlane.f32.xlu0 %v171
    %v173 = vpop.xlane.xlu0 %172
    %v174 = vsel %vm34, %v166, 0.0
    %175 = vadd.xlane.f32.xlu0 %v174
    %v176 = vpop.xlane.xlu0 %175
    %v177 = vsel %vm34, %v167, 0.0
    %178 = vadd.xlane.f32.xlu0 %v177
    %v179 = vpop.xlane.xlu0 %178
    %v180 = vmul.f32 %v170, %v59
    %v181 = vmul.f32 %v173, %v59
    %v182 = vmul.f32 %v176, %v59
    %v183 = vmul.f32 %v179, %v59
    %v184 = vsub.f32 %v164, %v180
    %v185 = vsub.f32 %v165, %v181
    %v186 = vsub.f32 %v166, %v182
    %v187 = vsub.f32 %v167, %v183
    %v188 = vmul.f32 %v184, %v184
    %v189 = vmul.f32 %v185, %v185
    %v190 = vmul.f32 %v186, %v186
    %v191 = vmul.f32 %v187, %v187
    %v192 = vsel %vm34, %v188, 0.0
    %193 = vadd.xlane.f32.xlu0 %v192
    %v194 = vpop.xlane.xlu0 %193
    %v195 = vsel %vm34, %v189, 0.0
    %196 = vadd.xlane.f32.xlu0 %v195
    %v197 = vpop.xlane.xlu0 %196
    %v198 = vsel %vm34, %v190, 0.0
    %199 = vadd.xlane.f32.xlu0 %v198
    %v200 = vpop.xlane.xlu0 %199
    %v201 = vsel %vm34, %v191, 0.0
    %202 = vadd.xlane.f32.xlu0 %v201
    %v203 = vpop.xlane.xlu0 %202
    %v204 = vmul.f32 %v194, %v59
    %v205 = vmul.f32 %v197, %v59
    %v206 = vmul.f32 %v200, %v59
    %v207 = vmul.f32 %v203, %v59
    %v208 = vadd.f32 %v204, 1e-05
    %v209 = vadd.f32 %v205, 1e-05
    %v210 = vadd.f32 %v206, 1e-05
    %v211 = vadd.f32 %v207, 1e-05
    %v212 = vrsqrt.pop %v208
    %v213 = vrsqrt.pop %v209
    %v214 = vrsqrt.pop %v210
    %v215 = vrsqrt.pop %v211
    %v216 = vmul.f32 %v184, %v212
    %v217 = vmul.f32 %v185, %v213
    %v218 = vmul.f32 %v186, %v214
    %v219 = vmul.f32 %v187, %v215
    %v220 = vlaneseq
    %v221 = vshrl.u32 %v220, 7
    %v222 = vsub.s32 2, %v221
    %v223 = vrot.slane %v25, %v222
    %v224 = vmul.f32 %v216, %v223
    %v225 = vmul.f32 %v217, %v223
    %v226 = vmul.f32 %v218, %v223
    %v227 = vmul.f32 %v219, %v223
    %v228 = vlaneseq
    %v229 = vshrl.u32 %v228, 7
    %v230 = vsub.s32 3, %v229
    %v231 = vrot.slane %v25, %v230
    %v232 = vadd.f32 %v224, %v231
    %v233 = vadd.f32 %v225, %v231
    %v234 = vadd.f32 %v226, %v231
    %v235 = vadd.f32 %v227, %v231
    %v236 = vpack.c.bf16 %v157, %v156
    %v237 = vpack.c.bf16 %v159, %v158
    %v238 = vpack.c.bf16 %v161, %v160
    %v239 = vpack.c.bf16 %v163, %v162
    %v240 = vld [vmem:[%s3] sm:$0xf]
    %v241 = vld [vmem:[%s3 + $0x4] sm:$0xf]
    %v242 = vld [vmem:[%s3 + $0x8] sm:$0xf]
    %v243 = vld [vmem:[%s3 + $0xc] sm:$0xf]
    %v248 = vunpack.c.l.b16 %v240
    %v249 = vunpack.c.l.b16 %v241
    %v250 = vunpack.c.l.b16 %v242
    %v251 = vunpack.c.l.b16 %v243
    %v252 = vpack.c.b16 %v249, %v248
    %v253 = vpack.c.b16 %v251, %v250
    %v257 = vsel %vm34, %v236, 0
    %v260 = vsel %vm34, %v237, 0
    %v263 = vsel %vm34, %v238, 0
    %v266 = vsel %vm34, %v239, 0
    %268 = vmatprep.subr.bf16.mxu0 0
    %269 = vmatpush1.bf16.msra.mxu0 %v252
    %270 = vmatprep.subr.bf16.mxu0 0
    %271 = vmatpush1.bf16.msra.mxu0 %v253
    %272 = vmatprep.subr.bf16.mxu0 0
    %273 = vmatpush1.bf16.msra.mxu0 0
    %274 = vmatprep.subr.bf16.mxu0 0
    %275 = vmatpush1.bf16.msra.mxu0 0
    %276 = vmatprep.subr.bf16.mxu0 0
    %277 = vmatpush1.bf16.msra.mxu0 0
    %278 = vmatprep.subr.bf16.mxu0 0
    %279 = vmatpush1.bf16.msra.mxu0 0
    %280 = vmatprep.subr.bf16.mxu0 0
    %281 = vmatpush1.bf16.msra.mxu0 0
    %282 = vmatprep.subr.bf16.mxu0 0
    %283 = vmatpush1.bf16.msra.mxu0 0
    %284 = vmatprep.subr.bf16.mxu0 0
    %285 = vmatpush1.bf16.msra.mxu0 0
    %286 = vmatprep.subr.bf16.mxu0 0
    %287 = vmatpush1.bf16.msra.mxu0 0
    %288 = vmatprep.subr.bf16.mxu0 0
    %289 = vmatpush1.bf16.msra.mxu0 0
    %290 = vmatprep.subr.bf16.mxu0 0
    %291 = vmatpush1.bf16.msra.mxu0 0
    %292 = vmatprep.subr.bf16.mxu0 0
    %293 = vmatpush1.bf16.msra.mxu0 0
    %294 = vmatprep.subr.bf16.mxu0 0
    %295 = vmatpush1.bf16.msra.mxu0 0
    %296 = vmatprep.subr.bf16.mxu0 0
    %297 = vmatpush1.bf16.msra.mxu0 0
    %298 = vmatprep.subr.bf16.mxu0 0
    %299 = vmatpush1.bf16.msra.mxu0 0
    %300 = vmatprep.mubr.bf16.mxu0 0
    %301 = vmatmul.mubr.bf16.gmra.mrb[0].mxu0 %v257
    %v302 = vpop.f32.mrb[0].mxu0
    %v303 = vadd.f32 0.0, %v302
    %v304 = vpop.f32.mrb[0].mxu0
    %v305 = vpop.f32.mrb[0].mxu0
    %v306 = vadd.f32 0.0, %v305
    %v307 = vpop.f32.mrb[0].mxu0
    %308 = vmatprep.mubr.bf16.mxu0 0
    %309 = vmatmul.mubr.bf16.gmra.mrb[0].mxu0 %v260
    %v310 = vpop.f32.mrb[0].mxu0
    %v311 = vadd.f32 0.0, %v310
    %v312 = vpop.f32.mrb[0].mxu0
    %v313 = vpop.f32.mrb[0].mxu0
    %v314 = vadd.f32 0.0, %v313
    %v315 = vpop.f32.mrb[0].mxu0
    %316 = vmatprep.mubr.bf16.mxu0 0
    %317 = vmatmul.mubr.bf16.gmra.mrb[0].mxu0 %v263
    %v318 = vpop.f32.mrb[0].mxu0
    %v319 = vadd.f32 0.0, %v318
    %v320 = vpop.f32.mrb[0].mxu0
    %v321 = vpop.f32.mrb[0].mxu0
    %v322 = vadd.f32 0.0, %v321
    %v323 = vpop.f32.mrb[0].mxu0
    %324 = vmatprep.mubr.bf16.mxu0 0
    %325 = vmatmul.mubr.bf16.gmra.mrb[0].mxu0 %v266
    %v326 = vpop.f32.mrb[0].mxu0
    %v327 = vadd.f32 0.0, %v326
    %v328 = vpop.f32.mrb[0].mxu0
    %v329 = vpop.f32.mrb[0].mxu0
    %v330 = vadd.f32 0.0, %v329
    %v331 = vpop.f32.mrb[0].mxu0
    %332 = vdwg.mxu0
    %v333 = vpack.c.bf16 %v233, %v232
    %v334 = vpack.c.bf16 %v235, %v234
    %v335 = vld [vmem:[%s4] sm:$0xff]
    %v336 = vld [vmem:[%s4 + $0x8] sm:$0xff]
    %v337 = vld [vmem:[%s4 + $0x10] sm:$0xff]
    %v338 = vld [vmem:[%s4 + $0x18] sm:$0xff]
    %v343 = vunpack.c.l.b16 %v335
    %v344 = vunpack.c.h.b16 %v335
    %v345 = vunpack.c.l.b16 %v336
    %v346 = vunpack.c.h.b16 %v336
    %v347 = vunpack.c.l.b16 %v337
    %v348 = vunpack.c.h.b16 %v337
    %v349 = vunpack.c.l.b16 %v338
    %v350 = vunpack.c.h.b16 %v338
    %v351 = vpack.c.b16 %v345, %v343
    %v352 = vpack.c.b16 %v346, %v344
    %v353 = vpack.c.b16 %v349, %v347
    %v354 = vpack.c.b16 %v350, %v348
    %v360 = vsel %vm34, %v333, 0
    %v363 = vsel %vm34, %v334, 0
    %365 = vmatprep.subr.bf16.mxu0 %v352
    %366 = vmatpush1.bf16.msra.mxu0 %v351
    %367 = vmatprep.subr.bf16.mxu0 %v354
    %368 = vmatpush1.bf16.msra.mxu0 %v353
    %369 = vmatprep.subr.bf16.mxu0 0
    %370 = vmatpush1.bf16.msra.mxu0 0
    %371 = vmatprep.subr.bf16.mxu0 0
    %372 = vmatpush1.bf16.msra.mxu0 0
    %373 = vmatprep.subr.bf16.mxu0 0
    %374 = vmatpush1.bf16.msra.mxu0 0
    %375 = vmatprep.subr.bf16.mxu0 0
    %376 = vmatpush1.bf16.msra.mxu0 0
    %377 = vmatprep.subr.bf16.mxu0 0
    %378 = vmatpush1.bf16.msra.mxu0 0
    %379 = vmatprep.subr.bf16.mxu0 0
    %380 = vmatpush1.bf16.msra.mxu0 0
    %381 = vmatprep.subr.bf16.mxu0 0
    %382 = vmatpush1.bf16.msra.mxu0 0
    %383 = vmatprep.subr.bf16.mxu0 0
    %384 = vmatpush1.bf16.msra.mxu0 0
    %385 = vmatprep.subr.bf16.mxu0 0
    %386 = vmatpush1.bf16.msra.mxu0 0
    %387 = vmatprep.subr.bf16.mxu0 0
    %388 = vmatpush1.bf16.msra.mxu0 0
    %389 = vmatprep.subr.bf16.mxu0 0
    %390 = vmatpush1.bf16.msra.mxu0 0
    %391 = vmatprep.subr.bf16.mxu0 0
    %392 = vmatpush1.bf16.msra.mxu0 0
    %393 = vmatprep.subr.bf16.mxu0 0
    %394 = vmatpush1.bf16.msra.mxu0 0
    %395 = vmatprep.subr.bf16.mxu0 0
    %396 = vmatpush1.bf16.msra.mxu0 0
    %397 = vmatprep.mubr.bf16.mxu0 0
    %398 = vmatmul.mubr.bf16.gmra.mrb[0].mxu0 %v360
    %v399 = vpop.f32.mrb[0].mxu0
    %v400 = vadd.f32 0.0, %v399
    %v401 = vpop.f32.mrb[0].mxu0
    %v402 = vadd.f32 0.0, %v401
    %v403 = vpop.f32.mrb[0].mxu0
    %v404 = vadd.f32 0.0, %v403
    %v405 = vpop.f32.mrb[0].mxu0
    %v406 = vadd.f32 0.0, %v405
    %407 = vmatprep.mubr.bf16.mxu0 0
    %408 = vmatmul.mubr.bf16.gmra.mrb[0].mxu0 %v363
    %v409 = vpop.f32.mrb[0].mxu0
    %v410 = vadd.f32 0.0, %v409
    %v411 = vpop.f32.mrb[0].mxu0
    %v412 = vadd.f32 0.0, %v411
    %v413 = vpop.f32.mrb[0].mxu0
    %v414 = vadd.f32 0.0, %v413
    %v415 = vpop.f32.mrb[0].mxu0
    %v416 = vadd.f32 0.0, %v415
    %417 = vdwg.mxu0
    %v418 = vmul.f32 %v400, 0.0625
    %v419 = vmul.f32 %v404, 0.0625
    %v420 = vmul.f32 %v410, 0.0625
    %v421 = vmul.f32 %v414, 0.0625
    %426 = vrot.lane.b32.xlu0 %v418, 112
    %v427 = vpop.permute.xlu0 %426
    %428 = vrot.lane.b32.xlu0 %v419, 112
    %v429 = vpop.permute.xlu0 %428
    %430 = vrot.lane.b32.xlu0 %v420, 112
    %v431 = vpop.permute.xlu0 %430
    %432 = vrot.lane.b32.xlu0 %v421, 112
    %v433 = vpop.permute.xlu0 %432
    %438 = vrot.lane.b32.xlu0 %v418, 96
    %v439 = vpop.permute.xlu0 %438
    %440 = vrot.lane.b32.xlu0 %v419, 96
    %v441 = vpop.permute.xlu0 %440
    %442 = vrot.lane.b32.xlu0 %v420, 96
    %v443 = vpop.permute.xlu0 %442
    %444 = vrot.lane.b32.xlu0 %v421, 96
    %v445 = vpop.permute.xlu0 %444
    %450 = vrot.lane.b32.xlu0 %v418, 80
    %v451 = vpop.permute.xlu0 %450
    %452 = vrot.lane.b32.xlu0 %v419, 80
    %v453 = vpop.permute.xlu0 %452
    %454 = vrot.lane.b32.xlu0 %v420, 80
    %v455 = vpop.permute.xlu0 %454
    %456 = vrot.lane.b32.xlu0 %v421, 80
    %v457 = vpop.permute.xlu0 %456
    %v462 = vpack.c.bf16 %v418, %v418
    %v463 = vpack.c.bf16 %v419, %v419
    %v464 = vpack.c.bf16 %v420, %v420
    %v465 = vpack.c.bf16 %v421, %v421
    %v466 = vpack.c.bf16 %v427, %v427
    %v467 = vpack.c.bf16 %v429, %v429
    %v468 = vpack.c.bf16 %v431, %v431
    %v469 = vpack.c.bf16 %v433, %v433
    %v470 = vpack.c.bf16 %v439, %v439
    %v471 = vpack.c.bf16 %v441, %v441
    %v472 = vpack.c.bf16 %v443, %v443
    %v473 = vpack.c.bf16 %v445, %v445
    %v474 = vpack.c.bf16 %v451, %v451
    %v475 = vpack.c.bf16 %v453, %v453
    %v476 = vpack.c.bf16 %v455, %v455
    %v477 = vpack.c.bf16 %v457, %v457
    %486 = vrot.lane.b32.xlu0 %v303, 112
    %v487 = vpop.permute.xlu0 %486
    %488 = vrot.lane.b32.xlu0 %v306, 112
    %v489 = vpop.permute.xlu0 %488
    %490 = vrot.lane.b32.xlu0 %v311, 112
    %v491 = vpop.permute.xlu0 %490
    %492 = vrot.lane.b32.xlu0 %v314, 112
    %v493 = vpop.permute.xlu0 %492
    %494 = vrot.lane.b32.xlu0 %v319, 112
    %v495 = vpop.permute.xlu0 %494
    %496 = vrot.lane.b32.xlu0 %v322, 112
    %v497 = vpop.permute.xlu0 %496
    %498 = vrot.lane.b32.xlu0 %v327, 112
    %v499 = vpop.permute.xlu0 %498
    %500 = vrot.lane.b32.xlu0 %v330, 112
    %v501 = vpop.permute.xlu0 %500
    %510 = vrot.lane.b32.xlu0 %v303, 96
    %v511 = vpop.permute.xlu0 %510
    %512 = vrot.lane.b32.xlu0 %v306, 96
    %v513 = vpop.permute.xlu0 %512
    %514 = vrot.lane.b32.xlu0 %v311, 96
    %v515 = vpop.permute.xlu0 %514
    %516 = vrot.lane.b32.xlu0 %v314, 96
    %v517 = vpop.permute.xlu0 %516
    %518 = vrot.lane.b32.xlu0 %v319, 96
    %v519 = vpop.permute.xlu0 %518
    %520 = vrot.lane.b32.xlu0 %v322, 96
    %v521 = vpop.permute.xlu0 %520
    %522 = vrot.lane.b32.xlu0 %v327, 96
    %v523 = vpop.permute.xlu0 %522
    %524 = vrot.lane.b32.xlu0 %v330, 96
    %v525 = vpop.permute.xlu0 %524
    %534 = vrot.lane.b32.xlu0 %v303, 80
    %v535 = vpop.permute.xlu0 %534
    %536 = vrot.lane.b32.xlu0 %v306, 80
    %v537 = vpop.permute.xlu0 %536
    %538 = vrot.lane.b32.xlu0 %v311, 80
    %v539 = vpop.permute.xlu0 %538
    %540 = vrot.lane.b32.xlu0 %v314, 80
    %v541 = vpop.permute.xlu0 %540
    %542 = vrot.lane.b32.xlu0 %v319, 80
    %v543 = vpop.permute.xlu0 %542
    %544 = vrot.lane.b32.xlu0 %v322, 80
    %v545 = vpop.permute.xlu0 %544
    %546 = vrot.lane.b32.xlu0 %v327, 80
    %v547 = vpop.permute.xlu0 %546
    %548 = vrot.lane.b32.xlu0 %v330, 80
    %v549 = vpop.permute.xlu0 %548
    %v558 = vpack.c.bf16 %v306, %v303
    %v559 = vpack.c.bf16 %v314, %v311
    %v560 = vpack.c.bf16 %v322, %v319
    %v561 = vpack.c.bf16 %v330, %v327
    %v562 = vpack.c.bf16 %v489, %v487
    %v563 = vpack.c.bf16 %v493, %v491
    %v564 = vpack.c.bf16 %v497, %v495
    %v565 = vpack.c.bf16 %v501, %v499
    %v566 = vpack.c.bf16 %v513, %v511
    %v567 = vpack.c.bf16 %v517, %v515
    %v568 = vpack.c.bf16 %v521, %v519
    %v569 = vpack.c.bf16 %v525, %v523
    %v570 = vpack.c.bf16 %v537, %v535
    %v571 = vpack.c.bf16 %v541, %v539
    %v572 = vpack.c.bf16 %v545, %v543
    %v573 = vpack.c.bf16 %v549, %v547
    %578 = vrot.lane.b32.xlu0 %v400, 112
    %v579 = vpop.permute.xlu0 %578
    %580 = vrot.lane.b32.xlu0 %v404, 112
    %v581 = vpop.permute.xlu0 %580
    %582 = vrot.lane.b32.xlu0 %v410, 112
    %v583 = vpop.permute.xlu0 %582
    %584 = vrot.lane.b32.xlu0 %v414, 112
    %v585 = vpop.permute.xlu0 %584
    %590 = vrot.lane.b32.xlu0 %v400, 96
    %v591 = vpop.permute.xlu0 %590
    %592 = vrot.lane.b32.xlu0 %v404, 96
    %v593 = vpop.permute.xlu0 %592
    %594 = vrot.lane.b32.xlu0 %v410, 96
    %v595 = vpop.permute.xlu0 %594
    %596 = vrot.lane.b32.xlu0 %v414, 96
    %v597 = vpop.permute.xlu0 %596
    %602 = vrot.lane.b32.xlu0 %v400, 80
    %v603 = vpop.permute.xlu0 %602
    %604 = vrot.lane.b32.xlu0 %v404, 80
    %v605 = vpop.permute.xlu0 %604
    %606 = vrot.lane.b32.xlu0 %v410, 80
    %v607 = vpop.permute.xlu0 %606
    %608 = vrot.lane.b32.xlu0 %v414, 80
    %v609 = vpop.permute.xlu0 %608
    %v614 = vpack.c.bf16 %v400, %v400
    %v615 = vpack.c.bf16 %v404, %v404
    %v616 = vpack.c.bf16 %v410, %v410
    %v617 = vpack.c.bf16 %v414, %v414
    %v618 = vpack.c.bf16 %v579, %v579
    %v619 = vpack.c.bf16 %v581, %v581
    %v620 = vpack.c.bf16 %v583, %v583
    %v621 = vpack.c.bf16 %v585, %v585
    %v622 = vpack.c.bf16 %v591, %v591
    %v623 = vpack.c.bf16 %v593, %v593
    %v624 = vpack.c.bf16 %v595, %v595
    %v625 = vpack.c.bf16 %v597, %v597
    %v626 = vpack.c.bf16 %v603, %v603
    %v627 = vpack.c.bf16 %v605, %v605
    %v628 = vpack.c.bf16 %v607, %v607
    %v629 = vpack.c.bf16 %v609, %v609
    %634 = vrot.lane.b32.xlu0 %v402, 112
    %v635 = vpop.permute.xlu0 %634
    %636 = vrot.lane.b32.xlu0 %v406, 112
    %v637 = vpop.permute.xlu0 %636
    %638 = vrot.lane.b32.xlu0 %v412, 112
    %v639 = vpop.permute.xlu0 %638
    %640 = vrot.lane.b32.xlu0 %v416, 112
    %v641 = vpop.permute.xlu0 %640
    %646 = vrot.lane.b32.xlu0 %v402, 96
    %v647 = vpop.permute.xlu0 %646
    %648 = vrot.lane.b32.xlu0 %v406, 96
    %v649 = vpop.permute.xlu0 %648
    %650 = vrot.lane.b32.xlu0 %v412, 96
    %v651 = vpop.permute.xlu0 %650
    %652 = vrot.lane.b32.xlu0 %v416, 96
    %v653 = vpop.permute.xlu0 %652
    %658 = vrot.lane.b32.xlu0 %v402, 80
    %v659 = vpop.permute.xlu0 %658
    %660 = vrot.lane.b32.xlu0 %v406, 80
    %v661 = vpop.permute.xlu0 %660
    %662 = vrot.lane.b32.xlu0 %v412, 80
    %v663 = vpop.permute.xlu0 %662
    %664 = vrot.lane.b32.xlu0 %v416, 80
    %v665 = vpop.permute.xlu0 %664
    %v670 = vpack.c.bf16 %v402, %v402
    %v671 = vpack.c.bf16 %v406, %v406
    %v672 = vpack.c.bf16 %v412, %v412
    %v673 = vpack.c.bf16 %v416, %v416
    %v674 = vpack.c.bf16 %v635, %v635
    %v675 = vpack.c.bf16 %v637, %v637
    %v676 = vpack.c.bf16 %v639, %v639
    %v677 = vpack.c.bf16 %v641, %v641
    %v678 = vpack.c.bf16 %v647, %v647
    %v679 = vpack.c.bf16 %v649, %v649
    %v680 = vpack.c.bf16 %v651, %v651
    %v681 = vpack.c.bf16 %v653, %v653
    %v682 = vpack.c.bf16 %v659, %v659
    %v683 = vpack.c.bf16 %v661, %v661
    %v684 = vpack.c.bf16 %v663, %v663
    %v685 = vpack.c.bf16 %v665, %v665
    %vm686 = vcmask 130048
    %v688 = vsel %vm686, %v462, 0
    %v691 = vsel %vm686, %v558, 0
    %693 = vmatprep.subr.bf16.mxu0 0
    %694 = vmatpush1.bf16.xpose.msra.mxu0 %v691
    %695 = vmatprep.subr.bf16.mxu0 0
    %696 = vmatpush1.bf16.xpose.msra.mxu0 0
    %697 = vmatprep.subr.bf16.mxu0 0
    %698 = vmatpush1.bf16.xpose.msra.mxu0 0
    %699 = vmatprep.subr.bf16.mxu0 0
    %700 = vmatpush1.bf16.xpose.msra.mxu0 0
    %701 = vmatprep.subr.bf16.mxu0 0
    %702 = vmatpush1.bf16.xpose.msra.mxu0 0
    %703 = vmatprep.subr.bf16.mxu0 0
    %704 = vmatpush1.bf16.xpose.msra.mxu0 0
    %705 = vmatprep.subr.bf16.mxu0 0
    %706 = vmatpush1.bf16.xpose.msra.mxu0 0
    %707 = vmatprep.subr.bf16.mxu0 0
    %708 = vmatpush1.bf16.xpose.msra.mxu0 0
    %709 = vmatprep.subr.bf16.mxu0 0
    %710 = vmatpush1.bf16.xpose.msra.mxu0 0
    %711 = vmatprep.subr.bf16.mxu0 0
    %712 = vmatpush1.bf16.xpose.msra.mxu0 0
    %713 = vmatprep.subr.bf16.mxu0 0
    %714 = vmatpush1.bf16.xpose.msra.mxu0 0
    %715 = vmatprep.subr.bf16.mxu0 0
    %716 = vmatpush1.bf16.xpose.msra.mxu0 0
    %717 = vmatprep.subr.bf16.mxu0 0
    %718 = vmatpush1.bf16.xpose.msra.mxu0 0
    %719 = vmatprep.subr.bf16.mxu0 0
    %720 = vmatpush1.bf16.xpose.msra.mxu0 0
    %721 = vmatprep.subr.bf16.mxu0 0
    %722 = vmatpush1.bf16.xpose.msra.mxu0 0
    %723 = vmatprep.subr.bf16.mxu0 0
    %724 = vmatpush1.bf16.xpose.msra.mxu0 0
    %725 = vmatprep.mubr.bf16.mxu0 0
    %726 = vmatmul.mubr.bf16.gmra.mrb[0].mxu0 %v688
    %v727 = vpop.f32.mrb[0].mxu0
    %v728 = vadd.f32 0.0, %v727
    %v729 = vpop.f32.mrb[0].mxu0
    %v730 = vpop.f32.mrb[0].mxu0
    %v731 = vpop.f32.mrb[0].mxu0
    %732 = vdwg.mxu0
    %v734 = vsel %vm686, %v463, 0
    %v737 = vsel %vm686, %v559, 0
    %739 = vmatprep.subr.bf16.mxu0 0
    %740 = vmatpush1.bf16.xpose.msra.mxu0 %v737
    %741 = vmatprep.subr.bf16.mxu0 0
    %742 = vmatpush1.bf16.xpose.msra.mxu0 0
    %743 = vmatprep.subr.bf16.mxu0 0
    %744 = vmatpush1.bf16.xpose.msra.mxu0 0
    %745 = vmatprep.subr.bf16.mxu0 0
    %746 = vmatpush1.bf16.xpose.msra.mxu0 0
    %747 = vmatprep.subr.bf16.mxu0 0
    %748 = vmatpush1.bf16.xpose.msra.mxu0 0
    %749 = vmatprep.subr.bf16.mxu0 0
    %750 = vmatpush1.bf16.xpose.msra.mxu0 0
    %751 = vmatprep.subr.bf16.mxu0 0
    %752 = vmatpush1.bf16.xpose.msra.mxu0 0
    %753 = vmatprep.subr.bf16.mxu0 0
    %754 = vmatpush1.bf16.xpose.msra.mxu0 0
    %755 = vmatprep.subr.bf16.mxu0 0
    %756 = vmatpush1.bf16.xpose.msra.mxu0 0
    %757 = vmatprep.subr.bf16.mxu0 0
    %758 = vmatpush1.bf16.xpose.msra.mxu0 0
    %759 = vmatprep.subr.bf16.mxu0 0
    %760 = vmatpush1.bf16.xpose.msra.mxu0 0
    %761 = vmatprep.subr.bf16.mxu0 0
    %762 = vmatpush1.bf16.xpose.msra.mxu0 0
    %763 = vmatprep.subr.bf16.mxu0 0
    %764 = vmatpush1.bf16.xpose.msra.mxu0 0
    %765 = vmatprep.subr.bf16.mxu0 0
    %766 = vmatpush1.bf16.xpose.msra.mxu0 0
    %767 = vmatprep.subr.bf16.mxu0 0
    %768 = vmatpush1.bf16.xpose.msra.mxu0 0
    %769 = vmatprep.subr.bf16.mxu0 0
    %770 = vmatpush1.bf16.xpose.msra.mxu0 0
    %771 = vmatprep.mubr.bf16.mxu0 0
    %772 = vmatmul.mubr.bf16.gmra.mrb[0].mxu0 %v734
    %v773 = vpop.f32.mrb[0].mxu0
    %v774 = vadd.f32 0.0, %v773
    %v775 = vpop.f32.mrb[0].mxu0
    %v776 = vpop.f32.mrb[0].mxu0
    %v777 = vpop.f32.mrb[0].mxu0
    %778 = vdwg.mxu0
    %v780 = vsel %vm686, %v464, 0
    %v783 = vsel %vm686, %v560, 0
    %785 = vmatprep.subr.bf16.mxu0 0
    %786 = vmatpush1.bf16.xpose.msra.mxu0 %v783
    %787 = vmatprep.subr.bf16.mxu0 0
    %788 = vmatpush1.bf16.xpose.msra.mxu0 0
    %789 = vmatprep.subr.bf16.mxu0 0
    %790 = vmatpush1.bf16.xpose.msra.mxu0 0
    %791 = vmatprep.subr.bf16.mxu0 0
    %792 = vmatpush1.bf16.xpose.msra.mxu0 0
    %793 = vmatprep.subr.bf16.mxu0 0
    %794 = vmatpush1.bf16.xpose.msra.mxu0 0
    %795 = vmatprep.subr.bf16.mxu0 0
    %796 = vmatpush1.bf16.xpose.msra.mxu0 0
    %797 = vmatprep.subr.bf16.mxu0 0
    %798 = vmatpush1.bf16.xpose.msra.mxu0 0
    %799 = vmatprep.subr.bf16.mxu0 0
    %800 = vmatpush1.bf16.xpose.msra.mxu0 0
    %801 = vmatprep.subr.bf16.mxu0 0
    %802 = vmatpush1.bf16.xpose.msra.mxu0 0
    %803 = vmatprep.subr.bf16.mxu0 0
    %804 = vmatpush1.bf16.xpose.msra.mxu0 0
    %805 = vmatprep.subr.bf16.mxu0 0
    %806 = vmatpush1.bf16.xpose.msra.mxu0 0
    %807 = vmatprep.subr.bf16.mxu0 0
    %808 = vmatpush1.bf16.xpose.msra.mxu0 0
    %809 = vmatprep.subr.bf16.mxu0 0
    %810 = vmatpush1.bf16.xpose.msra.mxu0 0
    %811 = vmatprep.subr.bf16.mxu0 0
    %812 = vmatpush1.bf16.xpose.msra.mxu0 0
    %813 = vmatprep.subr.bf16.mxu0 0
    %814 = vmatpush1.bf16.xpose.msra.mxu0 0
    %815 = vmatprep.subr.bf16.mxu0 0
    %816 = vmatpush1.bf16.xpose.msra.mxu0 0
    %817 = vmatprep.mubr.bf16.mxu0 0
    %818 = vmatmul.mubr.bf16.gmra.mrb[0].mxu0 %v780
    %v819 = vpop.f32.mrb[0].mxu0
    %v820 = vadd.f32 0.0, %v819
    %v821 = vpop.f32.mrb[0].mxu0
    %v822 = vpop.f32.mrb[0].mxu0
    %v823 = vpop.f32.mrb[0].mxu0
    %824 = vdwg.mxu0
    %v826 = vsel %vm686, %v465, 0
    %v829 = vsel %vm686, %v561, 0
    %831 = vmatprep.subr.bf16.mxu0 0
    %832 = vmatpush1.bf16.xpose.msra.mxu0 %v829
    %833 = vmatprep.subr.bf16.mxu0 0
    %834 = vmatpush1.bf16.xpose.msra.mxu0 0
    %835 = vmatprep.subr.bf16.mxu0 0
    %836 = vmatpush1.bf16.xpose.msra.mxu0 0
    %837 = vmatprep.subr.bf16.mxu0 0
    %838 = vmatpush1.bf16.xpose.msra.mxu0 0
    %839 = vmatprep.subr.bf16.mxu0 0
    %840 = vmatpush1.bf16.xpose.msra.mxu0 0
    %841 = vmatprep.subr.bf16.mxu0 0
    %842 = vmatpush1.bf16.xpose.msra.mxu0 0
    %843 = vmatprep.subr.bf16.mxu0 0
    %844 = vmatpush1.bf16.xpose.msra.mxu0 0
    %845 = vmatprep.subr.bf16.mxu0 0
    %846 = vmatpush1.bf16.xpose.msra.mxu0 0
    %847 = vmatprep.subr.bf16.mxu0 0
    %848 = vmatpush1.bf16.xpose.msra.mxu0 0
    %849 = vmatprep.subr.bf16.mxu0 0
    %850 = vmatpush1.bf16.xpose.msra.mxu0 0
    %851 = vmatprep.subr.bf16.mxu0 0
    %852 = vmatpush1.bf16.xpose.msra.mxu0 0
    %853 = vmatprep.subr.bf16.mxu0 0
    %854 = vmatpush1.bf16.xpose.msra.mxu0 0
    %855 = vmatprep.subr.bf16.mxu0 0
    %856 = vmatpush1.bf16.xpose.msra.mxu0 0
    %857 = vmatprep.subr.bf16.mxu0 0
    %858 = vmatpush1.bf16.xpose.msra.mxu0 0
    %859 = vmatprep.subr.bf16.mxu0 0
    %860 = vmatpush1.bf16.xpose.msra.mxu0 0
    %861 = vmatprep.subr.bf16.mxu0 0
    %862 = vmatpush1.bf16.xpose.msra.mxu0 0
    %863 = vmatprep.mubr.bf16.mxu0 0
    %864 = vmatmul.mubr.bf16.gmra.mrb[0].mxu0 %v826
    %v865 = vpop.f32.mrb[0].mxu0
    %v866 = vadd.f32 0.0, %v865
    %v867 = vpop.f32.mrb[0].mxu0
    %v868 = vpop.f32.mrb[0].mxu0
    %v869 = vpop.f32.mrb[0].mxu0
    %870 = vdwg.mxu0
    %v872 = vsel %vm686, %v466, 0
    %v875 = vsel %vm686, %v562, 0
    %877 = vmatprep.subr.bf16.mxu0 0
    %878 = vmatpush1.bf16.xpose.msra.mxu0 %v875
    %879 = vmatprep.subr.bf16.mxu0 0
    %880 = vmatpush1.bf16.xpose.msra.mxu0 0
    %881 = vmatprep.subr.bf16.mxu0 0
    %882 = vmatpush1.bf16.xpose.msra.mxu0 0
    %883 = vmatprep.subr.bf16.mxu0 0
    %884 = vmatpush1.bf16.xpose.msra.mxu0 0
    %885 = vmatprep.subr.bf16.mxu0 0
    %886 = vmatpush1.bf16.xpose.msra.mxu0 0
    %887 = vmatprep.subr.bf16.mxu0 0
    %888 = vmatpush1.bf16.xpose.msra.mxu0 0
    %889 = vmatprep.subr.bf16.mxu0 0
    %890 = vmatpush1.bf16.xpose.msra.mxu0 0
    %891 = vmatprep.subr.bf16.mxu0 0
    %892 = vmatpush1.bf16.xpose.msra.mxu0 0
    %893 = vmatprep.subr.bf16.mxu0 0
    %894 = vmatpush1.bf16.xpose.msra.mxu0 0
    %895 = vmatprep.subr.bf16.mxu0 0
    %896 = vmatpush1.bf16.xpose.msra.mxu0 0
    %897 = vmatprep.subr.bf16.mxu0 0
    %898 = vmatpush1.bf16.xpose.msra.mxu0 0
    %899 = vmatprep.subr.bf16.mxu0 0
    %900 = vmatpush1.bf16.xpose.msra.mxu0 0
    %901 = vmatprep.subr.bf16.mxu0 0
    %902 = vmatpush1.bf16.xpose.msra.mxu0 0
    %903 = vmatprep.subr.bf16.mxu0 0
    %904 = vmatpush1.bf16.xpose.msra.mxu0 0
    %905 = vmatprep.subr.bf16.mxu0 0
    %906 = vmatpush1.bf16.xpose.msra.mxu0 0
    %907 = vmatprep.subr.bf16.mxu0 0
    %908 = vmatpush1.bf16.xpose.msra.mxu0 0
    %909 = vmatprep.mubr.bf16.mxu0 0
    %910 = vmatmul.mubr.bf16.gmra.mrb[0].mxu0 %v872
    %v911 = vpop.f32.mrb[0].mxu0
    %v912 = vadd.f32 0.0, %v911
    %v913 = vpop.f32.mrb[0].mxu0
    %v914 = vpop.f32.mrb[0].mxu0
    %v915 = vpop.f32.mrb[0].mxu0
    %916 = vdwg.mxu0
    %v918 = vsel %vm686, %v467, 0
    %v921 = vsel %vm686, %v563, 0
    %923 = vmatprep.subr.bf16.mxu0 0
    %924 = vmatpush1.bf16.xpose.msra.mxu0 %v921
    %925 = vmatprep.subr.bf16.mxu0 0
    %926 = vmatpush1.bf16.xpose.msra.mxu0 0
    %927 = vmatprep.subr.bf16.mxu0 0
    %928 = vmatpush1.bf16.xpose.msra.mxu0 0
    %929 = vmatprep.subr.bf16.mxu0 0
    %930 = vmatpush1.bf16.xpose.msra.mxu0 0
    %931 = vmatprep.subr.bf16.mxu0 0
    %932 = vmatpush1.bf16.xpose.msra.mxu0 0
    %933 = vmatprep.subr.bf16.mxu0 0
    %934 = vmatpush1.bf16.xpose.msra.mxu0 0
    %935 = vmatprep.subr.bf16.mxu0 0
    %936 = vmatpush1.bf16.xpose.msra.mxu0 0
    %937 = vmatprep.subr.bf16.mxu0 0
    %938 = vmatpush1.bf16.xpose.msra.mxu0 0
    %939 = vmatprep.subr.bf16.mxu0 0
    %940 = vmatpush1.bf16.xpose.msra.mxu0 0
    %941 = vmatprep.subr.bf16.mxu0 0
    %942 = vmatpush1.bf16.xpose.msra.mxu0 0
    %943 = vmatprep.subr.bf16.mxu0 0
    %944 = vmatpush1.bf16.xpose.msra.mxu0 0
    %945 = vmatprep.subr.bf16.mxu0 0
    %946 = vmatpush1.bf16.xpose.msra.mxu0 0
    %947 = vmatprep.subr.bf16.mxu0 0
    %948 = vmatpush1.bf16.xpose.msra.mxu0 0
    %949 = vmatprep.subr.bf16.mxu0 0
    %950 = vmatpush1.bf16.xpose.msra.mxu0 0
    %951 = vmatprep.subr.bf16.mxu0 0
    %952 = vmatpush1.bf16.xpose.msra.mxu0 0
    %953 = vmatprep.subr.bf16.mxu0 0
    %954 = vmatpush1.bf16.xpose.msra.mxu0 0
    %955 = vmatprep.mubr.bf16.mxu0 0
    %956 = vmatmul.mubr.bf16.gmra.mrb[0].mxu0 %v918
    %v957 = vpop.f32.mrb[0].mxu0
    %v958 = vadd.f32 0.0, %v957
    %v959 = vpop.f32.mrb[0].mxu0
    %v960 = vpop.f32.mrb[0].mxu0
    %v961 = vpop.f32.mrb[0].mxu0
    %962 = vdwg.mxu0
    %v964 = vsel %vm686, %v468, 0
    %v967 = vsel %vm686, %v564, 0
    %969 = vmatprep.subr.bf16.mxu0 0
    %970 = vmatpush1.bf16.xpose.msra.mxu0 %v967
    %971 = vmatprep.subr.bf16.mxu0 0
    %972 = vmatpush1.bf16.xpose.msra.mxu0 0
    %973 = vmatprep.subr.bf16.mxu0 0
    %974 = vmatpush1.bf16.xpose.msra.mxu0 0
    %975 = vmatprep.subr.bf16.mxu0 0
    %976 = vmatpush1.bf16.xpose.msra.mxu0 0
    %977 = vmatprep.subr.bf16.mxu0 0
    %978 = vmatpush1.bf16.xpose.msra.mxu0 0
    %979 = vmatprep.subr.bf16.mxu0 0
    %980 = vmatpush1.bf16.xpose.msra.mxu0 0
    %981 = vmatprep.subr.bf16.mxu0 0
    %982 = vmatpush1.bf16.xpose.msra.mxu0 0
    %983 = vmatprep.subr.bf16.mxu0 0
    %984 = vmatpush1.bf16.xpose.msra.mxu0 0
    %985 = vmatprep.subr.bf16.mxu0 0
    %986 = vmatpush1.bf16.xpose.msra.mxu0 0
    %987 = vmatprep.subr.bf16.mxu0 0
    %988 = vmatpush1.bf16.xpose.msra.mxu0 0
    %989 = vmatprep.subr.bf16.mxu0 0
    %990 = vmatpush1.bf16.xpose.msra.mxu0 0
    %991 = vmatprep.subr.bf16.mxu0 0
    %992 = vmatpush1.bf16.xpose.msra.mxu0 0
    %993 = vmatprep.subr.bf16.mxu0 0
    %994 = vmatpush1.bf16.xpose.msra.mxu0 0
    %995 = vmatprep.subr.bf16.mxu0 0
    %996 = vmatpush1.bf16.xpose.msra.mxu0 0
    %997 = vmatprep.subr.bf16.mxu0 0
    %998 = vmatpush1.bf16.xpose.msra.mxu0 0
    %999 = vmatprep.subr.bf16.mxu0 0
    %1000 = vmatpush1.bf16.xpose.msra.mxu0 0
    %1001 = vmatprep.mubr.bf16.mxu0 0
    %1002 = vmatmul.mubr.bf16.gmra.mrb[0].mxu0 %v964
    %v1003 = vpop.f32.mrb[0].mxu0
    %v1004 = vadd.f32 0.0, %v1003
    %v1005 = vpop.f32.mrb[0].mxu0
    %v1006 = vpop.f32.mrb[0].mxu0
    %v1007 = vpop.f32.mrb[0].mxu0
    %1008 = vdwg.mxu0
    %v1010 = vsel %vm686, %v469, 0
    %v1013 = vsel %vm686, %v565, 0
    %1015 = vmatprep.subr.bf16.mxu0 0
    %1016 = vmatpush1.bf16.xpose.msra.mxu0 %v1013
    %1017 = vmatprep.subr.bf16.mxu0 0
    %1018 = vmatpush1.bf16.xpose.msra.mxu0 0
    %1019 = vmatprep.subr.bf16.mxu0 0
    %1020 = vmatpush1.bf16.xpose.msra.mxu0 0
    %1021 = vmatprep.subr.bf16.mxu0 0
    %1022 = vmatpush1.bf16.xpose.msra.mxu0 0
    %1023 = vmatprep.subr.bf16.mxu0 0
    %1024 = vmatpush1.bf16.xpose.msra.mxu0 0
    %1025 = vmatprep.subr.bf16.mxu0 0
    %1026 = vmatpush1.bf16.xpose.msra.mxu0 0
    %1027 = vmatprep.subr.bf16.mxu0 0
    %1028 = vmatpush1.bf16.xpose.msra.mxu0 0
    %1029 = vmatprep.subr.bf16.mxu0 0
    %1030 = vmatpush1.bf16.xpose.msra.mxu0 0
    %1031 = vmatprep.subr.bf16.mxu0 0
    %1032 = vmatpush1.bf16.xpose.msra.mxu0 0
    %1033 = vmatprep.subr.bf16.mxu0 0
    %1034 = vmatpush1.bf16.xpose.msra.mxu0 0
    %1035 = vmatprep.subr.bf16.mxu0 0
    %1036 = vmatpush1.bf16.xpose.msra.mxu0 0
    %1037 = vmatprep.subr.bf16.mxu0 0
    %1038 = vmatpush1.bf16.xpose.msra.mxu0 0
    %1039 = vmatprep.subr.bf16.mxu0 0
    %1040 = vmatpush1.bf16.xpose.msra.mxu0 0
    %1041 = vmatprep.subr.bf16.mxu0 0
    %1042 = vmatpush1.bf16.xpose.msra.mxu0 0
    %1043 = vmatprep.subr.bf16.mxu0 0
    %1044 = vmatpush1.bf16.xpose.msra.mxu0 0
    %1045 = vmatprep.subr.bf16.mxu0 0
    %1046 = vmatpush1.bf16.xpose.msra.mxu0 0
    %1047 = vmatprep.mubr.bf16.mxu0 0
    %1048 = vmatmul.mubr.bf16.gmra.mrb[0].mxu0 %v1010
    %v1049 = vpop.f32.mrb[0].mxu0
    %v1050 = vadd.f32 0.0, %v1049
    %v1051 = vpop.f32.mrb[0].mxu0
    %v1052 = vpop.f32.mrb[0].mxu0
    %v1053 = vpop.f32.mrb[0].mxu0
    %1054 = vdwg.mxu0
    %v1056 = vsel %vm686, %v470, 0
    %v1059 = vsel %vm686, %v566, 0
    %1061 = vmatprep.subr.bf16.mxu0 0
    %1062 = vmatpush1.bf16.xpose.msra.mxu0 %v1059
    %1063 = vmatprep.subr.bf16.mxu0 0
    %1064 = vmatpush1.bf16.xpose.msra.mxu0 0
    %1065 = vmatprep.subr.bf16.mxu0 0
    %1066 = vmatpush1.bf16.xpose.msra.mxu0 0
    %1067 = vmatprep.subr.bf16.mxu0 0
    %1068 = vmatpush1.bf16.xpose.msra.mxu0 0
    %1069 = vmatprep.subr.bf16.mxu0 0
    %1070 = vmatpush1.bf16.xpose.msra.mxu0 0
    %1071 = vmatprep.subr.bf16.mxu0 0
    %1072 = vmatpush1.bf16.xpose.msra.mxu0 0
    %1073 = vmatprep.subr.bf16.mxu0 0
    %1074 = vmatpush1.bf16.xpose.msra.mxu0 0
    %1075 = vmatprep.subr.bf16.mxu0 0
    %1076 = vmatpush1.bf16.xpose.msra.mxu0 0
    %1077 = vmatprep.subr.bf16.mxu0 0
    %1078 = vmatpush1.bf16.xpose.msra.mxu0 0
    %1079 = vmatprep.subr.bf16.mxu0 0
    %1080 = vmatpush1.bf16.xpose.msra.mxu0 0
    %1081 = vmatprep.subr.bf16.mxu0 0
    %1082 = vmatpush1.bf16.xpose.msra.mxu0 0
    %1083 = vmatprep.subr.bf16.mxu0 0
    %1084 = vmatpush1.bf16.xpose.msra.mxu0 0
    %1085 = vmatprep.subr.bf16.mxu0 0
    %1086 = vmatpush1.bf16.xpose.msra.mxu0 0
    %1087 = vmatprep.subr.bf16.mxu0 0
    %1088 = vmatpush1.bf16.xpose.msra.mxu0 0
    %1089 = vmatprep.subr.bf16.mxu0 0
    %1090 = vmatpush1.bf16.xpose.msra.mxu0 0
    %1091 = vmatprep.subr.bf16.mxu0 0
    %1092 = vmatpush1.bf16.xpose.msra.mxu0 0
    %1093 = vmatprep.mubr.bf16.mxu0 0
    %1094 = vmatmul.mubr.bf16.gmra.mrb[0].mxu0 %v1056
    %v1095 = vpop.f32.mrb[0].mxu0
    %v1096 = vadd.f32 0.0, %v1095
    %v1097 = vpop.f32.mrb[0].mxu0
    %v1098 = vpop.f32.mrb[0].mxu0
    %v1099 = vpop.f32.mrb[0].mxu0
    %1100 = vdwg.mxu0
    %v1102 = vsel %vm686, %v471, 0
    %v1105 = vsel %vm686, %v567, 0
    %1107 = vmatprep.subr.bf16.mxu0 0
    %1108 = vmatpush1.bf16.xpose.msra.mxu0 %v1105
    %1109 = vmatprep.subr.bf16.mxu0 0
    %1110 = vmatpush1.bf16.xpose.msra.mxu0 0
    %1111 = vmatprep.subr.bf16.mxu0 0
    %1112 = vmatpush1.bf16.xpose.msra.mxu0 0
    %1113 = vmatprep.subr.bf16.mxu0 0
    %1114 = vmatpush1.bf16.xpose.msra.mxu0 0
    %1115 = vmatprep.subr.bf16.mxu0 0
    %1116 = vmatpush1.bf16.xpose.msra.mxu0 0
    %1117 = vmatprep.subr.bf16.mxu0 0
    %1118 = vmatpush1.bf16.xpose.msra.mxu0 0
    %1119 = vmatprep.subr.bf16.mxu0 0
    %1120 = vmatpush1.bf16.xpose.msra.mxu0 0
    %1121 = vmatprep.subr.bf16.mxu0 0
    %1122 = vmatpush1.bf16.xpose.msra.mxu0 0
    %1123 = vmatprep.subr.bf16.mxu0 0
    %1124 = vmatpush1.bf16.xpose.msra.mxu0 0
    %1125 = vmatprep.subr.bf16.mxu0 0
    %1126 = vmatpush1.bf16.xpose.msra.mxu0 0
    %1127 = vmatprep.subr.bf16.mxu0 0
    %1128 = vmatpush1.bf16.xpose.msra.mxu0 0
    %1129 = vmatprep.subr.bf16.mxu0 0
    %1130 = vmatpush1.bf16.xpose.msra.mxu0 0
    %1131 = vmatprep.subr.bf16.mxu0 0
    %1132 = vmatpush1.bf16.xpose.msra.mxu0 0
    %1133 = vmatprep.subr.bf16.mxu0 0
    %1134 = vmatpush1.bf16.xpose.msra.mxu0 0
    %1135 = vmatprep.subr.bf16.mxu0 0
    %1136 = vmatpush1.bf16.xpose.msra.mxu0 0
    %1137 = vmatprep.subr.bf16.mxu0 0
    %1138 = vmatpush1.bf16.xpose.msra.mxu0 0
    %1139 = vmatprep.mubr.bf16.mxu0 0
    %1140 = vmatmul.mubr.bf16.gmra.mrb[0].mxu0 %v1102
    %v1141 = vpop.f32.mrb[0].mxu0
    %v1142 = vadd.f32 0.0, %v1141
    %v1143 = vpop.f32.mrb[0].mxu0
    %v1144 = vpop.f32.mrb[0].mxu0
    %v1145 = vpop.f32.mrb[0].mxu0
    %1146 = vdwg.mxu0
    %v1148 = vsel %vm686, %v472, 0
    %v1151 = vsel %vm686, %v568, 0
    %1153 = vmatprep.subr.bf16.mxu0 0
    %1154 = vmatpush1.bf16.xpose.msra.mxu0 %v1151
    %1155 = vmatprep.subr.bf16.mxu0 0
    %1156 = vmatpush1.bf16.xpose.msra.mxu0 0
    %1157 = vmatprep.subr.bf16.mxu0 0
    %1158 = vmatpush1.bf16.xpose.msra.mxu0 0
    %1159 = vmatprep.subr.bf16.mxu0 0
    %1160 = vmatpush1.bf16.xpose.msra.mxu0 0
    %1161 = vmatprep.subr.bf16.mxu0 0
    %1162 = vmatpush1.bf16.xpose.msra.mxu0 0
    %1163 = vmatprep.subr.bf16.mxu0 0
    %1164 = vmatpush1.bf16.xpose.msra.mxu0 0
    %1165 = vmatprep.subr.bf16.mxu0 0
    %1166 = vmatpush1.bf16.xpose.msra.mxu0 0
    %1167 = vmatprep.subr.bf16.mxu0 0
    %1168 = vmatpush1.bf16.xpose.msra.mxu0 0
    %1169 = vmatprep.subr.bf16.mxu0 0
    %1170 = vmatpush1.bf16.xpose.msra.mxu0 0
    %1171 = vmatprep.subr.bf16.mxu0 0
    %1172 = vmatpush1.bf16.xpose.msra.mxu0 0
    %1173 = vmatprep.subr.bf16.mxu0 0
    %1174 = vmatpush1.bf16.xpose.msra.mxu0 0
    %1175 = vmatprep.subr.bf16.mxu0 0
    %1176 = vmatpush1.bf16.xpose.msra.mxu0 0
    %1177 = vmatprep.subr.bf16.mxu0 0
    %1178 = vmatpush1.bf16.xpose.msra.mxu0 0
    %1179 = vmatprep.subr.bf16.mxu0 0
    %1180 = vmatpush1.bf16.xpose.msra.mxu0 0
    %1181 = vmatprep.subr.bf16.mxu0 0
    %1182 = vmatpush1.bf16.xpose.msra.mxu0 0
    %1183 = vmatprep.subr.bf16.mxu0 0
    %1184 = vmatpush1.bf16.xpose.msra.mxu0 0
    %1185 = vmatprep.mubr.bf16.mxu0 0
    %1186 = vmatmul.mubr.bf16.gmra.mrb[0].mxu0 %v1148
    %v1187 = vpop.f32.mrb[0].mxu0
    %v1188 = vadd.f32 0.0, %v1187
    %v1189 = vpop.f32.mrb[0].mxu0
    %v1190 = vpop.f32.mrb[0].mxu0
    %v1191 = vpop.f32.mrb[0].mxu0
    %1192 = vdwg.mxu0
    %v1194 = vsel %vm686, %v473, 0
    %v1197 = vsel %vm686, %v569, 0
    %1199 = vmatprep.subr.bf16.mxu0 0
    %1200 = vmatpush1.bf16.xpose.msra.mxu0 %v1197
    %1201 = vmatprep.subr.bf16.mxu0 0
    %1202 = vmatpush1.bf16.xpose.msra.mxu0 0
    %1203 = vmatprep.subr.bf16.mxu0 0
    %1204 = vmatpush1.bf16.xpose.msra.mxu0 0
    %1205 = vmatprep.subr.bf16.mxu0 0
    %1206 = vmatpush1.bf16.xpose.msra.mxu0 0
    %1207 = vmatprep.subr.bf16.mxu0 0
    %1208 = vmatpush1.bf16.xpose.msra.mxu0 0
    %1209 = vmatprep.subr.bf16.mxu0 0
    %1210 = vmatpush1.bf16.xpose.msra.mxu0 0
    %1211 = vmatprep.subr.bf16.mxu0 0
    %1212 = vmatpush1.bf16.xpose.msra.mxu0 0
    %1213 = vmatprep.subr.bf16.mxu0 0
    %1214 = vmatpush1.bf16.xpose.msra.mxu0 0
    %1215 = vmatprep.subr.bf16.mxu0 0
    %1216 = vmatpush1.bf16.xpose.msra.mxu0 0
    %1217 = vmatprep.subr.bf16.mxu0 0
    %1218 = vmatpush1.bf16.xpose.msra.mxu0 0
    %1219 = vmatprep.subr.bf16.mxu0 0
    %1220 = vmatpush1.bf16.xpose.msra.mxu0 0
    %1221 = vmatprep.subr.bf16.mxu0 0
    %1222 = vmatpush1.bf16.xpose.msra.mxu0 0
    %1223 = vmatprep.subr.bf16.mxu0 0
    %1224 = vmatpush1.bf16.xpose.msra.mxu0 0
    %1225 = vmatprep.subr.bf16.mxu0 0
    %1226 = vmatpush1.bf16.xpose.msra.mxu0 0
    %1227 = vmatprep.subr.bf16.mxu0 0
    %1228 = vmatpush1.bf16.xpose.msra.mxu0 0
    %1229 = vmatprep.subr.bf16.mxu0 0
    %1230 = vmatpush1.bf16.xpose.msra.mxu0 0
    %1231 = vmatprep.mubr.bf16.mxu0 0
    %1232 = vmatmul.mubr.bf16.gmra.mrb[0].mxu0 %v1194
    %v1233 = vpop.f32.mrb[0].mxu0
    %v1234 = vadd.f32 0.0, %v1233
    %v1235 = vpop.f32.mrb[0].mxu0
    %v1236 = vpop.f32.mrb[0].mxu0
    %v1237 = vpop.f32.mrb[0].mxu0
    %1238 = vdwg.mxu0
    %v1240 = vsel %vm686, %v474, 0
    %v1243 = vsel %vm686, %v570, 0
    %1245 = vmatprep.subr.bf16.mxu0 0
    %1246 = vmatpush1.bf16.xpose.msra.mxu0 %v1243
    %1247 = vmatprep.subr.bf16.mxu0 0
    %1248 = vmatpush1.bf16.xpose.msra.mxu0 0
    %1249 = vmatprep.subr.bf16.mxu0 0
    %1250 = vmatpush1.bf16.xpose.msra.mxu0 0
    %1251 = vmatprep.subr.bf16.mxu0 0
    %1252 = vmatpush1.bf16.xpose.msra.mxu0 0
    %1253 = vmatprep.subr.bf16.mxu0 0
    %1254 = vmatpush1.bf16.xpose.msra.mxu0 0
    %1255 = vmatprep.subr.bf16.mxu0 0
    %1256 = vmatpush1.bf16.xpose.msra.mxu0 0
    %1257 = vmatprep.subr.bf16.mxu0 0
    %1258 = vmatpush1.bf16.xpose.msra.mxu0 0
    %1259 = vmatprep.subr.bf16.mxu0 0
    %1260 = vmatpush1.bf16.xpose.msra.mxu0 0
    %1261 = vmatprep.subr.bf16.mxu0 0
    %1262 = vmatpush1.bf16.xpose.msra.mxu0 0
    %1263 = vmatprep.subr.bf16.mxu0 0
    %1264 = vmatpush1.bf16.xpose.msra.mxu0 0
    %1265 = vmatprep.subr.bf16.mxu0 0
    %1266 = vmatpush1.bf16.xpose.msra.mxu0 0
    %1267 = vmatprep.subr.bf16.mxu0 0
    %1268 = vmatpush1.bf16.xpose.msra.mxu0 0
    %1269 = vmatprep.subr.bf16.mxu0 0
    %1270 = vmatpush1.bf16.xpose.msra.mxu0 0
    %1271 = vmatprep.subr.bf16.mxu0 0
    %1272 = vmatpush1.bf16.xpose.msra.mxu0 0
    %1273 = vmatprep.subr.bf16.mxu0 0
    %1274 = vmatpush1.bf16.xpose.msra.mxu0 0
    %1275 = vmatprep.subr.bf16.mxu0 0
    %1276 = vmatpush1.bf16.xpose.msra.mxu0 0
    %1277 = vmatprep.mubr.bf16.mxu0 0
    %1278 = vmatmul.mubr.bf16.gmra.mrb[0].mxu0 %v1240
    %v1279 = vpop.f32.mrb[0].mxu0
    %v1280 = vadd.f32 0.0, %v1279
    %v1281 = vpop.f32.mrb[0].mxu0
    %v1282 = vpop.f32.mrb[0].mxu0
    %v1283 = vpop.f32.mrb[0].mxu0
    %1284 = vdwg.mxu0
    %v1286 = vsel %vm686, %v475, 0
    %v1289 = vsel %vm686, %v571, 0
    %1291 = vmatprep.subr.bf16.mxu0 0
    %1292 = vmatpush1.bf16.xpose.msra.mxu0 %v1289
    %1293 = vmatprep.subr.bf16.mxu0 0
    %1294 = vmatpush1.bf16.xpose.msra.mxu0 0
    %1295 = vmatprep.subr.bf16.mxu0 0
    %1296 = vmatpush1.bf16.xpose.msra.mxu0 0
    %1297 = vmatprep.subr.bf16.mxu0 0
    %1298 = vmatpush1.bf16.xpose.msra.mxu0 0
    %1299 = vmatprep.subr.bf16.mxu0 0
    %1300 = vmatpush1.bf16.xpose.msra.mxu0 0
    %1301 = vmatprep.subr.bf16.mxu0 0
    %1302 = vmatpush1.bf16.xpose.msra.mxu0 0
    %1303 = vmatprep.subr.bf16.mxu0 0
    %1304 = vmatpush1.bf16.xpose.msra.mxu0 0
    %1305 = vmatprep.subr.bf16.mxu0 0
    %1306 = vmatpush1.bf16.xpose.msra.mxu0 0
    %1307 = vmatprep.subr.bf16.mxu0 0
    %1308 = vmatpush1.bf16.xpose.msra.mxu0 0
    %1309 = vmatprep.subr.bf16.mxu0 0
    %1310 = vmatpush1.bf16.xpose.msra.mxu0 0
    %1311 = vmatprep.subr.bf16.mxu0 0
    %1312 = vmatpush1.bf16.xpose.msra.mxu0 0
    %1313 = vmatprep.subr.bf16.mxu0 0
    %1314 = vmatpush1.bf16.xpose.msra.mxu0 0
    %1315 = vmatprep.subr.bf16.mxu0 0
    %1316 = vmatpush1.bf16.xpose.msra.mxu0 0
    %1317 = vmatprep.subr.bf16.mxu0 0
    %1318 = vmatpush1.bf16.xpose.msra.mxu0 0
    %1319 = vmatprep.subr.bf16.mxu0 0
    %1320 = vmatpush1.bf16.xpose.msra.mxu0 0
    %1321 = vmatprep.subr.bf16.mxu0 0
    %1322 = vmatpush1.bf16.xpose.msra.mxu0 0
    %1323 = vmatprep.mubr.bf16.mxu0 0
    %1324 = vmatmul.mubr.bf16.gmra.mrb[0].mxu0 %v1286
    %v1325 = vpop.f32.mrb[0].mxu0
    %v1326 = vadd.f32 0.0, %v1325
    %v1327 = vpop.f32.mrb[0].mxu0
    %v1328 = vpop.f32.mrb[0].mxu0
    %v1329 = vpop.f32.mrb[0].mxu0
    %1330 = vdwg.mxu0
    %v1332 = vsel %vm686, %v476, 0
    %v1335 = vsel %vm686, %v572, 0
    %1337 = vmatprep.subr.bf16.mxu0 0
    %1338 = vmatpush1.bf16.xpose.msra.mxu0 %v1335
    %1339 = vmatprep.subr.bf16.mxu0 0
    %1340 = vmatpush1.bf16.xpose.msra.mxu0 0
    %1341 = vmatprep.subr.bf16.mxu0 0
    %1342 = vmatpush1.bf16.xpose.msra.mxu0 0
    %1343 = vmatprep.subr.bf16.mxu0 0
    %1344 = vmatpush1.bf16.xpose.msra.mxu0 0
    %1345 = vmatprep.subr.bf16.mxu0 0
    %1346 = vmatpush1.bf16.xpose.msra.mxu0 0
    %1347 = vmatprep.subr.bf16.mxu0 0
    %1348 = vmatpush1.bf16.xpose.msra.mxu0 0
    %1349 = vmatprep.subr.bf16.mxu0 0
    %1350 = vmatpush1.bf16.xpose.msra.mxu0 0
    %1351 = vmatprep.subr.bf16.mxu0 0
    %1352 = vmatpush1.bf16.xpose.msra.mxu0 0
    %1353 = vmatprep.subr.bf16.mxu0 0
    %1354 = vmatpush1.bf16.xpose.msra.mxu0 0
    %1355 = vmatprep.subr.bf16.mxu0 0
    %1356 = vmatpush1.bf16.xpose.msra.mxu0 0
    %1357 = vmatprep.subr.bf16.mxu0 0
    %1358 = vmatpush1.bf16.xpose.msra.mxu0 0
    %1359 = vmatprep.subr.bf16.mxu0 0
    %1360 = vmatpush1.bf16.xpose.msra.mxu0 0
    %1361 = vmatprep.subr.bf16.mxu0 0
    %1362 = vmatpush1.bf16.xpose.msra.mxu0 0
    %1363 = vmatprep.subr.bf16.mxu0 0
    %1364 = vmatpush1.bf16.xpose.msra.mxu0 0
    %1365 = vmatprep.subr.bf16.mxu0 0
    %1366 = vmatpush1.bf16.xpose.msra.mxu0 0
    %1367 = vmatprep.subr.bf16.mxu0 0
    %1368 = vmatpush1.bf16.xpose.msra.mxu0 0
    %1369 = vmatprep.mubr.bf16.mxu0 0
    %1370 = vmatmul.mubr.bf16.gmra.mrb[0].mxu0 %v1332
    %v1371 = vpop.f32.mrb[0].mxu0
    %v1372 = vadd.f32 0.0, %v1371
    %v1373 = vpop.f32.mrb[0].mxu0
    %v1374 = vpop.f32.mrb[0].mxu0
    %v1375 = vpop.f32.mrb[0].mxu0
    %1376 = vdwg.mxu0
    %v1378 = vsel %vm686, %v477, 0
    %v1381 = vsel %vm686, %v573, 0
    %1383 = vmatprep.subr.bf16.mxu0 0
    %1384 = vmatpush1.bf16.xpose.msra.mxu0 %v1381
    %1385 = vmatprep.subr.bf16.mxu0 0
    %1386 = vmatpush1.bf16.xpose.msra.mxu0 0
    %1387 = vmatprep.subr.bf16.mxu0 0
    %1388 = vmatpush1.bf16.xpose.msra.mxu0 0
    %1389 = vmatprep.subr.bf16.mxu0 0
    %1390 = vmatpush1.bf16.xpose.msra.mxu0 0
    %1391 = vmatprep.subr.bf16.mxu0 0
    %1392 = vmatpush1.bf16.xpose.msra.mxu0 0
    %1393 = vmatprep.subr.bf16.mxu0 0
    %1394 = vmatpush1.bf16.xpose.msra.mxu0 0
    %1395 = vmatprep.subr.bf16.mxu0 0
    %1396 = vmatpush1.bf16.xpose.msra.mxu0 0
    %1397 = vmatprep.subr.bf16.mxu0 0
    %1398 = vmatpush1.bf16.xpose.msra.mxu0 0
    %1399 = vmatprep.subr.bf16.mxu0 0
    %1400 = vmatpush1.bf16.xpose.msra.mxu0 0
    %1401 = vmatprep.subr.bf16.mxu0 0
    %1402 = vmatpush1.bf16.xpose.msra.mxu0 0
    %1403 = vmatprep.subr.bf16.mxu0 0
    %1404 = vmatpush1.bf16.xpose.msra.mxu0 0
    %1405 = vmatprep.subr.bf16.mxu0 0
    %1406 = vmatpush1.bf16.xpose.msra.mxu0 0
    %1407 = vmatprep.subr.bf16.mxu0 0
    %1408 = vmatpush1.bf16.xpose.msra.mxu0 0
    %1409 = vmatprep.subr.bf16.mxu0 0
    %1410 = vmatpush1.bf16.xpose.msra.mxu0 0
    %1411 = vmatprep.subr.bf16.mxu0 0
    %1412 = vmatpush1.bf16.xpose.msra.mxu0 0
    %1413 = vmatprep.subr.bf16.mxu0 0
    %1414 = vmatpush1.bf16.xpose.msra.mxu0 0
    %1415 = vmatprep.mubr.bf16.mxu0 0
    %1416 = vmatmul.mubr.bf16.gmra.mrb[0].mxu0 %v1378
    %v1417 = vpop.f32.mrb[0].mxu0
    %v1418 = vadd.f32 0.0, %v1417
    %v1419 = vpop.f32.mrb[0].mxu0
    %v1420 = vpop.f32.mrb[0].mxu0
    %v1421 = vpop.f32.mrb[0].mxu0
    %1422 = vdwg.mxu0
    %1424 = vrot.lane.b32.xlu0 %v614, 64
    %v1425 = vpop.permute.xlu0 %1424
    %v1427 = vsel %vm686, %v1425, 0
    %1429 = vmatprep.subr.bf16.mxu0 0
    %1430 = vmatpush1.bf16.xpose.msra.mxu0 %v1427
    %1431 = vmatprep.subr.bf16.mxu0 0
    %1432 = vmatpush1.bf16.xpose.msra.mxu0 0
    %1433 = vmatprep.subr.bf16.mxu0 0
    %1434 = vmatpush1.bf16.xpose.msra.mxu0 0
    %1435 = vmatprep.subr.bf16.mxu0 0
    %1436 = vmatpush1.bf16.xpose.msra.mxu0 0
    %1437 = vmatprep.subr.bf16.mxu0 0
    %1438 = vmatpush1.bf16.xpose.msra.mxu0 0
    %1439 = vmatprep.subr.bf16.mxu0 0
    %1440 = vmatpush1.bf16.xpose.msra.mxu0 0
    %1441 = vmatprep.subr.bf16.mxu0 0
    %1442 = vmatpush1.bf16.xpose.msra.mxu0 0
    %1443 = vmatprep.subr.bf16.mxu0 0
    %1444 = vmatpush1.bf16.xpose.msra.mxu0 0
    %1445 = vmatprep.subr.bf16.mxu0 0
    %1446 = vmatpush1.bf16.xpose.msra.mxu0 0
    %1447 = vmatprep.subr.bf16.mxu0 0
    %1448 = vmatpush1.bf16.xpose.msra.mxu0 0
    %1449 = vmatprep.subr.bf16.mxu0 0
    %1450 = vmatpush1.bf16.xpose.msra.mxu0 0
    %1451 = vmatprep.subr.bf16.mxu0 0
    %1452 = vmatpush1.bf16.xpose.msra.mxu0 0
    %1453 = vmatprep.subr.bf16.mxu0 0
    %1454 = vmatpush1.bf16.xpose.msra.mxu0 0
    %1455 = vmatprep.subr.bf16.mxu0 0
    %1456 = vmatpush1.bf16.xpose.msra.mxu0 0
    %1457 = vmatprep.subr.bf16.mxu0 0
    %1458 = vmatpush1.bf16.xpose.msra.mxu0 0
    %1459 = vmatprep.subr.bf16.mxu0 0
    %1460 = vmatpush1.bf16.xpose.msra.mxu0 0
    %1461 = vmatprep.mubr.bf16.mxu0 0
    %1462 = vmatmul.mubr.bf16.gmra.mrb[0].mxu0 %v688
    %v1463 = vpop.f32.mrb[0].mxu0
    %v1464 = vadd.f32 0.0, %v1463
    %v1465 = vpop.f32.mrb[0].mxu0
    %v1466 = vpop.f32.mrb[0].mxu0
    %v1467 = vpop.f32.mrb[0].mxu0
    %1468 = vdwg.mxu0
    %1470 = vrot.lane.b32.xlu0 %v615, 64
    %v1471 = vpop.permute.xlu0 %1470
    %v1473 = vsel %vm686, %v1471, 0
    %1475 = vmatprep.subr.bf16.mxu0 0
    %1476 = vmatpush1.bf16.xpose.msra.mxu0 %v1473
    %1477 = vmatprep.subr.bf16.mxu0 0
    %1478 = vmatpush1.bf16.xpose.msra.mxu0 0
    %1479 = vmatprep.subr.bf16.mxu0 0
    %1480 = vmatpush1.bf16.xpose.msra.mxu0 0
    %1481 = vmatprep.subr.bf16.mxu0 0
    %1482 = vmatpush1.bf16.xpose.msra.mxu0 0
    %1483 = vmatprep.subr.bf16.mxu0 0
    %1484 = vmatpush1.bf16.xpose.msra.mxu0 0
    %1485 = vmatprep.subr.bf16.mxu0 0
    %1486 = vmatpush1.bf16.xpose.msra.mxu0 0
    %1487 = vmatprep.subr.bf16.mxu0 0
    %1488 = vmatpush1.bf16.xpose.msra.mxu0 0
    %1489 = vmatprep.subr.bf16.mxu0 0
    %1490 = vmatpush1.bf16.xpose.msra.mxu0 0
    %1491 = vmatprep.subr.bf16.mxu0 0
    %1492 = vmatpush1.bf16.xpose.msra.mxu0 0
    %1493 = vmatprep.subr.bf16.mxu0 0
    %1494 = vmatpush1.bf16.xpose.msra.mxu0 0
    %1495 = vmatprep.subr.bf16.mxu0 0
    %1496 = vmatpush1.bf16.xpose.msra.mxu0 0
    %1497 = vmatprep.subr.bf16.mxu0 0
    %1498 = vmatpush1.bf16.xpose.msra.mxu0 0
    %1499 = vmatprep.subr.bf16.mxu0 0
    %1500 = vmatpush1.bf16.xpose.msra.mxu0 0
    %1501 = vmatprep.subr.bf16.mxu0 0
    %1502 = vmatpush1.bf16.xpose.msra.mxu0 0
    %1503 = vmatprep.subr.bf16.mxu0 0
    %1504 = vmatpush1.bf16.xpose.msra.mxu0 0
    %1505 = vmatprep.subr.bf16.mxu0 0
    %1506 = vmatpush1.bf16.xpose.msra.mxu0 0
    %1507 = vmatprep.mubr.bf16.mxu0 0
    %1508 = vmatmul.mubr.bf16.gmra.mrb[0].mxu0 %v734
    %v1509 = vpop.f32.mrb[0].mxu0
    %v1510 = vadd.f32 0.0, %v1509
    %v1511 = vpop.f32.mrb[0].mxu0
    %v1512 = vpop.f32.mrb[0].mxu0
    %v1513 = vpop.f32.mrb[0].mxu0
    %1514 = vdwg.mxu0
    %1516 = vrot.lane.b32.xlu0 %v616, 64
    %v1517 = vpop.permute.xlu0 %1516
    %v1519 = vsel %vm686, %v1517, 0
    %1521 = vmatprep.subr.bf16.mxu0 0
    %1522 = vmatpush1.bf16.xpose.msra.mxu0 %v1519
    %1523 = vmatprep.subr.bf16.mxu0 0
    %1524 = vmatpush1.bf16.xpose.msra.mxu0 0
    %1525 = vmatprep.subr.bf16.mxu0 0
    %1526 = vmatpush1.bf16.xpose.msra.mxu0 0
    %1527 = vmatprep.subr.bf16.mxu0 0
    %1528 = vmatpush1.bf16.xpose.msra.mxu0 0
    %1529 = vmatprep.subr.bf16.mxu0 0
    %1530 = vmatpush1.bf16.xpose.msra.mxu0 0
    %1531 = vmatprep.subr.bf16.mxu0 0
    %1532 = vmatpush1.bf16.xpose.msra.mxu0 0
    %1533 = vmatprep.subr.bf16.mxu0 0
    %1534 = vmatpush1.bf16.xpose.msra.mxu0 0
    %1535 = vmatprep.subr.bf16.mxu0 0
    %1536 = vmatpush1.bf16.xpose.msra.mxu0 0
    %1537 = vmatprep.subr.bf16.mxu0 0
    %1538 = vmatpush1.bf16.xpose.msra.mxu0 0
    %1539 = vmatprep.subr.bf16.mxu0 0
    %1540 = vmatpush1.bf16.xpose.msra.mxu0 0
    %1541 = vmatprep.subr.bf16.mxu0 0
    %1542 = vmatpush1.bf16.xpose.msra.mxu0 0
    %1543 = vmatprep.subr.bf16.mxu0 0
    %1544 = vmatpush1.bf16.xpose.msra.mxu0 0
    %1545 = vmatprep.subr.bf16.mxu0 0
    %1546 = vmatpush1.bf16.xpose.msra.mxu0 0
    %1547 = vmatprep.subr.bf16.mxu0 0
    %1548 = vmatpush1.bf16.xpose.msra.mxu0 0
    %1549 = vmatprep.subr.bf16.mxu0 0
    %1550 = vmatpush1.bf16.xpose.msra.mxu0 0
    %1551 = vmatprep.subr.bf16.mxu0 0
    %1552 = vmatpush1.bf16.xpose.msra.mxu0 0
    %1553 = vmatprep.mubr.bf16.mxu0 0
    %1554 = vmatmul.mubr.bf16.gmra.mrb[0].mxu0 %v780
    %v1555 = vpop.f32.mrb[0].mxu0
    %v1556 = vadd.f32 0.0, %v1555
    %v1557 = vpop.f32.mrb[0].mxu0
    %v1558 = vpop.f32.mrb[0].mxu0
    %v1559 = vpop.f32.mrb[0].mxu0
    %1560 = vdwg.mxu0
    %1562 = vrot.lane.b32.xlu0 %v617, 64
    %v1563 = vpop.permute.xlu0 %1562
    %v1565 = vsel %vm686, %v1563, 0
    %1567 = vmatprep.subr.bf16.mxu0 0
    %1568 = vmatpush1.bf16.xpose.msra.mxu0 %v1565
    %1569 = vmatprep.subr.bf16.mxu0 0
    %1570 = vmatpush1.bf16.xpose.msra.mxu0 0
    %1571 = vmatprep.subr.bf16.mxu0 0
    %1572 = vmatpush1.bf16.xpose.msra.mxu0 0
    %1573 = vmatprep.subr.bf16.mxu0 0
    %1574 = vmatpush1.bf16.xpose.msra.mxu0 0
    %1575 = vmatprep.subr.bf16.mxu0 0
    %1576 = vmatpush1.bf16.xpose.msra.mxu0 0
    %1577 = vmatprep.subr.bf16.mxu0 0
    %1578 = vmatpush1.bf16.xpose.msra.mxu0 0
    %1579 = vmatprep.subr.bf16.mxu0 0
    %1580 = vmatpush1.bf16.xpose.msra.mxu0 0
    %1581 = vmatprep.subr.bf16.mxu0 0
    %1582 = vmatpush1.bf16.xpose.msra.mxu0 0
    %1583 = vmatprep.subr.bf16.mxu0 0
    %1584 = vmatpush1.bf16.xpose.msra.mxu0 0
    %1585 = vmatprep.subr.bf16.mxu0 0
    %1586 = vmatpush1.bf16.xpose.msra.mxu0 0
    %1587 = vmatprep.subr.bf16.mxu0 0
    %1588 = vmatpush1.bf16.xpose.msra.mxu0 0
    %1589 = vmatprep.subr.bf16.mxu0 0
    %1590 = vmatpush1.bf16.xpose.msra.mxu0 0
    %1591 = vmatprep.subr.bf16.mxu0 0
    %1592 = vmatpush1.bf16.xpose.msra.mxu0 0
    %1593 = vmatprep.subr.bf16.mxu0 0
    %1594 = vmatpush1.bf16.xpose.msra.mxu0 0
    %1595 = vmatprep.subr.bf16.mxu0 0
    %1596 = vmatpush1.bf16.xpose.msra.mxu0 0
    %1597 = vmatprep.subr.bf16.mxu0 0
    %1598 = vmatpush1.bf16.xpose.msra.mxu0 0
    %1599 = vmatprep.mubr.bf16.mxu0 0
    %1600 = vmatmul.mubr.bf16.gmra.mrb[0].mxu0 %v826
    %v1601 = vpop.f32.mrb[0].mxu0
    %v1602 = vadd.f32 0.0, %v1601
    %v1603 = vpop.f32.mrb[0].mxu0
    %v1604 = vpop.f32.mrb[0].mxu0
    %v1605 = vpop.f32.mrb[0].mxu0
    %1606 = vdwg.mxu0
    %1608 = vrot.lane.b32.xlu0 %v618, 64
    %v1609 = vpop.permute.xlu0 %1608
    %v1611 = vsel %vm686, %v1609, 0
    %1613 = vmatprep.subr.bf16.mxu0 0
    %1614 = vmatpush1.bf16.xpose.msra.mxu0 %v1611
    %1615 = vmatprep.subr.bf16.mxu0 0
    %1616 = vmatpush1.bf16.xpose.msra.mxu0 0
    %1617 = vmatprep.subr.bf16.mxu0 0
    %1618 = vmatpush1.bf16.xpose.msra.mxu0 0
    %1619 = vmatprep.subr.bf16.mxu0 0
    %1620 = vmatpush1.bf16.xpose.msra.mxu0 0
    %1621 = vmatprep.subr.bf16.mxu0 0
    %1622 = vmatpush1.bf16.xpose.msra.mxu0 0
    %1623 = vmatprep.subr.bf16.mxu0 0
    %1624 = vmatpush1.bf16.xpose.msra.mxu0 0
    %1625 = vmatprep.subr.bf16.mxu0 0
    %1626 = vmatpush1.bf16.xpose.msra.mxu0 0
    %1627 = vmatprep.subr.bf16.mxu0 0
    %1628 = vmatpush1.bf16.xpose.msra.mxu0 0
    %1629 = vmatprep.subr.bf16.mxu0 0
    %1630 = vmatpush1.bf16.xpose.msra.mxu0 0
    %1631 = vmatprep.subr.bf16.mxu0 0
    %1632 = vmatpush1.bf16.xpose.msra.mxu0 0
    %1633 = vmatprep.subr.bf16.mxu0 0
    %1634 = vmatpush1.bf16.xpose.msra.mxu0 0
    %1635 = vmatprep.subr.bf16.mxu0 0
    %1636 = vmatpush1.bf16.xpose.msra.mxu0 0
    %1637 = vmatprep.subr.bf16.mxu0 0
    %1638 = vmatpush1.bf16.xpose.msra.mxu0 0
    %1639 = vmatprep.subr.bf16.mxu0 0
    %1640 = vmatpush1.bf16.xpose.msra.mxu0 0
    %1641 = vmatprep.subr.bf16.mxu0 0
    %1642 = vmatpush1.bf16.xpose.msra.mxu0 0
    %1643 = vmatprep.subr.bf16.mxu0 0
    %1644 = vmatpush1.bf16.xpose.msra.mxu0 0
    %1645 = vmatprep.mubr.bf16.mxu0 0
    %1646 = vmatmul.mubr.bf16.gmra.mrb[0].mxu0 %v872
    %v1647 = vpop.f32.mrb[0].mxu0
    %v1648 = vadd.f32 0.0, %v1647
    %v1649 = vpop.f32.mrb[0].mxu0
    %v1650 = vpop.f32.mrb[0].mxu0
    %v1651 = vpop.f32.mrb[0].mxu0
    %1652 = vdwg.mxu0
    %1654 = vrot.lane.b32.xlu0 %v619, 64
    %v1655 = vpop.permute.xlu0 %1654
    %v1657 = vsel %vm686, %v1655, 0
    %1659 = vmatprep.subr.bf16.mxu0 0
    %1660 = vmatpush1.bf16.xpose.msra.mxu0 %v1657
    %1661 = vmatprep.subr.bf16.mxu0 0
    %1662 = vmatpush1.bf16.xpose.msra.mxu0 0
    %1663 = vmatprep.subr.bf16.mxu0 0
    %1664 = vmatpush1.bf16.xpose.msra.mxu0 0
    %1665 = vmatprep.subr.bf16.mxu0 0
    %1666 = vmatpush1.bf16.xpose.msra.mxu0 0
    %1667 = vmatprep.subr.bf16.mxu0 0
    %1668 = vmatpush1.bf16.xpose.msra.mxu0 0
    %1669 = vmatprep.subr.bf16.mxu0 0
    %1670 = vmatpush1.bf16.xpose.msra.mxu0 0
    %1671 = vmatprep.subr.bf16.mxu0 0
    %1672 = vmatpush1.bf16.xpose.msra.mxu0 0
    %1673 = vmatprep.subr.bf16.mxu0 0
    %1674 = vmatpush1.bf16.xpose.msra.mxu0 0
    %1675 = vmatprep.subr.bf16.mxu0 0
    %1676 = vmatpush1.bf16.xpose.msra.mxu0 0
    %1677 = vmatprep.subr.bf16.mxu0 0
    %1678 = vmatpush1.bf16.xpose.msra.mxu0 0
    %1679 = vmatprep.subr.bf16.mxu0 0
    %1680 = vmatpush1.bf16.xpose.msra.mxu0 0
    %1681 = vmatprep.subr.bf16.mxu0 0
    %1682 = vmatpush1.bf16.xpose.msra.mxu0 0
    %1683 = vmatprep.subr.bf16.mxu0 0
    %1684 = vmatpush1.bf16.xpose.msra.mxu0 0
    %1685 = vmatprep.subr.bf16.mxu0 0
    %1686 = vmatpush1.bf16.xpose.msra.mxu0 0
    %1687 = vmatprep.subr.bf16.mxu0 0
    %1688 = vmatpush1.bf16.xpose.msra.mxu0 0
    %1689 = vmatprep.subr.bf16.mxu0 0
    %1690 = vmatpush1.bf16.xpose.msra.mxu0 0
    %1691 = vmatprep.mubr.bf16.mxu0 0
    %1692 = vmatmul.mubr.bf16.gmra.mrb[0].mxu0 %v918
    %v1693 = vpop.f32.mrb[0].mxu0
    %v1694 = vadd.f32 0.0, %v1693
    %v1695 = vpop.f32.mrb[0].mxu0
    %v1696 = vpop.f32.mrb[0].mxu0
    %v1697 = vpop.f32.mrb[0].mxu0
    %1698 = vdwg.mxu0
    %1700 = vrot.lane.b32.xlu0 %v620, 64
    %v1701 = vpop.permute.xlu0 %1700
    %v1703 = vsel %vm686, %v1701, 0
    %1705 = vmatprep.subr.bf16.mxu0 0
    %1706 = vmatpush1.bf16.xpose.msra.mxu0 %v1703
    %1707 = vmatprep.subr.bf16.mxu0 0
    %1708 = vmatpush1.bf16.xpose.msra.mxu0 0
    %1709 = vmatprep.subr.bf16.mxu0 0
    %1710 = vmatpush1.bf16.xpose.msra.mxu0 0
    %1711 = vmatprep.subr.bf16.mxu0 0
    %1712 = vmatpush1.bf16.xpose.msra.mxu0 0
    %1713 = vmatprep.subr.bf16.mxu0 0
    %1714 = vmatpush1.bf16.xpose.msra.mxu0 0
    %1715 = vmatprep.subr.bf16.mxu0 0
    %1716 = vmatpush1.bf16.xpose.msra.mxu0 0
    %1717 = vmatprep.subr.bf16.mxu0 0
    %1718 = vmatpush1.bf16.xpose.msra.mxu0 0
    %1719 = vmatprep.subr.bf16.mxu0 0
    %1720 = vmatpush1.bf16.xpose.msra.mxu0 0
    %1721 = vmatprep.subr.bf16.mxu0 0
    %1722 = vmatpush1.bf16.xpose.msra.mxu0 0
    %1723 = vmatprep.subr.bf16.mxu0 0
    %1724 = vmatpush1.bf16.xpose.msra.mxu0 0
    %1725 = vmatprep.subr.bf16.mxu0 0
    %1726 = vmatpush1.bf16.xpose.msra.mxu0 0
    %1727 = vmatprep.subr.bf16.mxu0 0
    %1728 = vmatpush1.bf16.xpose.msra.mxu0 0
    %1729 = vmatprep.subr.bf16.mxu0 0
    %1730 = vmatpush1.bf16.xpose.msra.mxu0 0
    %1731 = vmatprep.subr.bf16.mxu0 0
    %1732 = vmatpush1.bf16.xpose.msra.mxu0 0
    %1733 = vmatprep.subr.bf16.mxu0 0
    %1734 = vmatpush1.bf16.xpose.msra.mxu0 0
    %1735 = vmatprep.subr.bf16.mxu0 0
    %1736 = vmatpush1.bf16.xpose.msra.mxu0 0
    %1737 = vmatprep.mubr.bf16.mxu0 0
    %1738 = vmatmul.mubr.bf16.gmra.mrb[0].mxu0 %v964
    %v1739 = vpop.f32.mrb[0].mxu0
    %v1740 = vadd.f32 0.0, %v1739
    %v1741 = vpop.f32.mrb[0].mxu0
    %v1742 = vpop.f32.mrb[0].mxu0
    %v1743 = vpop.f32.mrb[0].mxu0
    %1744 = vdwg.mxu0
    %1746 = vrot.lane.b32.xlu0 %v621, 64
    %v1747 = vpop.permute.xlu0 %1746
    %v1749 = vsel %vm686, %v1747, 0
    %1751 = vmatprep.subr.bf16.mxu0 0
    %1752 = vmatpush1.bf16.xpose.msra.mxu0 %v1749
    %1753 = vmatprep.subr.bf16.mxu0 0
    %1754 = vmatpush1.bf16.xpose.msra.mxu0 0
    %1755 = vmatprep.subr.bf16.mxu0 0
    %1756 = vmatpush1.bf16.xpose.msra.mxu0 0
    %1757 = vmatprep.subr.bf16.mxu0 0
    %1758 = vmatpush1.bf16.xpose.msra.mxu0 0
    %1759 = vmatprep.subr.bf16.mxu0 0
    %1760 = vmatpush1.bf16.xpose.msra.mxu0 0
    %1761 = vmatprep.subr.bf16.mxu0 0
    %1762 = vmatpush1.bf16.xpose.msra.mxu0 0
    %1763 = vmatprep.subr.bf16.mxu0 0
    %1764 = vmatpush1.bf16.xpose.msra.mxu0 0
    %1765 = vmatprep.subr.bf16.mxu0 0
    %1766 = vmatpush1.bf16.xpose.msra.mxu0 0
    %1767 = vmatprep.subr.bf16.mxu0 0
    %1768 = vmatpush1.bf16.xpose.msra.mxu0 0
    %1769 = vmatprep.subr.bf16.mxu0 0
    %1770 = vmatpush1.bf16.xpose.msra.mxu0 0
    %1771 = vmatprep.subr.bf16.mxu0 0
    %1772 = vmatpush1.bf16.xpose.msra.mxu0 0
    %1773 = vmatprep.subr.bf16.mxu0 0
    %1774 = vmatpush1.bf16.xpose.msra.mxu0 0
    %1775 = vmatprep.subr.bf16.mxu0 0
    %1776 = vmatpush1.bf16.xpose.msra.mxu0 0
    %1777 = vmatprep.subr.bf16.mxu0 0
    %1778 = vmatpush1.bf16.xpose.msra.mxu0 0
    %1779 = vmatprep.subr.bf16.mxu0 0
    %1780 = vmatpush1.bf16.xpose.msra.mxu0 0
    %1781 = vmatprep.subr.bf16.mxu0 0
    %1782 = vmatpush1.bf16.xpose.msra.mxu0 0
    %1783 = vmatprep.mubr.bf16.mxu0 0
    %1784 = vmatmul.mubr.bf16.gmra.mrb[0].mxu0 %v1010
    %v1785 = vpop.f32.mrb[0].mxu0
    %v1786 = vadd.f32 0.0, %v1785
    %v1787 = vpop.f32.mrb[0].mxu0
    %v1788 = vpop.f32.mrb[0].mxu0
    %v1789 = vpop.f32.mrb[0].mxu0
    %1790 = vdwg.mxu0
    %1792 = vrot.lane.b32.xlu0 %v622, 64
    %v1793 = vpop.permute.xlu0 %1792
    %v1795 = vsel %vm686, %v1793, 0
    %1797 = vmatprep.subr.bf16.mxu0 0
    %1798 = vmatpush1.bf16.xpose.msra.mxu0 %v1795
    %1799 = vmatprep.subr.bf16.mxu0 0
    %1800 = vmatpush1.bf16.xpose.msra.mxu0 0
    %1801 = vmatprep.subr.bf16.mxu0 0
    %1802 = vmatpush1.bf16.xpose.msra.mxu0 0
    %1803 = vmatprep.subr.bf16.mxu0 0
    %1804 = vmatpush1.bf16.xpose.msra.mxu0 0
    %1805 = vmatprep.subr.bf16.mxu0 0
    %1806 = vmatpush1.bf16.xpose.msra.mxu0 0
    %1807 = vmatprep.subr.bf16.mxu0 0
    %1808 = vmatpush1.bf16.xpose.msra.mxu0 0
    %1809 = vmatprep.subr.bf16.mxu0 0
    %1810 = vmatpush1.bf16.xpose.msra.mxu0 0
    %1811 = vmatprep.subr.bf16.mxu0 0
    %1812 = vmatpush1.bf16.xpose.msra.mxu0 0
    %1813 = vmatprep.subr.bf16.mxu0 0
    %1814 = vmatpush1.bf16.xpose.msra.mxu0 0
    %1815 = vmatprep.subr.bf16.mxu0 0
    %1816 = vmatpush1.bf16.xpose.msra.mxu0 0
    %1817 = vmatprep.subr.bf16.mxu0 0
    %1818 = vmatpush1.bf16.xpose.msra.mxu0 0
    %1819 = vmatprep.subr.bf16.mxu0 0
    %1820 = vmatpush1.bf16.xpose.msra.mxu0 0
    %1821 = vmatprep.subr.bf16.mxu0 0
    %1822 = vmatpush1.bf16.xpose.msra.mxu0 0
    %1823 = vmatprep.subr.bf16.mxu0 0
    %1824 = vmatpush1.bf16.xpose.msra.mxu0 0
    %1825 = vmatprep.subr.bf16.mxu0 0
    %1826 = vmatpush1.bf16.xpose.msra.mxu0 0
    %1827 = vmatprep.subr.bf16.mxu0 0
    %1828 = vmatpush1.bf16.xpose.msra.mxu0 0
    %1829 = vmatprep.mubr.bf16.mxu0 0
    %1830 = vmatmul.mubr.bf16.gmra.mrb[0].mxu0 %v1056
    %v1831 = vpop.f32.mrb[0].mxu0
    %v1832 = vadd.f32 0.0, %v1831
    %v1833 = vpop.f32.mrb[0].mxu0
    %v1834 = vpop.f32.mrb[0].mxu0
    %v1835 = vpop.f32.mrb[0].mxu0
    %1836 = vdwg.mxu0
    %1838 = vrot.lane.b32.xlu0 %v623, 64
    %v1839 = vpop.permute.xlu0 %1838
    %v1841 = vsel %vm686, %v1839, 0
    %1843 = vmatprep.subr.bf16.mxu0 0
    %1844 = vmatpush1.bf16.xpose.msra.mxu0 %v1841
    %1845 = vmatprep.subr.bf16.mxu0 0
    %1846 = vmatpush1.bf16.xpose.msra.mxu0 0
    %1847 = vmatprep.subr.bf16.mxu0 0
    %1848 = vmatpush1.bf16.xpose.msra.mxu0 0
    %1849 = vmatprep.subr.bf16.mxu0 0
    %1850 = vmatpush1.bf16.xpose.msra.mxu0 0
    %1851 = vmatprep.subr.bf16.mxu0 0
    %1852 = vmatpush1.bf16.xpose.msra.mxu0 0
    %1853 = vmatprep.subr.bf16.mxu0 0
    %1854 = vmatpush1.bf16.xpose.msra.mxu0 0
    %1855 = vmatprep.subr.bf16.mxu0 0
    %1856 = vmatpush1.bf16.xpose.msra.mxu0 0
    %1857 = vmatprep.subr.bf16.mxu0 0
    %1858 = vmatpush1.bf16.xpose.msra.mxu0 0
    %1859 = vmatprep.subr.bf16.mxu0 0
    %1860 = vmatpush1.bf16.xpose.msra.mxu0 0
    %1861 = vmatprep.subr.bf16.mxu0 0
    %1862 = vmatpush1.bf16.xpose.msra.mxu0 0
    %1863 = vmatprep.subr.bf16.mxu0 0
    %1864 = vmatpush1.bf16.xpose.msra.mxu0 0
    %1865 = vmatprep.subr.bf16.mxu0 0
    %1866 = vmatpush1.bf16.xpose.msra.mxu0 0
    %1867 = vmatprep.subr.bf16.mxu0 0
    %1868 = vmatpush1.bf16.xpose.msra.mxu0 0
    %1869 = vmatprep.subr.bf16.mxu0 0
    %1870 = vmatpush1.bf16.xpose.msra.mxu0 0
    %1871 = vmatprep.subr.bf16.mxu0 0
    %1872 = vmatpush1.bf16.xpose.msra.mxu0 0
    %1873 = vmatprep.subr.bf16.mxu0 0
    %1874 = vmatpush1.bf16.xpose.msra.mxu0 0
    %1875 = vmatprep.mubr.bf16.mxu0 0
    %1876 = vmatmul.mubr.bf16.gmra.mrb[0].mxu0 %v1102
    %v1877 = vpop.f32.mrb[0].mxu0
    %v1878 = vadd.f32 0.0, %v1877
    %v1879 = vpop.f32.mrb[0].mxu0
    %v1880 = vpop.f32.mrb[0].mxu0
    %v1881 = vpop.f32.mrb[0].mxu0
    %1882 = vdwg.mxu0
    %1884 = vrot.lane.b32.xlu0 %v624, 64
    %v1885 = vpop.permute.xlu0 %1884
    %v1887 = vsel %vm686, %v1885, 0
    %1889 = vmatprep.subr.bf16.mxu0 0
    %1890 = vmatpush1.bf16.xpose.msra.mxu0 %v1887
    %1891 = vmatprep.subr.bf16.mxu0 0
    %1892 = vmatpush1.bf16.xpose.msra.mxu0 0
    %1893 = vmatprep.subr.bf16.mxu0 0
    %1894 = vmatpush1.bf16.xpose.msra.mxu0 0
    %1895 = vmatprep.subr.bf16.mxu0 0
    %1896 = vmatpush1.bf16.xpose.msra.mxu0 0
    %1897 = vmatprep.subr.bf16.mxu0 0
    %1898 = vmatpush1.bf16.xpose.msra.mxu0 0
    %1899 = vmatprep.subr.bf16.mxu0 0
    %1900 = vmatpush1.bf16.xpose.msra.mxu0 0
    %1901 = vmatprep.subr.bf16.mxu0 0
    %1902 = vmatpush1.bf16.xpose.msra.mxu0 0
    %1903 = vmatprep.subr.bf16.mxu0 0
    %1904 = vmatpush1.bf16.xpose.msra.mxu0 0
    %1905 = vmatprep.subr.bf16.mxu0 0
    %1906 = vmatpush1.bf16.xpose.msra.mxu0 0
    %1907 = vmatprep.subr.bf16.mxu0 0
    %1908 = vmatpush1.bf16.xpose.msra.mxu0 0
    %1909 = vmatprep.subr.bf16.mxu0 0
    %1910 = vmatpush1.bf16.xpose.msra.mxu0 0
    %1911 = vmatprep.subr.bf16.mxu0 0
    %1912 = vmatpush1.bf16.xpose.msra.mxu0 0
    %1913 = vmatprep.subr.bf16.mxu0 0
    %1914 = vmatpush1.bf16.xpose.msra.mxu0 0
    %1915 = vmatprep.subr.bf16.mxu0 0
    %1916 = vmatpush1.bf16.xpose.msra.mxu0 0
    %1917 = vmatprep.subr.bf16.mxu0 0
    %1918 = vmatpush1.bf16.xpose.msra.mxu0 0
    %1919 = vmatprep.subr.bf16.mxu0 0
    %1920 = vmatpush1.bf16.xpose.msra.mxu0 0
    %1921 = vmatprep.mubr.bf16.mxu0 0
    %1922 = vmatmul.mubr.bf16.gmra.mrb[0].mxu0 %v1148
    %v1923 = vpop.f32.mrb[0].mxu0
    %v1924 = vadd.f32 0.0, %v1923
    %v1925 = vpop.f32.mrb[0].mxu0
    %v1926 = vpop.f32.mrb[0].mxu0
    %v1927 = vpop.f32.mrb[0].mxu0
    %1928 = vdwg.mxu0
    %1930 = vrot.lane.b32.xlu0 %v625, 64
    %v1931 = vpop.permute.xlu0 %1930
    %v1933 = vsel %vm686, %v1931, 0
    %1935 = vmatprep.subr.bf16.mxu0 0
    %1936 = vmatpush1.bf16.xpose.msra.mxu0 %v1933
    %1937 = vmatprep.subr.bf16.mxu0 0
    %1938 = vmatpush1.bf16.xpose.msra.mxu0 0
    %1939 = vmatprep.subr.bf16.mxu0 0
    %1940 = vmatpush1.bf16.xpose.msra.mxu0 0
    %1941 = vmatprep.subr.bf16.mxu0 0
    %1942 = vmatpush1.bf16.xpose.msra.mxu0 0
    %1943 = vmatprep.subr.bf16.mxu0 0
    %1944 = vmatpush1.bf16.xpose.msra.mxu0 0
    %1945 = vmatprep.subr.bf16.mxu0 0
    %1946 = vmatpush1.bf16.xpose.msra.mxu0 0
    %1947 = vmatprep.subr.bf16.mxu0 0
    %1948 = vmatpush1.bf16.xpose.msra.mxu0 0
    %1949 = vmatprep.subr.bf16.mxu0 0
    %1950 = vmatpush1.bf16.xpose.msra.mxu0 0
    %1951 = vmatprep.subr.bf16.mxu0 0
    %1952 = vmatpush1.bf16.xpose.msra.mxu0 0
    %1953 = vmatprep.subr.bf16.mxu0 0
    %1954 = vmatpush1.bf16.xpose.msra.mxu0 0
    %1955 = vmatprep.subr.bf16.mxu0 0
    %1956 = vmatpush1.bf16.xpose.msra.mxu0 0
    %1957 = vmatprep.subr.bf16.mxu0 0
    %1958 = vmatpush1.bf16.xpose.msra.mxu0 0
    %1959 = vmatprep.subr.bf16.mxu0 0
    %1960 = vmatpush1.bf16.xpose.msra.mxu0 0
    %1961 = vmatprep.subr.bf16.mxu0 0
    %1962 = vmatpush1.bf16.xpose.msra.mxu0 0
    %1963 = vmatprep.subr.bf16.mxu0 0
    %1964 = vmatpush1.bf16.xpose.msra.mxu0 0
    %1965 = vmatprep.subr.bf16.mxu0 0
    %1966 = vmatpush1.bf16.xpose.msra.mxu0 0
    %1967 = vmatprep.mubr.bf16.mxu0 0
    %1968 = vmatmul.mubr.bf16.gmra.mrb[0].mxu0 %v1194
    %v1969 = vpop.f32.mrb[0].mxu0
    %v1970 = vadd.f32 0.0, %v1969
    %v1971 = vpop.f32.mrb[0].mxu0
    %v1972 = vpop.f32.mrb[0].mxu0
    %v1973 = vpop.f32.mrb[0].mxu0
    %1974 = vdwg.mxu0
    %1976 = vrot.lane.b32.xlu0 %v626, 64
    %v1977 = vpop.permute.xlu0 %1976
    %v1979 = vsel %vm686, %v1977, 0
    %1981 = vmatprep.subr.bf16.mxu0 0
    %1982 = vmatpush1.bf16.xpose.msra.mxu0 %v1979
    %1983 = vmatprep.subr.bf16.mxu0 0
    %1984 = vmatpush1.bf16.xpose.msra.mxu0 0
    %1985 = vmatprep.subr.bf16.mxu0 0
    %1986 = vmatpush1.bf16.xpose.msra.mxu0 0
    %1987 = vmatprep.subr.bf16.mxu0 0
    %1988 = vmatpush1.bf16.xpose.msra.mxu0 0
    %1989 = vmatprep.subr.bf16.mxu0 0
    %1990 = vmatpush1.bf16.xpose.msra.mxu0 0
    %1991 = vmatprep.subr.bf16.mxu0 0
    %1992 = vmatpush1.bf16.xpose.msra.mxu0 0
    %1993 = vmatprep.subr.bf16.mxu0 0
    %1994 = vmatpush1.bf16.xpose.msra.mxu0 0
    %1995 = vmatprep.subr.bf16.mxu0 0
    %1996 = vmatpush1.bf16.xpose.msra.mxu0 0
    %1997 = vmatprep.subr.bf16.mxu0 0
    %1998 = vmatpush1.bf16.xpose.msra.mxu0 0
    %1999 = vmatprep.subr.bf16.mxu0 0
    %2000 = vmatpush1.bf16.xpose.msra.mxu0 0
    %2001 = vmatprep.subr.bf16.mxu0 0
    %2002 = vmatpush1.bf16.xpose.msra.mxu0 0
    %2003 = vmatprep.subr.bf16.mxu0 0
    %2004 = vmatpush1.bf16.xpose.msra.mxu0 0
    %2005 = vmatprep.subr.bf16.mxu0 0
    %2006 = vmatpush1.bf16.xpose.msra.mxu0 0
    %2007 = vmatprep.subr.bf16.mxu0 0
    %2008 = vmatpush1.bf16.xpose.msra.mxu0 0
    %2009 = vmatprep.subr.bf16.mxu0 0
    %2010 = vmatpush1.bf16.xpose.msra.mxu0 0
    %2011 = vmatprep.subr.bf16.mxu0 0
    %2012 = vmatpush1.bf16.xpose.msra.mxu0 0
    %2013 = vmatprep.mubr.bf16.mxu0 0
    %2014 = vmatmul.mubr.bf16.gmra.mrb[0].mxu0 %v1240
    %v2015 = vpop.f32.mrb[0].mxu0
    %v2016 = vadd.f32 0.0, %v2015
    %v2017 = vpop.f32.mrb[0].mxu0
    %v2018 = vpop.f32.mrb[0].mxu0
    %v2019 = vpop.f32.mrb[0].mxu0
    %2020 = vdwg.mxu0
    %2022 = vrot.lane.b32.xlu0 %v627, 64
    %v2023 = vpop.permute.xlu0 %2022
    %v2025 = vsel %vm686, %v2023, 0
    %2027 = vmatprep.subr.bf16.mxu0 0
    %2028 = vmatpush1.bf16.xpose.msra.mxu0 %v2025
    %2029 = vmatprep.subr.bf16.mxu0 0
    %2030 = vmatpush1.bf16.xpose.msra.mxu0 0
    %2031 = vmatprep.subr.bf16.mxu0 0
    %2032 = vmatpush1.bf16.xpose.msra.mxu0 0
    %2033 = vmatprep.subr.bf16.mxu0 0
    %2034 = vmatpush1.bf16.xpose.msra.mxu0 0
    %2035 = vmatprep.subr.bf16.mxu0 0
    %2036 = vmatpush1.bf16.xpose.msra.mxu0 0
    %2037 = vmatprep.subr.bf16.mxu0 0
    %2038 = vmatpush1.bf16.xpose.msra.mxu0 0
    %2039 = vmatprep.subr.bf16.mxu0 0
    %2040 = vmatpush1.bf16.xpose.msra.mxu0 0
    %2041 = vmatprep.subr.bf16.mxu0 0
    %2042 = vmatpush1.bf16.xpose.msra.mxu0 0
    %2043 = vmatprep.subr.bf16.mxu0 0
    %2044 = vmatpush1.bf16.xpose.msra.mxu0 0
    %2045 = vmatprep.subr.bf16.mxu0 0
    %2046 = vmatpush1.bf16.xpose.msra.mxu0 0
    %2047 = vmatprep.subr.bf16.mxu0 0
    %2048 = vmatpush1.bf16.xpose.msra.mxu0 0
    %2049 = vmatprep.subr.bf16.mxu0 0
    %2050 = vmatpush1.bf16.xpose.msra.mxu0 0
    %2051 = vmatprep.subr.bf16.mxu0 0
    %2052 = vmatpush1.bf16.xpose.msra.mxu0 0
    %2053 = vmatprep.subr.bf16.mxu0 0
    %2054 = vmatpush1.bf16.xpose.msra.mxu0 0
    %2055 = vmatprep.subr.bf16.mxu0 0
    %2056 = vmatpush1.bf16.xpose.msra.mxu0 0
    %2057 = vmatprep.subr.bf16.mxu0 0
    %2058 = vmatpush1.bf16.xpose.msra.mxu0 0
    %2059 = vmatprep.mubr.bf16.mxu0 0
    %2060 = vmatmul.mubr.bf16.gmra.mrb[0].mxu0 %v1286
    %v2061 = vpop.f32.mrb[0].mxu0
    %v2062 = vadd.f32 0.0, %v2061
    %v2063 = vpop.f32.mrb[0].mxu0
    %v2064 = vpop.f32.mrb[0].mxu0
    %v2065 = vpop.f32.mrb[0].mxu0
    %2066 = vdwg.mxu0
    %2068 = vrot.lane.b32.xlu0 %v628, 64
    %v2069 = vpop.permute.xlu0 %2068
    %v2071 = vsel %vm686, %v2069, 0
    %2073 = vmatprep.subr.bf16.mxu0 0
    %2074 = vmatpush1.bf16.xpose.msra.mxu0 %v2071
    %2075 = vmatprep.subr.bf16.mxu0 0
    %2076 = vmatpush1.bf16.xpose.msra.mxu0 0
    %2077 = vmatprep.subr.bf16.mxu0 0
    %2078 = vmatpush1.bf16.xpose.msra.mxu0 0
    %2079 = vmatprep.subr.bf16.mxu0 0
    %2080 = vmatpush1.bf16.xpose.msra.mxu0 0
    %2081 = vmatprep.subr.bf16.mxu0 0
    %2082 = vmatpush1.bf16.xpose.msra.mxu0 0
    %2083 = vmatprep.subr.bf16.mxu0 0
    %2084 = vmatpush1.bf16.xpose.msra.mxu0 0
    %2085 = vmatprep.subr.bf16.mxu0 0
    %2086 = vmatpush1.bf16.xpose.msra.mxu0 0
    %2087 = vmatprep.subr.bf16.mxu0 0
    %2088 = vmatpush1.bf16.xpose.msra.mxu0 0
    %2089 = vmatprep.subr.bf16.mxu0 0
    %2090 = vmatpush1.bf16.xpose.msra.mxu0 0
    %2091 = vmatprep.subr.bf16.mxu0 0
    %2092 = vmatpush1.bf16.xpose.msra.mxu0 0
    %2093 = vmatprep.subr.bf16.mxu0 0
    %2094 = vmatpush1.bf16.xpose.msra.mxu0 0
    %2095 = vmatprep.subr.bf16.mxu0 0
    %2096 = vmatpush1.bf16.xpose.msra.mxu0 0
    %2097 = vmatprep.subr.bf16.mxu0 0
    %2098 = vmatpush1.bf16.xpose.msra.mxu0 0
    %2099 = vmatprep.subr.bf16.mxu0 0
    %2100 = vmatpush1.bf16.xpose.msra.mxu0 0
    %2101 = vmatprep.subr.bf16.mxu0 0
    %2102 = vmatpush1.bf16.xpose.msra.mxu0 0
    %2103 = vmatprep.subr.bf16.mxu0 0
    %2104 = vmatpush1.bf16.xpose.msra.mxu0 0
    %2105 = vmatprep.mubr.bf16.mxu0 0
    %2106 = vmatmul.mubr.bf16.gmra.mrb[0].mxu0 %v1332
    %v2107 = vpop.f32.mrb[0].mxu0
    %v2108 = vadd.f32 0.0, %v2107
    %v2109 = vpop.f32.mrb[0].mxu0
    %v2110 = vpop.f32.mrb[0].mxu0
    %v2111 = vpop.f32.mrb[0].mxu0
    %2112 = vdwg.mxu0
    %2114 = vrot.lane.b32.xlu0 %v629, 64
    %v2115 = vpop.permute.xlu0 %2114
    %v2117 = vsel %vm686, %v2115, 0
    %2119 = vmatprep.subr.bf16.mxu0 0
    %2120 = vmatpush1.bf16.xpose.msra.mxu0 %v2117
    %2121 = vmatprep.subr.bf16.mxu0 0
    %2122 = vmatpush1.bf16.xpose.msra.mxu0 0
    %2123 = vmatprep.subr.bf16.mxu0 0
    %2124 = vmatpush1.bf16.xpose.msra.mxu0 0
    %2125 = vmatprep.subr.bf16.mxu0 0
    %2126 = vmatpush1.bf16.xpose.msra.mxu0 0
    %2127 = vmatprep.subr.bf16.mxu0 0
    %2128 = vmatpush1.bf16.xpose.msra.mxu0 0
    %2129 = vmatprep.subr.bf16.mxu0 0
    %2130 = vmatpush1.bf16.xpose.msra.mxu0 0
    %2131 = vmatprep.subr.bf16.mxu0 0
    %2132 = vmatpush1.bf16.xpose.msra.mxu0 0
    %2133 = vmatprep.subr.bf16.mxu0 0
    %2134 = vmatpush1.bf16.xpose.msra.mxu0 0
    %2135 = vmatprep.subr.bf16.mxu0 0
    %2136 = vmatpush1.bf16.xpose.msra.mxu0 0
    %2137 = vmatprep.subr.bf16.mxu0 0
    %2138 = vmatpush1.bf16.xpose.msra.mxu0 0
    %2139 = vmatprep.subr.bf16.mxu0 0
    %2140 = vmatpush1.bf16.xpose.msra.mxu0 0
    %2141 = vmatprep.subr.bf16.mxu0 0
    %2142 = vmatpush1.bf16.xpose.msra.mxu0 0
    %2143 = vmatprep.subr.bf16.mxu0 0
    %2144 = vmatpush1.bf16.xpose.msra.mxu0 0
    %2145 = vmatprep.subr.bf16.mxu0 0
    %2146 = vmatpush1.bf16.xpose.msra.mxu0 0
    %2147 = vmatprep.subr.bf16.mxu0 0
    %2148 = vmatpush1.bf16.xpose.msra.mxu0 0
    %2149 = vmatprep.subr.bf16.mxu0 0
    %2150 = vmatpush1.bf16.xpose.msra.mxu0 0
    %2151 = vmatprep.mubr.bf16.mxu0 0
    %2152 = vmatmul.mubr.bf16.gmra.mrb[0].mxu0 %v1378
    %v2153 = vpop.f32.mrb[0].mxu0
    %v2154 = vadd.f32 0.0, %v2153
    %v2155 = vpop.f32.mrb[0].mxu0
    %v2156 = vpop.f32.mrb[0].mxu0
    %v2157 = vpop.f32.mrb[0].mxu0
    %2158 = vdwg.mxu0
    %v2159 = vsel %vm686, %v728, -inf
    %2160 = vmax.xlane.f32.xlu0 %v2159
    %v2161 = vpop.xlane.xlu0 %2160
    %v2162 = vsel %vm686, %v774, -inf
    %2163 = vmax.xlane.f32.xlu0 %v2162
    %v2164 = vpop.xlane.xlu0 %2163
    %v2165 = vsel %vm686, %v820, -inf
    %2166 = vmax.xlane.f32.xlu0 %v2165
    %v2167 = vpop.xlane.xlu0 %2166
    %v2168 = vsel %vm686, %v866, -inf
    %2169 = vmax.xlane.f32.xlu0 %v2168
    %v2170 = vpop.xlane.xlu0 %2169
    %v2171 = vsel %vm686, %v912, -inf
    %2172 = vmax.xlane.f32.xlu0 %v2171
    %v2173 = vpop.xlane.xlu0 %2172
    %v2174 = vsel %vm686, %v958, -inf
    %2175 = vmax.xlane.f32.xlu0 %v2174
    %v2176 = vpop.xlane.xlu0 %2175
    %v2177 = vsel %vm686, %v1004, -inf
    %2178 = vmax.xlane.f32.xlu0 %v2177
    %v2179 = vpop.xlane.xlu0 %2178
    %v2180 = vsel %vm686, %v1050, -inf
    %2181 = vmax.xlane.f32.xlu0 %v2180
    %v2182 = vpop.xlane.xlu0 %2181
    %v2183 = vsel %vm686, %v1096, -inf
    %2184 = vmax.xlane.f32.xlu0 %v2183
    %v2185 = vpop.xlane.xlu0 %2184
    %v2186 = vsel %vm686, %v1142, -inf
    %2187 = vmax.xlane.f32.xlu0 %v2186
    %v2188 = vpop.xlane.xlu0 %2187
    %v2189 = vsel %vm686, %v1188, -inf
    %2190 = vmax.xlane.f32.xlu0 %v2189
    %v2191 = vpop.xlane.xlu0 %2190
    %v2192 = vsel %vm686, %v1234, -inf
    %2193 = vmax.xlane.f32.xlu0 %v2192
    %v2194 = vpop.xlane.xlu0 %2193
    %v2195 = vsel %vm686, %v1280, -inf
    %2196 = vmax.xlane.f32.xlu0 %v2195
    %v2197 = vpop.xlane.xlu0 %2196
    %v2198 = vsel %vm686, %v1326, -inf
    %2199 = vmax.xlane.f32.xlu0 %v2198
    %v2200 = vpop.xlane.xlu0 %2199
    %v2201 = vsel %vm686, %v1372, -inf
    %2202 = vmax.xlane.f32.xlu0 %v2201
    %v2203 = vpop.xlane.xlu0 %2202
    %v2204 = vsel %vm686, %v1418, -inf
    %2205 = vmax.xlane.f32.xlu0 %v2204
    %v2206 = vpop.xlane.xlu0 %2205
    %vm2207 = vcmask 64512
    %v2208 = vsel %vm2207, %v1464, -inf
    %2209 = vmax.xlane.f32.xlu0 %v2208
    %v2210 = vpop.xlane.xlu0 %2209
    %v2211 = vsel %vm2207, %v1510, -inf
    %2212 = vmax.xlane.f32.xlu0 %v2211
    %v2213 = vpop.xlane.xlu0 %2212
    %v2214 = vsel %vm2207, %v1556, -inf
    %2215 = vmax.xlane.f32.xlu0 %v2214
    %v2216 = vpop.xlane.xlu0 %2215
    %v2217 = vsel %vm2207, %v1602, -inf
    %2218 = vmax.xlane.f32.xlu0 %v2217
    %v2219 = vpop.xlane.xlu0 %2218
    %v2220 = vsel %vm2207, %v1648, -inf
    %2221 = vmax.xlane.f32.xlu0 %v2220
    %v2222 = vpop.xlane.xlu0 %2221
    %v2223 = vsel %vm2207, %v1694, -inf
    %2224 = vmax.xlane.f32.xlu0 %v2223
    %v2225 = vpop.xlane.xlu0 %2224
    %v2226 = vsel %vm2207, %v1740, -inf
    %2227 = vmax.xlane.f32.xlu0 %v2226
    %v2228 = vpop.xlane.xlu0 %2227
    %v2229 = vsel %vm2207, %v1786, -inf
    %2230 = vmax.xlane.f32.xlu0 %v2229
    %v2231 = vpop.xlane.xlu0 %2230
    %v2232 = vsel %vm2207, %v1832, -inf
    %2233 = vmax.xlane.f32.xlu0 %v2232
    %v2234 = vpop.xlane.xlu0 %2233
    %v2235 = vsel %vm2207, %v1878, -inf
    %2236 = vmax.xlane.f32.xlu0 %v2235
    %v2237 = vpop.xlane.xlu0 %2236
    %v2238 = vsel %vm2207, %v1924, -inf
    %2239 = vmax.xlane.f32.xlu0 %v2238
    %v2240 = vpop.xlane.xlu0 %2239
    %v2241 = vsel %vm2207, %v1970, -inf
    %2242 = vmax.xlane.f32.xlu0 %v2241
    %v2243 = vpop.xlane.xlu0 %2242
    %v2244 = vsel %vm2207, %v2016, -inf
    %2245 = vmax.xlane.f32.xlu0 %v2244
    %v2246 = vpop.xlane.xlu0 %2245
    %v2247 = vsel %vm2207, %v2062, -inf
    %2248 = vmax.xlane.f32.xlu0 %v2247
    %v2249 = vpop.xlane.xlu0 %2248
    %v2250 = vsel %vm2207, %v2108, -inf
    %2251 = vmax.xlane.f32.xlu0 %v2250
    %v2252 = vpop.xlane.xlu0 %2251
    %v2253 = vsel %vm2207, %v2154, -inf
    %2254 = vmax.xlane.f32.xlu0 %v2253
    %v2255 = vpop.xlane.xlu0 %2254
    %v2256 = vmax.f32 %v2161, %v2210
    %v2257 = vmax.f32 %v2164, %v2213
    %v2258 = vmax.f32 %v2167, %v2216
    %v2259 = vmax.f32 %v2170, %v2219
    %v2260 = vmax.f32 %v2173, %v2222
    %v2261 = vmax.f32 %v2176, %v2225
    %v2262 = vmax.f32 %v2179, %v2228
    %v2263 = vmax.f32 %v2182, %v2231
    %v2264 = vmax.f32 %v2185, %v2234
    %v2265 = vmax.f32 %v2188, %v2237
    %v2266 = vmax.f32 %v2191, %v2240
    %v2267 = vmax.f32 %v2194, %v2243
    %v2268 = vmax.f32 %v2197, %v2246
    %v2269 = vmax.f32 %v2200, %v2249
    %v2270 = vmax.f32 %v2203, %v2252
    %v2271 = vmax.f32 %v2206, %v2255
    %v2272 = vsub.f32 %v728, %v2256
    %v2273 = vsub.f32 %v774, %v2257
    %v2274 = vsub.f32 %v820, %v2258
    %v2275 = vsub.f32 %v866, %v2259
    %v2276 = vsub.f32 %v912, %v2260
    %v2277 = vsub.f32 %v958, %v2261
    %v2278 = vsub.f32 %v1004, %v2262
    %v2279 = vsub.f32 %v1050, %v2263
    %v2280 = vsub.f32 %v1096, %v2264
    %v2281 = vsub.f32 %v1142, %v2265
    %v2282 = vsub.f32 %v1188, %v2266
    %v2283 = vsub.f32 %v1234, %v2267
    %v2284 = vsub.f32 %v1280, %v2268
    %v2285 = vsub.f32 %v1326, %v2269
    %v2286 = vsub.f32 %v1372, %v2270
    %v2287 = vsub.f32 %v1418, %v2271
    %v2288 = vmul.f32 %v2272, 1.442695
    %v2289 = vpow.pop %v2288
    %v2290 = vmul.f32 %v2273, 1.442695
    %v2291 = vpow.pop %v2290
    %v2292 = vmul.f32 %v2274, 1.442695
    %v2293 = vpow.pop %v2292
    %v2294 = vmul.f32 %v2275, 1.442695
    %v2295 = vpow.pop %v2294
    %v2296 = vmul.f32 %v2276, 1.442695
    %v2297 = vpow.pop %v2296
    %v2298 = vmul.f32 %v2277, 1.442695
    %v2299 = vpow.pop %v2298
    %v2300 = vmul.f32 %v2278, 1.442695
    %v2301 = vpow.pop %v2300
    %v2302 = vmul.f32 %v2279, 1.442695
    %v2303 = vpow.pop %v2302
    %v2304 = vmul.f32 %v2280, 1.442695
    %v2305 = vpow.pop %v2304
    %v2306 = vmul.f32 %v2281, 1.442695
    %v2307 = vpow.pop %v2306
    %v2308 = vmul.f32 %v2282, 1.442695
    %v2309 = vpow.pop %v2308
    %v2310 = vmul.f32 %v2283, 1.442695
    %v2311 = vpow.pop %v2310
    %v2312 = vmul.f32 %v2284, 1.442695
    %v2313 = vpow.pop %v2312
    %v2314 = vmul.f32 %v2285, 1.442695
    %v2315 = vpow.pop %v2314
    %v2316 = vmul.f32 %v2286, 1.442695
    %v2317 = vpow.pop %v2316
    %v2318 = vmul.f32 %v2287, 1.442695
    %v2319 = vpow.pop %v2318
    %v2320 = vsub.f32 %v1464, %v2256
    %v2321 = vsub.f32 %v1510, %v2257
    %v2322 = vsub.f32 %v1556, %v2258
    %v2323 = vsub.f32 %v1602, %v2259
    %v2324 = vsub.f32 %v1648, %v2260
    %v2325 = vsub.f32 %v1694, %v2261
    %v2326 = vsub.f32 %v1740, %v2262
    %v2327 = vsub.f32 %v1786, %v2263
    %v2328 = vsub.f32 %v1832, %v2264
    %v2329 = vsub.f32 %v1878, %v2265
    %v2330 = vsub.f32 %v1924, %v2266
    %v2331 = vsub.f32 %v1970, %v2267
    %v2332 = vsub.f32 %v2016, %v2268
    %v2333 = vsub.f32 %v2062, %v2269
    %v2334 = vsub.f32 %v2108, %v2270
    %v2335 = vsub.f32 %v2154, %v2271
    %v2336 = vmul.f32 %v2320, 1.442695
    %v2337 = vpow.pop %v2336
    %v2338 = vmul.f32 %v2321, 1.442695
    %v2339 = vpow.pop %v2338
    %v2340 = vmul.f32 %v2322, 1.442695
    %v2341 = vpow.pop %v2340
    %v2342 = vmul.f32 %v2323, 1.442695
    %v2343 = vpow.pop %v2342
    %v2344 = vmul.f32 %v2324, 1.442695
    %v2345 = vpow.pop %v2344
    %v2346 = vmul.f32 %v2325, 1.442695
    %v2347 = vpow.pop %v2346
    %v2348 = vmul.f32 %v2326, 1.442695
    %v2349 = vpow.pop %v2348
    %v2350 = vmul.f32 %v2327, 1.442695
    %v2351 = vpow.pop %v2350
    %v2352 = vmul.f32 %v2328, 1.442695
    %v2353 = vpow.pop %v2352
    %v2354 = vmul.f32 %v2329, 1.442695
    %v2355 = vpow.pop %v2354
    %v2356 = vmul.f32 %v2330, 1.442695
    %v2357 = vpow.pop %v2356
    %v2358 = vmul.f32 %v2331, 1.442695
    %v2359 = vpow.pop %v2358
    %v2360 = vmul.f32 %v2332, 1.442695
    %v2361 = vpow.pop %v2360
    %v2362 = vmul.f32 %v2333, 1.442695
    %v2363 = vpow.pop %v2362
    %v2364 = vmul.f32 %v2334, 1.442695
    %v2365 = vpow.pop %v2364
    %v2366 = vmul.f32 %v2335, 1.442695
    %v2367 = vpow.pop %v2366
    %v2368 = vsel %vm686, %v2289, 0.0
    %2369 = vadd.xlane.f32.xlu0 %v2368
    %v2370 = vpop.xlane.xlu0 %2369
    %v2371 = vsel %vm686, %v2291, 0.0
    %2372 = vadd.xlane.f32.xlu0 %v2371
    %v2373 = vpop.xlane.xlu0 %2372
    %v2374 = vsel %vm686, %v2293, 0.0
    %2375 = vadd.xlane.f32.xlu0 %v2374
    %v2376 = vpop.xlane.xlu0 %2375
    %v2377 = vsel %vm686, %v2295, 0.0
    %2378 = vadd.xlane.f32.xlu0 %v2377
    %v2379 = vpop.xlane.xlu0 %2378
    %v2380 = vsel %vm686, %v2297, 0.0
    %2381 = vadd.xlane.f32.xlu0 %v2380
    %v2382 = vpop.xlane.xlu0 %2381
    %v2383 = vsel %vm686, %v2299, 0.0
    %2384 = vadd.xlane.f32.xlu0 %v2383
    %v2385 = vpop.xlane.xlu0 %2384
    %v2386 = vsel %vm686, %v2301, 0.0
    %2387 = vadd.xlane.f32.xlu0 %v2386
    %v2388 = vpop.xlane.xlu0 %2387
    %v2389 = vsel %vm686, %v2303, 0.0
    %2390 = vadd.xlane.f32.xlu0 %v2389
    %v2391 = vpop.xlane.xlu0 %2390
    %v2392 = vsel %vm686, %v2305, 0.0
    %2393 = vadd.xlane.f32.xlu0 %v2392
    %v2394 = vpop.xlane.xlu0 %2393
    %v2395 = vsel %vm686, %v2307, 0.0
    %2396 = vadd.xlane.f32.xlu0 %v2395
    %v2397 = vpop.xlane.xlu0 %2396
    %v2398 = vsel %vm686, %v2309, 0.0
    %2399 = vadd.xlane.f32.xlu0 %v2398
    %v2400 = vpop.xlane.xlu0 %2399
    %v2401 = vsel %vm686, %v2311, 0.0
    %2402 = vadd.xlane.f32.xlu0 %v2401
    %v2403 = vpop.xlane.xlu0 %2402
    %v2404 = vsel %vm686, %v2313, 0.0
    %2405 = vadd.xlane.f32.xlu0 %v2404
    %v2406 = vpop.xlane.xlu0 %2405
    %v2407 = vsel %vm686, %v2315, 0.0
    %2408 = vadd.xlane.f32.xlu0 %v2407
    %v2409 = vpop.xlane.xlu0 %2408
    %v2410 = vsel %vm686, %v2317, 0.0
    %2411 = vadd.xlane.f32.xlu0 %v2410
    %v2412 = vpop.xlane.xlu0 %2411
    %v2413 = vsel %vm686, %v2319, 0.0
    %2414 = vadd.xlane.f32.xlu0 %v2413
    %v2415 = vpop.xlane.xlu0 %2414
    %v2416 = vsel %vm2207, %v2337, 0.0
    %2417 = vadd.xlane.f32.xlu0 %v2416
    %v2418 = vpop.xlane.xlu0 %2417
    %v2419 = vsel %vm2207, %v2339, 0.0
    %2420 = vadd.xlane.f32.xlu0 %v2419
    %v2421 = vpop.xlane.xlu0 %2420
    %v2422 = vsel %vm2207, %v2341, 0.0
    %2423 = vadd.xlane.f32.xlu0 %v2422
    %v2424 = vpop.xlane.xlu0 %2423
    %v2425 = vsel %vm2207, %v2343, 0.0
    %2426 = vadd.xlane.f32.xlu0 %v2425
    %v2427 = vpop.xlane.xlu0 %2426
    %v2428 = vsel %vm2207, %v2345, 0.0
    %2429 = vadd.xlane.f32.xlu0 %v2428
    %v2430 = vpop.xlane.xlu0 %2429
    %v2431 = vsel %vm2207, %v2347, 0.0
    %2432 = vadd.xlane.f32.xlu0 %v2431
    %v2433 = vpop.xlane.xlu0 %2432
    %v2434 = vsel %vm2207, %v2349, 0.0
    %2435 = vadd.xlane.f32.xlu0 %v2434
    %v2436 = vpop.xlane.xlu0 %2435
    %v2437 = vsel %vm2207, %v2351, 0.0
    %2438 = vadd.xlane.f32.xlu0 %v2437
    %v2439 = vpop.xlane.xlu0 %2438
    %v2440 = vsel %vm2207, %v2353, 0.0
    %2441 = vadd.xlane.f32.xlu0 %v2440
    %v2442 = vpop.xlane.xlu0 %2441
    %v2443 = vsel %vm2207, %v2355, 0.0
    %2444 = vadd.xlane.f32.xlu0 %v2443
    %v2445 = vpop.xlane.xlu0 %2444
    %v2446 = vsel %vm2207, %v2357, 0.0
    %2447 = vadd.xlane.f32.xlu0 %v2446
    %v2448 = vpop.xlane.xlu0 %2447
    %v2449 = vsel %vm2207, %v2359, 0.0
    %2450 = vadd.xlane.f32.xlu0 %v2449
    %v2451 = vpop.xlane.xlu0 %2450
    %v2452 = vsel %vm2207, %v2361, 0.0
    %2453 = vadd.xlane.f32.xlu0 %v2452
    %v2454 = vpop.xlane.xlu0 %2453
    %v2455 = vsel %vm2207, %v2363, 0.0
    %2456 = vadd.xlane.f32.xlu0 %v2455
    %v2457 = vpop.xlane.xlu0 %2456
    %v2458 = vsel %vm2207, %v2365, 0.0
    %2459 = vadd.xlane.f32.xlu0 %v2458
    %v2460 = vpop.xlane.xlu0 %2459
    %v2461 = vsel %vm2207, %v2367, 0.0
    %2462 = vadd.xlane.f32.xlu0 %v2461
    %v2463 = vpop.xlane.xlu0 %2462
    %v2464 = vadd.f32 %v2370, %v2418
    %v2465 = vadd.f32 %v2373, %v2421
    %v2466 = vadd.f32 %v2376, %v2424
    %v2467 = vadd.f32 %v2379, %v2427
    %v2468 = vadd.f32 %v2382, %v2430
    %v2469 = vadd.f32 %v2385, %v2433
    %v2470 = vadd.f32 %v2388, %v2436
    %v2471 = vadd.f32 %v2391, %v2439
    %v2472 = vadd.f32 %v2394, %v2442
    %v2473 = vadd.f32 %v2397, %v2445
    %v2474 = vadd.f32 %v2400, %v2448
    %v2475 = vadd.f32 %v2403, %v2451
    %v2476 = vadd.f32 %v2406, %v2454
    %v2477 = vadd.f32 %v2409, %v2457
    %v2478 = vadd.f32 %v2412, %v2460
    %v2479 = vadd.f32 %v2415, %v2463
    %v2480 = vpack.c.bf16 %v2289, %v2289
    %v2481 = vpack.c.bf16 %v2291, %v2291
    %v2482 = vpack.c.bf16 %v2293, %v2293
    %v2483 = vpack.c.bf16 %v2295, %v2295
    %v2484 = vpack.c.bf16 %v2297, %v2297
    %v2485 = vpack.c.bf16 %v2299, %v2299
    %v2486 = vpack.c.bf16 %v2301, %v2301
    %v2487 = vpack.c.bf16 %v2303, %v2303
    %v2488 = vpack.c.bf16 %v2305, %v2305
    %v2489 = vpack.c.bf16 %v2307, %v2307
    %v2490 = vpack.c.bf16 %v2309, %v2309
    %v2491 = vpack.c.bf16 %v2311, %v2311
    %v2492 = vpack.c.bf16 %v2313, %v2313
    %v2493 = vpack.c.bf16 %v2315, %v2315
    %v2494 = vpack.c.bf16 %v2317, %v2317
    %v2495 = vpack.c.bf16 %v2319, %v2319
    %v2496 = vpack.c.bf16 %v2337, %v2337
    %v2497 = vpack.c.bf16 %v2339, %v2339
    %v2498 = vpack.c.bf16 %v2341, %v2341
    %v2499 = vpack.c.bf16 %v2343, %v2343
    %v2500 = vpack.c.bf16 %v2345, %v2345
    %v2501 = vpack.c.bf16 %v2347, %v2347
    %v2502 = vpack.c.bf16 %v2349, %v2349
    %v2503 = vpack.c.bf16 %v2351, %v2351
    %v2504 = vpack.c.bf16 %v2353, %v2353
    %v2505 = vpack.c.bf16 %v2355, %v2355
    %v2506 = vpack.c.bf16 %v2357, %v2357
    %v2507 = vpack.c.bf16 %v2359, %v2359
    %v2508 = vpack.c.bf16 %v2361, %v2361
    %v2509 = vpack.c.bf16 %v2363, %v2363
    %v2510 = vpack.c.bf16 %v2365, %v2365
    %v2511 = vpack.c.bf16 %v2367, %v2367
    %v2513 = vsel %vm2207, %v2496, 0
    %vm2515 = vcmask 1043456
    %v2517 = vsel %vm2515, %v670, 0
    %2519 = vmatprep.subr.bf16.mxu0 0
    %2520 = vmatpush1.bf16.msra.mxu0 %v2517
    %2521 = vmatprep.subr.bf16.mxu0 0
    %2522 = vmatpush1.bf16.msra.mxu0 0
    %2523 = vmatprep.subr.bf16.mxu0 0
    %2524 = vmatpush1.bf16.msra.mxu0 0
    %2525 = vmatprep.subr.bf16.mxu0 0
    %2526 = vmatpush1.bf16.msra.mxu0 0
    %2527 = vmatprep.subr.bf16.mxu0 0
    %2528 = vmatpush1.bf16.msra.mxu0 0
    %2529 = vmatprep.subr.bf16.mxu0 0
    %2530 = vmatpush1.bf16.msra.mxu0 0
    %2531 = vmatprep.subr.bf16.mxu0 0
    %2532 = vmatpush1.bf16.msra.mxu0 0
    %2533 = vmatprep.subr.bf16.mxu0 0
    %2534 = vmatpush1.bf16.msra.mxu0 0
    %2535 = vmatprep.subr.bf16.mxu0 0
    %2536 = vmatpush1.bf16.msra.mxu0 0
    %2537 = vmatprep.subr.bf16.mxu0 0
    %2538 = vmatpush1.bf16.msra.mxu0 0
    %2539 = vmatprep.subr.bf16.mxu0 0
    %2540 = vmatpush1.bf16.msra.mxu0 0
    %2541 = vmatprep.subr.bf16.mxu0 0
    %2542 = vmatpush1.bf16.msra.mxu0 0
    %2543 = vmatprep.subr.bf16.mxu0 0
    %2544 = vmatpush1.bf16.msra.mxu0 0
    %2545 = vmatprep.subr.bf16.mxu0 0
    %2546 = vmatpush1.bf16.msra.mxu0 0
    %2547 = vmatprep.subr.bf16.mxu0 0
    %2548 = vmatpush1.bf16.msra.mxu0 0
    %2549 = vmatprep.subr.bf16.mxu0 0
    %2550 = vmatpush1.bf16.msra.mxu0 0
    %2551 = vmatprep.mubr.bf16.mxu0 0
    %2552 = vmatmul.mubr.bf16.gmra.mrb[0].mxu0 %v2513
    %v2553 = vpop.f32.mrb[0].mxu0
    %v2554 = vadd.f32 0.0, %v2553
    %v2555 = vpop.f32.mrb[0].mxu0
    %v2556 = vpop.f32.mrb[0].mxu0
    %v2557 = vpop.f32.mrb[0].mxu0
    %2558 = vdwg.mxu0
    %v2560 = vsel %vm2207, %v2497, 0
    %v2563 = vsel %vm2515, %v671, 0
    %2565 = vmatprep.subr.bf16.mxu0 0
    %2566 = vmatpush1.bf16.msra.mxu0 %v2563
    %2567 = vmatprep.subr.bf16.mxu0 0
    %2568 = vmatpush1.bf16.msra.mxu0 0
    %2569 = vmatprep.subr.bf16.mxu0 0
    %2570 = vmatpush1.bf16.msra.mxu0 0
    %2571 = vmatprep.subr.bf16.mxu0 0
    %2572 = vmatpush1.bf16.msra.mxu0 0
    %2573 = vmatprep.subr.bf16.mxu0 0
    %2574 = vmatpush1.bf16.msra.mxu0 0
    %2575 = vmatprep.subr.bf16.mxu0 0
    %2576 = vmatpush1.bf16.msra.mxu0 0
    %2577 = vmatprep.subr.bf16.mxu0 0
    %2578 = vmatpush1.bf16.msra.mxu0 0
    %2579 = vmatprep.subr.bf16.mxu0 0
    %2580 = vmatpush1.bf16.msra.mxu0 0
    %2581 = vmatprep.subr.bf16.mxu0 0
    %2582 = vmatpush1.bf16.msra.mxu0 0
    %2583 = vmatprep.subr.bf16.mxu0 0
    %2584 = vmatpush1.bf16.msra.mxu0 0
    %2585 = vmatprep.subr.bf16.mxu0 0
    %2586 = vmatpush1.bf16.msra.mxu0 0
    %2587 = vmatprep.subr.bf16.mxu0 0
    %2588 = vmatpush1.bf16.msra.mxu0 0
    %2589 = vmatprep.subr.bf16.mxu0 0
    %2590 = vmatpush1.bf16.msra.mxu0 0
    %2591 = vmatprep.subr.bf16.mxu0 0
    %2592 = vmatpush1.bf16.msra.mxu0 0
    %2593 = vmatprep.subr.bf16.mxu0 0
    %2594 = vmatpush1.bf16.msra.mxu0 0
    %2595 = vmatprep.subr.bf16.mxu0 0
    %2596 = vmatpush1.bf16.msra.mxu0 0
    %2597 = vmatprep.mubr.bf16.mxu0 0
    %2598 = vmatmul.mubr.bf16.gmra.mrb[0].mxu0 %v2560
    %v2599 = vpop.f32.mrb[0].mxu0
    %v2600 = vadd.f32 0.0, %v2599
    %v2601 = vpop.f32.mrb[0].mxu0
    %v2602 = vpop.f32.mrb[0].mxu0
    %v2603 = vpop.f32.mrb[0].mxu0
    %2604 = vdwg.mxu0
    %v2606 = vsel %vm2207, %v2498, 0
    %v2609 = vsel %vm2515, %v672, 0
    %2611 = vmatprep.subr.bf16.mxu0 0
    %2612 = vmatpush1.bf16.msra.mxu0 %v2609
    %2613 = vmatprep.subr.bf16.mxu0 0
    %2614 = vmatpush1.bf16.msra.mxu0 0
    %2615 = vmatprep.subr.bf16.mxu0 0
    %2616 = vmatpush1.bf16.msra.mxu0 0
    %2617 = vmatprep.subr.bf16.mxu0 0
    %2618 = vmatpush1.bf16.msra.mxu0 0
    %2619 = vmatprep.subr.bf16.mxu0 0
    %2620 = vmatpush1.bf16.msra.mxu0 0
    %2621 = vmatprep.subr.bf16.mxu0 0
    %2622 = vmatpush1.bf16.msra.mxu0 0
    %2623 = vmatprep.subr.bf16.mxu0 0
    %2624 = vmatpush1.bf16.msra.mxu0 0
    %2625 = vmatprep.subr.bf16.mxu0 0
    %2626 = vmatpush1.bf16.msra.mxu0 0
    %2627 = vmatprep.subr.bf16.mxu0 0
    %2628 = vmatpush1.bf16.msra.mxu0 0
    %2629 = vmatprep.subr.bf16.mxu0 0
    %2630 = vmatpush1.bf16.msra.mxu0 0
    %2631 = vmatprep.subr.bf16.mxu0 0
    %2632 = vmatpush1.bf16.msra.mxu0 0
    %2633 = vmatprep.subr.bf16.mxu0 0
    %2634 = vmatpush1.bf16.msra.mxu0 0
    %2635 = vmatprep.subr.bf16.mxu0 0
    %2636 = vmatpush1.bf16.msra.mxu0 0
    %2637 = vmatprep.subr.bf16.mxu0 0
    %2638 = vmatpush1.bf16.msra.mxu0 0
    %2639 = vmatprep.subr.bf16.mxu0 0
    %2640 = vmatpush1.bf16.msra.mxu0 0
    %2641 = vmatprep.subr.bf16.mxu0 0
    %2642 = vmatpush1.bf16.msra.mxu0 0
    %2643 = vmatprep.mubr.bf16.mxu0 0
    %2644 = vmatmul.mubr.bf16.gmra.mrb[0].mxu0 %v2606
    %v2645 = vpop.f32.mrb[0].mxu0
    %v2646 = vadd.f32 0.0, %v2645
    %v2647 = vpop.f32.mrb[0].mxu0
    %v2648 = vpop.f32.mrb[0].mxu0
    %v2649 = vpop.f32.mrb[0].mxu0
    %2650 = vdwg.mxu0
    %v2652 = vsel %vm2207, %v2499, 0
    %v2655 = vsel %vm2515, %v673, 0
    %2657 = vmatprep.subr.bf16.mxu0 0
    %2658 = vmatpush1.bf16.msra.mxu0 %v2655
    %2659 = vmatprep.subr.bf16.mxu0 0
    %2660 = vmatpush1.bf16.msra.mxu0 0
    %2661 = vmatprep.subr.bf16.mxu0 0
    %2662 = vmatpush1.bf16.msra.mxu0 0
    %2663 = vmatprep.subr.bf16.mxu0 0
    %2664 = vmatpush1.bf16.msra.mxu0 0
    %2665 = vmatprep.subr.bf16.mxu0 0
    %2666 = vmatpush1.bf16.msra.mxu0 0
    %2667 = vmatprep.subr.bf16.mxu0 0
    %2668 = vmatpush1.bf16.msra.mxu0 0
    %2669 = vmatprep.subr.bf16.mxu0 0
    %2670 = vmatpush1.bf16.msra.mxu0 0
    %2671 = vmatprep.subr.bf16.mxu0 0
    %2672 = vmatpush1.bf16.msra.mxu0 0
    %2673 = vmatprep.subr.bf16.mxu0 0
    %2674 = vmatpush1.bf16.msra.mxu0 0
    %2675 = vmatprep.subr.bf16.mxu0 0
    %2676 = vmatpush1.bf16.msra.mxu0 0
    %2677 = vmatprep.subr.bf16.mxu0 0
    %2678 = vmatpush1.bf16.msra.mxu0 0
    %2679 = vmatprep.subr.bf16.mxu0 0
    %2680 = vmatpush1.bf16.msra.mxu0 0
    %2681 = vmatprep.subr.bf16.mxu0 0
    %2682 = vmatpush1.bf16.msra.mxu0 0
    %2683 = vmatprep.subr.bf16.mxu0 0
    %2684 = vmatpush1.bf16.msra.mxu0 0
    %2685 = vmatprep.subr.bf16.mxu0 0
    %2686 = vmatpush1.bf16.msra.mxu0 0
    %2687 = vmatprep.subr.bf16.mxu0 0
    %2688 = vmatpush1.bf16.msra.mxu0 0
    %2689 = vmatprep.mubr.bf16.mxu0 0
    %2690 = vmatmul.mubr.bf16.gmra.mrb[0].mxu0 %v2652
    %v2691 = vpop.f32.mrb[0].mxu0
    %v2692 = vadd.f32 0.0, %v2691
    %v2693 = vpop.f32.mrb[0].mxu0
    %v2694 = vpop.f32.mrb[0].mxu0
    %v2695 = vpop.f32.mrb[0].mxu0
    %2696 = vdwg.mxu0
    %v2698 = vsel %vm2207, %v2500, 0
    %v2701 = vsel %vm2515, %v674, 0
    %2703 = vmatprep.subr.bf16.mxu0 0
    %2704 = vmatpush1.bf16.msra.mxu0 %v2701
    %2705 = vmatprep.subr.bf16.mxu0 0
    %2706 = vmatpush1.bf16.msra.mxu0 0
    %2707 = vmatprep.subr.bf16.mxu0 0
    %2708 = vmatpush1.bf16.msra.mxu0 0
    %2709 = vmatprep.subr.bf16.mxu0 0
    %2710 = vmatpush1.bf16.msra.mxu0 0
    %2711 = vmatprep.subr.bf16.mxu0 0
    %2712 = vmatpush1.bf16.msra.mxu0 0
    %2713 = vmatprep.subr.bf16.mxu0 0
    %2714 = vmatpush1.bf16.msra.mxu0 0
    %2715 = vmatprep.subr.bf16.mxu0 0
    %2716 = vmatpush1.bf16.msra.mxu0 0
    %2717 = vmatprep.subr.bf16.mxu0 0
    %2718 = vmatpush1.bf16.msra.mxu0 0
    %2719 = vmatprep.subr.bf16.mxu0 0
    %2720 = vmatpush1.bf16.msra.mxu0 0
    %2721 = vmatprep.subr.bf16.mxu0 0
    %2722 = vmatpush1.bf16.msra.mxu0 0
    %2723 = vmatprep.subr.bf16.mxu0 0
    %2724 = vmatpush1.bf16.msra.mxu0 0
    %2725 = vmatprep.subr.bf16.mxu0 0
    %2726 = vmatpush1.bf16.msra.mxu0 0
    %2727 = vmatprep.subr.bf16.mxu0 0
    %2728 = vmatpush1.bf16.msra.mxu0 0
    %2729 = vmatprep.subr.bf16.mxu0 0
    %2730 = vmatpush1.bf16.msra.mxu0 0
    %2731 = vmatprep.subr.bf16.mxu0 0
    %2732 = vmatpush1.bf16.msra.mxu0 0
    %2733 = vmatprep.subr.bf16.mxu0 0
    %2734 = vmatpush1.bf16.msra.mxu0 0
    %2735 = vmatprep.mubr.bf16.mxu0 0
    %2736 = vmatmul.mubr.bf16.gmra.mrb[0].mxu0 %v2698
    %v2737 = vpop.f32.mrb[0].mxu0
    %v2738 = vadd.f32 0.0, %v2737
    %v2739 = vpop.f32.mrb[0].mxu0
    %v2740 = vpop.f32.mrb[0].mxu0
    %v2741 = vpop.f32.mrb[0].mxu0
    %2742 = vdwg.mxu0
    %v2744 = vsel %vm2207, %v2501, 0
    %v2747 = vsel %vm2515, %v675, 0
    %2749 = vmatprep.subr.bf16.mxu0 0
    %2750 = vmatpush1.bf16.msra.mxu0 %v2747
    %2751 = vmatprep.subr.bf16.mxu0 0
    %2752 = vmatpush1.bf16.msra.mxu0 0
    %2753 = vmatprep.subr.bf16.mxu0 0
    %2754 = vmatpush1.bf16.msra.mxu0 0
    %2755 = vmatprep.subr.bf16.mxu0 0
    %2756 = vmatpush1.bf16.msra.mxu0 0
    %2757 = vmatprep.subr.bf16.mxu0 0
    %2758 = vmatpush1.bf16.msra.mxu0 0
    %2759 = vmatprep.subr.bf16.mxu0 0
    %2760 = vmatpush1.bf16.msra.mxu0 0
    %2761 = vmatprep.subr.bf16.mxu0 0
    %2762 = vmatpush1.bf16.msra.mxu0 0
    %2763 = vmatprep.subr.bf16.mxu0 0
    %2764 = vmatpush1.bf16.msra.mxu0 0
    %2765 = vmatprep.subr.bf16.mxu0 0
    %2766 = vmatpush1.bf16.msra.mxu0 0
    %2767 = vmatprep.subr.bf16.mxu0 0
    %2768 = vmatpush1.bf16.msra.mxu0 0
    %2769 = vmatprep.subr.bf16.mxu0 0
    %2770 = vmatpush1.bf16.msra.mxu0 0
    %2771 = vmatprep.subr.bf16.mxu0 0
    %2772 = vmatpush1.bf16.msra.mxu0 0
    %2773 = vmatprep.subr.bf16.mxu0 0
    %2774 = vmatpush1.bf16.msra.mxu0 0
    %2775 = vmatprep.subr.bf16.mxu0 0
    %2776 = vmatpush1.bf16.msra.mxu0 0
    %2777 = vmatprep.subr.bf16.mxu0 0
    %2778 = vmatpush1.bf16.msra.mxu0 0
    %2779 = vmatprep.subr.bf16.mxu0 0
    %2780 = vmatpush1.bf16.msra.mxu0 0
    %2781 = vmatprep.mubr.bf16.mxu0 0
    %2782 = vmatmul.mubr.bf16.gmra.mrb[0].mxu0 %v2744
    %v2783 = vpop.f32.mrb[0].mxu0
    %v2784 = vadd.f32 0.0, %v2783
    %v2785 = vpop.f32.mrb[0].mxu0
    %v2786 = vpop.f32.mrb[0].mxu0
    %v2787 = vpop.f32.mrb[0].mxu0
    %2788 = vdwg.mxu0
    %v2790 = vsel %vm2207, %v2502, 0
    %v2793 = vsel %vm2515, %v676, 0
    %2795 = vmatprep.subr.bf16.mxu0 0
    %2796 = vmatpush1.bf16.msra.mxu0 %v2793
    %2797 = vmatprep.subr.bf16.mxu0 0
    %2798 = vmatpush1.bf16.msra.mxu0 0
    %2799 = vmatprep.subr.bf16.mxu0 0
    %2800 = vmatpush1.bf16.msra.mxu0 0
    %2801 = vmatprep.subr.bf16.mxu0 0
    %2802 = vmatpush1.bf16.msra.mxu0 0
    %2803 = vmatprep.subr.bf16.mxu0 0
    %2804 = vmatpush1.bf16.msra.mxu0 0
    %2805 = vmatprep.subr.bf16.mxu0 0
    %2806 = vmatpush1.bf16.msra.mxu0 0
    %2807 = vmatprep.subr.bf16.mxu0 0
    %2808 = vmatpush1.bf16.msra.mxu0 0
    %2809 = vmatprep.subr.bf16.mxu0 0
    %2810 = vmatpush1.bf16.msra.mxu0 0
    %2811 = vmatprep.subr.bf16.mxu0 0
    %2812 = vmatpush1.bf16.msra.mxu0 0
    %2813 = vmatprep.subr.bf16.mxu0 0
    %2814 = vmatpush1.bf16.msra.mxu0 0
    %2815 = vmatprep.subr.bf16.mxu0 0
    %2816 = vmatpush1.bf16.msra.mxu0 0
    %2817 = vmatprep.subr.bf16.mxu0 0
    %2818 = vmatpush1.bf16.msra.mxu0 0
    %2819 = vmatprep.subr.bf16.mxu0 0
    %2820 = vmatpush1.bf16.msra.mxu0 0
    %2821 = vmatprep.subr.bf16.mxu0 0
    %2822 = vmatpush1.bf16.msra.mxu0 0
    %2823 = vmatprep.subr.bf16.mxu0 0
    %2824 = vmatpush1.bf16.msra.mxu0 0
    %2825 = vmatprep.subr.bf16.mxu0 0
    %2826 = vmatpush1.bf16.msra.mxu0 0
    %2827 = vmatprep.mubr.bf16.mxu0 0
    %2828 = vmatmul.mubr.bf16.gmra.mrb[0].mxu0 %v2790
    %v2829 = vpop.f32.mrb[0].mxu0
    %v2830 = vadd.f32 0.0, %v2829
    %v2831 = vpop.f32.mrb[0].mxu0
    %v2832 = vpop.f32.mrb[0].mxu0
    %v2833 = vpop.f32.mrb[0].mxu0
    %2834 = vdwg.mxu0
    %v2836 = vsel %vm2207, %v2503, 0
    %v2839 = vsel %vm2515, %v677, 0
    %2841 = vmatprep.subr.bf16.mxu0 0
    %2842 = vmatpush1.bf16.msra.mxu0 %v2839
    %2843 = vmatprep.subr.bf16.mxu0 0
    %2844 = vmatpush1.bf16.msra.mxu0 0
    %2845 = vmatprep.subr.bf16.mxu0 0
    %2846 = vmatpush1.bf16.msra.mxu0 0
    %2847 = vmatprep.subr.bf16.mxu0 0
    %2848 = vmatpush1.bf16.msra.mxu0 0
    %2849 = vmatprep.subr.bf16.mxu0 0
    %2850 = vmatpush1.bf16.msra.mxu0 0
    %2851 = vmatprep.subr.bf16.mxu0 0
    %2852 = vmatpush1.bf16.msra.mxu0 0
    %2853 = vmatprep.subr.bf16.mxu0 0
    %2854 = vmatpush1.bf16.msra.mxu0 0
    %2855 = vmatprep.subr.bf16.mxu0 0
    %2856 = vmatpush1.bf16.msra.mxu0 0
    %2857 = vmatprep.subr.bf16.mxu0 0
    %2858 = vmatpush1.bf16.msra.mxu0 0
    %2859 = vmatprep.subr.bf16.mxu0 0
    %2860 = vmatpush1.bf16.msra.mxu0 0
    %2861 = vmatprep.subr.bf16.mxu0 0
    %2862 = vmatpush1.bf16.msra.mxu0 0
    %2863 = vmatprep.subr.bf16.mxu0 0
    %2864 = vmatpush1.bf16.msra.mxu0 0
    %2865 = vmatprep.subr.bf16.mxu0 0
    %2866 = vmatpush1.bf16.msra.mxu0 0
    %2867 = vmatprep.subr.bf16.mxu0 0
    %2868 = vmatpush1.bf16.msra.mxu0 0
    %2869 = vmatprep.subr.bf16.mxu0 0
    %2870 = vmatpush1.bf16.msra.mxu0 0
    %2871 = vmatprep.subr.bf16.mxu0 0
    %2872 = vmatpush1.bf16.msra.mxu0 0
    %2873 = vmatprep.mubr.bf16.mxu0 0
    %2874 = vmatmul.mubr.bf16.gmra.mrb[0].mxu0 %v2836
    %v2875 = vpop.f32.mrb[0].mxu0
    %v2876 = vadd.f32 0.0, %v2875
    %v2877 = vpop.f32.mrb[0].mxu0
    %v2878 = vpop.f32.mrb[0].mxu0
    %v2879 = vpop.f32.mrb[0].mxu0
    %2880 = vdwg.mxu0
    %v2882 = vsel %vm2207, %v2504, 0
    %v2885 = vsel %vm2515, %v678, 0
    %2887 = vmatprep.subr.bf16.mxu0 0
    %2888 = vmatpush1.bf16.msra.mxu0 %v2885
    %2889 = vmatprep.subr.bf16.mxu0 0
    %2890 = vmatpush1.bf16.msra.mxu0 0
    %2891 = vmatprep.subr.bf16.mxu0 0
    %2892 = vmatpush1.bf16.msra.mxu0 0
    %2893 = vmatprep.subr.bf16.mxu0 0
    %2894 = vmatpush1.bf16.msra.mxu0 0
    %2895 = vmatprep.subr.bf16.mxu0 0
    %2896 = vmatpush1.bf16.msra.mxu0 0
    %2897 = vmatprep.subr.bf16.mxu0 0
    %2898 = vmatpush1.bf16.msra.mxu0 0
    %2899 = vmatprep.subr.bf16.mxu0 0
    %2900 = vmatpush1.bf16.msra.mxu0 0
    %2901 = vmatprep.subr.bf16.mxu0 0
    %2902 = vmatpush1.bf16.msra.mxu0 0
    %2903 = vmatprep.subr.bf16.mxu0 0
    %2904 = vmatpush1.bf16.msra.mxu0 0
    %2905 = vmatprep.subr.bf16.mxu0 0
    %2906 = vmatpush1.bf16.msra.mxu0 0
    %2907 = vmatprep.subr.bf16.mxu0 0
    %2908 = vmatpush1.bf16.msra.mxu0 0
    %2909 = vmatprep.subr.bf16.mxu0 0
    %2910 = vmatpush1.bf16.msra.mxu0 0
    %2911 = vmatprep.subr.bf16.mxu0 0
    %2912 = vmatpush1.bf16.msra.mxu0 0
    %2913 = vmatprep.subr.bf16.mxu0 0
    %2914 = vmatpush1.bf16.msra.mxu0 0
    %2915 = vmatprep.subr.bf16.mxu0 0
    %2916 = vmatpush1.bf16.msra.mxu0 0
    %2917 = vmatprep.subr.bf16.mxu0 0
    %2918 = vmatpush1.bf16.msra.mxu0 0
    %2919 = vmatprep.mubr.bf16.mxu0 0
    %2920 = vmatmul.mubr.bf16.gmra.mrb[0].mxu0 %v2882
    %v2921 = vpop.f32.mrb[0].mxu0
    %v2922 = vadd.f32 0.0, %v2921
    %v2923 = vpop.f32.mrb[0].mxu0
    %v2924 = vpop.f32.mrb[0].mxu0
    %v2925 = vpop.f32.mrb[0].mxu0
    %2926 = vdwg.mxu0
    %v2928 = vsel %vm2207, %v2505, 0
    %v2931 = vsel %vm2515, %v679, 0
    %2933 = vmatprep.subr.bf16.mxu0 0
    %2934 = vmatpush1.bf16.msra.mxu0 %v2931
    %2935 = vmatprep.subr.bf16.mxu0 0
    %2936 = vmatpush1.bf16.msra.mxu0 0
    %2937 = vmatprep.subr.bf16.mxu0 0
    %2938 = vmatpush1.bf16.msra.mxu0 0
    %2939 = vmatprep.subr.bf16.mxu0 0
    %2940 = vmatpush1.bf16.msra.mxu0 0
    %2941 = vmatprep.subr.bf16.mxu0 0
    %2942 = vmatpush1.bf16.msra.mxu0 0
    %2943 = vmatprep.subr.bf16.mxu0 0
    %2944 = vmatpush1.bf16.msra.mxu0 0
    %2945 = vmatprep.subr.bf16.mxu0 0
    %2946 = vmatpush1.bf16.msra.mxu0 0
    %2947 = vmatprep.subr.bf16.mxu0 0
    %2948 = vmatpush1.bf16.msra.mxu0 0
    %2949 = vmatprep.subr.bf16.mxu0 0
    %2950 = vmatpush1.bf16.msra.mxu0 0
    %2951 = vmatprep.subr.bf16.mxu0 0
    %2952 = vmatpush1.bf16.msra.mxu0 0
    %2953 = vmatprep.subr.bf16.mxu0 0
    %2954 = vmatpush1.bf16.msra.mxu0 0
    %2955 = vmatprep.subr.bf16.mxu0 0
    %2956 = vmatpush1.bf16.msra.mxu0 0
    %2957 = vmatprep.subr.bf16.mxu0 0
    %2958 = vmatpush1.bf16.msra.mxu0 0
    %2959 = vmatprep.subr.bf16.mxu0 0
    %2960 = vmatpush1.bf16.msra.mxu0 0
    %2961 = vmatprep.subr.bf16.mxu0 0
    %2962 = vmatpush1.bf16.msra.mxu0 0
    %2963 = vmatprep.subr.bf16.mxu0 0
    %2964 = vmatpush1.bf16.msra.mxu0 0
    %2965 = vmatprep.mubr.bf16.mxu0 0
    %2966 = vmatmul.mubr.bf16.gmra.mrb[0].mxu0 %v2928
    %v2967 = vpop.f32.mrb[0].mxu0
    %v2968 = vadd.f32 0.0, %v2967
    %v2969 = vpop.f32.mrb[0].mxu0
    %v2970 = vpop.f32.mrb[0].mxu0
    %v2971 = vpop.f32.mrb[0].mxu0
    %2972 = vdwg.mxu0
    %v2974 = vsel %vm2207, %v2506, 0
    %v2977 = vsel %vm2515, %v680, 0
    %2979 = vmatprep.subr.bf16.mxu0 0
    %2980 = vmatpush1.bf16.msra.mxu0 %v2977
    %2981 = vmatprep.subr.bf16.mxu0 0
    %2982 = vmatpush1.bf16.msra.mxu0 0
    %2983 = vmatprep.subr.bf16.mxu0 0
    %2984 = vmatpush1.bf16.msra.mxu0 0
    %2985 = vmatprep.subr.bf16.mxu0 0
    %2986 = vmatpush1.bf16.msra.mxu0 0
    %2987 = vmatprep.subr.bf16.mxu0 0
    %2988 = vmatpush1.bf16.msra.mxu0 0
    %2989 = vmatprep.subr.bf16.mxu0 0
    %2990 = vmatpush1.bf16.msra.mxu0 0
    %2991 = vmatprep.subr.bf16.mxu0 0
    %2992 = vmatpush1.bf16.msra.mxu0 0
    %2993 = vmatprep.subr.bf16.mxu0 0
    %2994 = vmatpush1.bf16.msra.mxu0 0
    %2995 = vmatprep.subr.bf16.mxu0 0
    %2996 = vmatpush1.bf16.msra.mxu0 0
    %2997 = vmatprep.subr.bf16.mxu0 0
    %2998 = vmatpush1.bf16.msra.mxu0 0
    %2999 = vmatprep.subr.bf16.mxu0 0
    %3000 = vmatpush1.bf16.msra.mxu0 0
    %3001 = vmatprep.subr.bf16.mxu0 0
    %3002 = vmatpush1.bf16.msra.mxu0 0
    %3003 = vmatprep.subr.bf16.mxu0 0
    %3004 = vmatpush1.bf16.msra.mxu0 0
    %3005 = vmatprep.subr.bf16.mxu0 0
    %3006 = vmatpush1.bf16.msra.mxu0 0
    %3007 = vmatprep.subr.bf16.mxu0 0
    %3008 = vmatpush1.bf16.msra.mxu0 0
    %3009 = vmatprep.subr.bf16.mxu0 0
    %3010 = vmatpush1.bf16.msra.mxu0 0
    %3011 = vmatprep.mubr.bf16.mxu0 0
    %3012 = vmatmul.mubr.bf16.gmra.mrb[0].mxu0 %v2974
    %v3013 = vpop.f32.mrb[0].mxu0
    %v3014 = vadd.f32 0.0, %v3013
    %v3015 = vpop.f32.mrb[0].mxu0
    %v3016 = vpop.f32.mrb[0].mxu0
    %v3017 = vpop.f32.mrb[0].mxu0
    %3018 = vdwg.mxu0
    %v3020 = vsel %vm2207, %v2507, 0
    %v3023 = vsel %vm2515, %v681, 0
    %3025 = vmatprep.subr.bf16.mxu0 0
    %3026 = vmatpush1.bf16.msra.mxu0 %v3023
    %3027 = vmatprep.subr.bf16.mxu0 0
    %3028 = vmatpush1.bf16.msra.mxu0 0
    %3029 = vmatprep.subr.bf16.mxu0 0
    %3030 = vmatpush1.bf16.msra.mxu0 0
    %3031 = vmatprep.subr.bf16.mxu0 0
    %3032 = vmatpush1.bf16.msra.mxu0 0
    %3033 = vmatprep.subr.bf16.mxu0 0
    %3034 = vmatpush1.bf16.msra.mxu0 0
    %3035 = vmatprep.subr.bf16.mxu0 0
    %3036 = vmatpush1.bf16.msra.mxu0 0
    %3037 = vmatprep.subr.bf16.mxu0 0
    %3038 = vmatpush1.bf16.msra.mxu0 0
    %3039 = vmatprep.subr.bf16.mxu0 0
    %3040 = vmatpush1.bf16.msra.mxu0 0
    %3041 = vmatprep.subr.bf16.mxu0 0
    %3042 = vmatpush1.bf16.msra.mxu0 0
    %3043 = vmatprep.subr.bf16.mxu0 0
    %3044 = vmatpush1.bf16.msra.mxu0 0
    %3045 = vmatprep.subr.bf16.mxu0 0
    %3046 = vmatpush1.bf16.msra.mxu0 0
    %3047 = vmatprep.subr.bf16.mxu0 0
    %3048 = vmatpush1.bf16.msra.mxu0 0
    %3049 = vmatprep.subr.bf16.mxu0 0
    %3050 = vmatpush1.bf16.msra.mxu0 0
    %3051 = vmatprep.subr.bf16.mxu0 0
    %3052 = vmatpush1.bf16.msra.mxu0 0
    %3053 = vmatprep.subr.bf16.mxu0 0
    %3054 = vmatpush1.bf16.msra.mxu0 0
    %3055 = vmatprep.subr.bf16.mxu0 0
    %3056 = vmatpush1.bf16.msra.mxu0 0
    %3057 = vmatprep.mubr.bf16.mxu0 0
    %3058 = vmatmul.mubr.bf16.gmra.mrb[0].mxu0 %v3020
    %v3059 = vpop.f32.mrb[0].mxu0
    %v3060 = vadd.f32 0.0, %v3059
    %v3061 = vpop.f32.mrb[0].mxu0
    %v3062 = vpop.f32.mrb[0].mxu0
    %v3063 = vpop.f32.mrb[0].mxu0
    %3064 = vdwg.mxu0
    %v3066 = vsel %vm2207, %v2508, 0
    %v3069 = vsel %vm2515, %v682, 0
    %3071 = vmatprep.subr.bf16.mxu0 0
    %3072 = vmatpush1.bf16.msra.mxu0 %v3069
    %3073 = vmatprep.subr.bf16.mxu0 0
    %3074 = vmatpush1.bf16.msra.mxu0 0
    %3075 = vmatprep.subr.bf16.mxu0 0
    %3076 = vmatpush1.bf16.msra.mxu0 0
    %3077 = vmatprep.subr.bf16.mxu0 0
    %3078 = vmatpush1.bf16.msra.mxu0 0
    %3079 = vmatprep.subr.bf16.mxu0 0
    %3080 = vmatpush1.bf16.msra.mxu0 0
    %3081 = vmatprep.subr.bf16.mxu0 0
    %3082 = vmatpush1.bf16.msra.mxu0 0
    %3083 = vmatprep.subr.bf16.mxu0 0
    %3084 = vmatpush1.bf16.msra.mxu0 0
    %3085 = vmatprep.subr.bf16.mxu0 0
    %3086 = vmatpush1.bf16.msra.mxu0 0
    %3087 = vmatprep.subr.bf16.mxu0 0
    %3088 = vmatpush1.bf16.msra.mxu0 0
    %3089 = vmatprep.subr.bf16.mxu0 0
    %3090 = vmatpush1.bf16.msra.mxu0 0
    %3091 = vmatprep.subr.bf16.mxu0 0
    %3092 = vmatpush1.bf16.msra.mxu0 0
    %3093 = vmatprep.subr.bf16.mxu0 0
    %3094 = vmatpush1.bf16.msra.mxu0 0
    %3095 = vmatprep.subr.bf16.mxu0 0
    %3096 = vmatpush1.bf16.msra.mxu0 0
    %3097 = vmatprep.subr.bf16.mxu0 0
    %3098 = vmatpush1.bf16.msra.mxu0 0
    %3099 = vmatprep.subr.bf16.mxu0 0
    %3100 = vmatpush1.bf16.msra.mxu0 0
    %3101 = vmatprep.subr.bf16.mxu0 0
    %3102 = vmatpush1.bf16.msra.mxu0 0
    %3103 = vmatprep.mubr.bf16.mxu0 0
    %3104 = vmatmul.mubr.bf16.gmra.mrb[0].mxu0 %v3066
    %v3105 = vpop.f32.mrb[0].mxu0
    %v3106 = vadd.f32 0.0, %v3105
    %v3107 = vpop.f32.mrb[0].mxu0
    %v3108 = vpop.f32.mrb[0].mxu0
    %v3109 = vpop.f32.mrb[0].mxu0
    %3110 = vdwg.mxu0
    %v3112 = vsel %vm2207, %v2509, 0
    %v3115 = vsel %vm2515, %v683, 0
    %3117 = vmatprep.subr.bf16.mxu0 0
    %3118 = vmatpush1.bf16.msra.mxu0 %v3115
    %3119 = vmatprep.subr.bf16.mxu0 0
    %3120 = vmatpush1.bf16.msra.mxu0 0
    %3121 = vmatprep.subr.bf16.mxu0 0
    %3122 = vmatpush1.bf16.msra.mxu0 0
    %3123 = vmatprep.subr.bf16.mxu0 0
    %3124 = vmatpush1.bf16.msra.mxu0 0
    %3125 = vmatprep.subr.bf16.mxu0 0
    %3126 = vmatpush1.bf16.msra.mxu0 0
    %3127 = vmatprep.subr.bf16.mxu0 0
    %3128 = vmatpush1.bf16.msra.mxu0 0
    %3129 = vmatprep.subr.bf16.mxu0 0
    %3130 = vmatpush1.bf16.msra.mxu0 0
    %3131 = vmatprep.subr.bf16.mxu0 0
    %3132 = vmatpush1.bf16.msra.mxu0 0
    %3133 = vmatprep.subr.bf16.mxu0 0
    %3134 = vmatpush1.bf16.msra.mxu0 0
    %3135 = vmatprep.subr.bf16.mxu0 0
    %3136 = vmatpush1.bf16.msra.mxu0 0
    %3137 = vmatprep.subr.bf16.mxu0 0
    %3138 = vmatpush1.bf16.msra.mxu0 0
    %3139 = vmatprep.subr.bf16.mxu0 0
    %3140 = vmatpush1.bf16.msra.mxu0 0
    %3141 = vmatprep.subr.bf16.mxu0 0
    %3142 = vmatpush1.bf16.msra.mxu0 0
    %3143 = vmatprep.subr.bf16.mxu0 0
    %3144 = vmatpush1.bf16.msra.mxu0 0
    %3145 = vmatprep.subr.bf16.mxu0 0
    %3146 = vmatpush1.bf16.msra.mxu0 0
    %3147 = vmatprep.subr.bf16.mxu0 0
    %3148 = vmatpush1.bf16.msra.mxu0 0
    %3149 = vmatprep.mubr.bf16.mxu0 0
    %3150 = vmatmul.mubr.bf16.gmra.mrb[0].mxu0 %v3112
    %v3151 = vpop.f32.mrb[0].mxu0
    %v3152 = vadd.f32 0.0, %v3151
    %v3153 = vpop.f32.mrb[0].mxu0
    %v3154 = vpop.f32.mrb[0].mxu0
    %v3155 = vpop.f32.mrb[0].mxu0
    %3156 = vdwg.mxu0
    %v3158 = vsel %vm2207, %v2510, 0
    %v3161 = vsel %vm2515, %v684, 0
    %3163 = vmatprep.subr.bf16.mxu0 0
    %3164 = vmatpush1.bf16.msra.mxu0 %v3161
    %3165 = vmatprep.subr.bf16.mxu0 0
    %3166 = vmatpush1.bf16.msra.mxu0 0
    %3167 = vmatprep.subr.bf16.mxu0 0
    %3168 = vmatpush1.bf16.msra.mxu0 0
    %3169 = vmatprep.subr.bf16.mxu0 0
    %3170 = vmatpush1.bf16.msra.mxu0 0
    %3171 = vmatprep.subr.bf16.mxu0 0
    %3172 = vmatpush1.bf16.msra.mxu0 0
    %3173 = vmatprep.subr.bf16.mxu0 0
    %3174 = vmatpush1.bf16.msra.mxu0 0
    %3175 = vmatprep.subr.bf16.mxu0 0
    %3176 = vmatpush1.bf16.msra.mxu0 0
    %3177 = vmatprep.subr.bf16.mxu0 0
    %3178 = vmatpush1.bf16.msra.mxu0 0
    %3179 = vmatprep.subr.bf16.mxu0 0
    %3180 = vmatpush1.bf16.msra.mxu0 0
    %3181 = vmatprep.subr.bf16.mxu0 0
    %3182 = vmatpush1.bf16.msra.mxu0 0
    %3183 = vmatprep.subr.bf16.mxu0 0
    %3184 = vmatpush1.bf16.msra.mxu0 0
    %3185 = vmatprep.subr.bf16.mxu0 0
    %3186 = vmatpush1.bf16.msra.mxu0 0
    %3187 = vmatprep.subr.bf16.mxu0 0
    %3188 = vmatpush1.bf16.msra.mxu0 0
    %3189 = vmatprep.subr.bf16.mxu0 0
    %3190 = vmatpush1.bf16.msra.mxu0 0
    %3191 = vmatprep.subr.bf16.mxu0 0
    %3192 = vmatpush1.bf16.msra.mxu0 0
    %3193 = vmatprep.subr.bf16.mxu0 0
    %3194 = vmatpush1.bf16.msra.mxu0 0
    %3195 = vmatprep.mubr.bf16.mxu0 0
    %3196 = vmatmul.mubr.bf16.gmra.mrb[0].mxu0 %v3158
    %v3197 = vpop.f32.mrb[0].mxu0
    %v3198 = vadd.f32 0.0, %v3197
    %v3199 = vpop.f32.mrb[0].mxu0
    %v3200 = vpop.f32.mrb[0].mxu0
    %v3201 = vpop.f32.mrb[0].mxu0
    %3202 = vdwg.mxu0
    %v3204 = vsel %vm2207, %v2511, 0
    %v3207 = vsel %vm2515, %v685, 0
    %3209 = vmatprep.subr.bf16.mxu0 0
    %3210 = vmatpush1.bf16.msra.mxu0 %v3207
    %3211 = vmatprep.subr.bf16.mxu0 0
    %3212 = vmatpush1.bf16.msra.mxu0 0
    %3213 = vmatprep.subr.bf16.mxu0 0
    %3214 = vmatpush1.bf16.msra.mxu0 0
    %3215 = vmatprep.subr.bf16.mxu0 0
    %3216 = vmatpush1.bf16.msra.mxu0 0
    %3217 = vmatprep.subr.bf16.mxu0 0
    %3218 = vmatpush1.bf16.msra.mxu0 0
    %3219 = vmatprep.subr.bf16.mxu0 0
    %3220 = vmatpush1.bf16.msra.mxu0 0
    %3221 = vmatprep.subr.bf16.mxu0 0
    %3222 = vmatpush1.bf16.msra.mxu0 0
    %3223 = vmatprep.subr.bf16.mxu0 0
    %3224 = vmatpush1.bf16.msra.mxu0 0
    %3225 = vmatprep.subr.bf16.mxu0 0
    %3226 = vmatpush1.bf16.msra.mxu0 0
    %3227 = vmatprep.subr.bf16.mxu0 0
    %3228 = vmatpush1.bf16.msra.mxu0 0
    %3229 = vmatprep.subr.bf16.mxu0 0
    %3230 = vmatpush1.bf16.msra.mxu0 0
    %3231 = vmatprep.subr.bf16.mxu0 0
    %3232 = vmatpush1.bf16.msra.mxu0 0
    %3233 = vmatprep.subr.bf16.mxu0 0
    %3234 = vmatpush1.bf16.msra.mxu0 0
    %3235 = vmatprep.subr.bf16.mxu0 0
    %3236 = vmatpush1.bf16.msra.mxu0 0
    %3237 = vmatprep.subr.bf16.mxu0 0
    %3238 = vmatpush1.bf16.msra.mxu0 0
    %3239 = vmatprep.subr.bf16.mxu0 0
    %3240 = vmatpush1.bf16.msra.mxu0 0
    %3241 = vmatprep.mubr.bf16.mxu0 0
    %3242 = vmatmul.mubr.bf16.gmra.mrb[0].mxu0 %v3204
    %v3243 = vpop.f32.mrb[0].mxu0
    %v3244 = vadd.f32 0.0, %v3243
    %v3245 = vpop.f32.mrb[0].mxu0
    %v3246 = vpop.f32.mrb[0].mxu0
    %v3247 = vpop.f32.mrb[0].mxu0
    %3248 = vdwg.mxu0
    %3250 = vrot.lane.b32.xlu0 %v558, 64
    %v3251 = vpop.permute.xlu0 %3250
    %v3254 = vsel %vm686, %v2480, 0
    %3256 = vmatprep.subr.bf16.mxu0 0
    %3257 = vmatpush1.bf16.msra.mxu0 %v3251
    %3258 = vmatprep.subr.bf16.mxu0 0
    %3259 = vmatpush1.bf16.msra.mxu0 0
    %3260 = vmatprep.subr.bf16.mxu0 0
    %3261 = vmatpush1.bf16.msra.mxu0 0
    %3262 = vmatprep.subr.bf16.mxu0 0
    %3263 = vmatpush1.bf16.msra.mxu0 0
    %3264 = vmatprep.subr.bf16.mxu0 0
    %3265 = vmatpush1.bf16.msra.mxu0 0
    %3266 = vmatprep.subr.bf16.mxu0 0
    %3267 = vmatpush1.bf16.msra.mxu0 0
    %3268 = vmatprep.subr.bf16.mxu0 0
    %3269 = vmatpush1.bf16.msra.mxu0 0
    %3270 = vmatprep.subr.bf16.mxu0 0
    %3271 = vmatpush1.bf16.msra.mxu0 0
    %3272 = vmatprep.subr.bf16.mxu0 0
    %3273 = vmatpush1.bf16.msra.mxu0 0
    %3274 = vmatprep.subr.bf16.mxu0 0
    %3275 = vmatpush1.bf16.msra.mxu0 0
    %3276 = vmatprep.subr.bf16.mxu0 0
    %3277 = vmatpush1.bf16.msra.mxu0 0
    %3278 = vmatprep.subr.bf16.mxu0 0
    %3279 = vmatpush1.bf16.msra.mxu0 0
    %3280 = vmatprep.subr.bf16.mxu0 0
    %3281 = vmatpush1.bf16.msra.mxu0 0
    %3282 = vmatprep.subr.bf16.mxu0 0
    %3283 = vmatpush1.bf16.msra.mxu0 0
    %3284 = vmatprep.subr.bf16.mxu0 0
    %3285 = vmatpush1.bf16.msra.mxu0 0
    %3286 = vmatprep.subr.bf16.mxu0 0
    %3287 = vmatpush1.bf16.msra.mxu0 0
    %3288 = vmatprep.mubr.bf16.mxu0 0
    %3289 = vmatmul.mubr.bf16.gmra.mrb[0].mxu0 %v3254
    %v3290 = vpop.f32.mrb[0].mxu0
    %v3291 = vadd.f32 %v2554, %v3290
    %v3292 = vpop.f32.mrb[0].mxu0
    %v3293 = vpop.f32.mrb[0].mxu0
    %v3294 = vpop.f32.mrb[0].mxu0
    %3295 = vdwg.mxu0
    %3297 = vrot.lane.b32.xlu0 %v559, 64
    %v3298 = vpop.permute.xlu0 %3297
    %v3301 = vsel %vm686, %v2481, 0
    %3303 = vmatprep.subr.bf16.mxu0 0
    %3304 = vmatpush1.bf16.msra.mxu0 %v3298
    %3305 = vmatprep.subr.bf16.mxu0 0
    %3306 = vmatpush1.bf16.msra.mxu0 0
    %3307 = vmatprep.subr.bf16.mxu0 0
    %3308 = vmatpush1.bf16.msra.mxu0 0
    %3309 = vmatprep.subr.bf16.mxu0 0
    %3310 = vmatpush1.bf16.msra.mxu0 0
    %3311 = vmatprep.subr.bf16.mxu0 0
    %3312 = vmatpush1.bf16.msra.mxu0 0
    %3313 = vmatprep.subr.bf16.mxu0 0
    %3314 = vmatpush1.bf16.msra.mxu0 0
    %3315 = vmatprep.subr.bf16.mxu0 0
    %3316 = vmatpush1.bf16.msra.mxu0 0
    %3317 = vmatprep.subr.bf16.mxu0 0
    %3318 = vmatpush1.bf16.msra.mxu0 0
    %3319 = vmatprep.subr.bf16.mxu0 0
    %3320 = vmatpush1.bf16.msra.mxu0 0
    %3321 = vmatprep.subr.bf16.mxu0 0
    %3322 = vmatpush1.bf16.msra.mxu0 0
    %3323 = vmatprep.subr.bf16.mxu0 0
    %3324 = vmatpush1.bf16.msra.mxu0 0
    %3325 = vmatprep.subr.bf16.mxu0 0
    %3326 = vmatpush1.bf16.msra.mxu0 0
    %3327 = vmatprep.subr.bf16.mxu0 0
    %3328 = vmatpush1.bf16.msra.mxu0 0
    %3329 = vmatprep.subr.bf16.mxu0 0
    %3330 = vmatpush1.bf16.msra.mxu0 0
    %3331 = vmatprep.subr.bf16.mxu0 0
    %3332 = vmatpush1.bf16.msra.mxu0 0
    %3333 = vmatprep.subr.bf16.mxu0 0
    %3334 = vmatpush1.bf16.msra.mxu0 0
    %3335 = vmatprep.mubr.bf16.mxu0 0
    %3336 = vmatmul.mubr.bf16.gmra.mrb[0].mxu0 %v3301
    %v3337 = vpop.f32.mrb[0].mxu0
    %v3338 = vadd.f32 %v2600, %v3337
    %v3339 = vpop.f32.mrb[0].mxu0
    %v3340 = vpop.f32.mrb[0].mxu0
    %v3341 = vpop.f32.mrb[0].mxu0
    %3342 = vdwg.mxu0
    %3344 = vrot.lane.b32.xlu0 %v560, 64
    %v3345 = vpop.permute.xlu0 %3344
    %v3348 = vsel %vm686, %v2482, 0
    %3350 = vmatprep.subr.bf16.mxu0 0
    %3351 = vmatpush1.bf16.msra.mxu0 %v3345
    %3352 = vmatprep.subr.bf16.mxu0 0
    %3353 = vmatpush1.bf16.msra.mxu0 0
    %3354 = vmatprep.subr.bf16.mxu0 0
    %3355 = vmatpush1.bf16.msra.mxu0 0
    %3356 = vmatprep.subr.bf16.mxu0 0
    %3357 = vmatpush1.bf16.msra.mxu0 0
    %3358 = vmatprep.subr.bf16.mxu0 0
    %3359 = vmatpush1.bf16.msra.mxu0 0
    %3360 = vmatprep.subr.bf16.mxu0 0
    %3361 = vmatpush1.bf16.msra.mxu0 0
    %3362 = vmatprep.subr.bf16.mxu0 0
    %3363 = vmatpush1.bf16.msra.mxu0 0
    %3364 = vmatprep.subr.bf16.mxu0 0
    %3365 = vmatpush1.bf16.msra.mxu0 0
    %3366 = vmatprep.subr.bf16.mxu0 0
    %3367 = vmatpush1.bf16.msra.mxu0 0
    %3368 = vmatprep.subr.bf16.mxu0 0
    %3369 = vmatpush1.bf16.msra.mxu0 0
    %3370 = vmatprep.subr.bf16.mxu0 0
    %3371 = vmatpush1.bf16.msra.mxu0 0
    %3372 = vmatprep.subr.bf16.mxu0 0
    %3373 = vmatpush1.bf16.msra.mxu0 0
    %3374 = vmatprep.subr.bf16.mxu0 0
    %3375 = vmatpush1.bf16.msra.mxu0 0
    %3376 = vmatprep.subr.bf16.mxu0 0
    %3377 = vmatpush1.bf16.msra.mxu0 0
    %3378 = vmatprep.subr.bf16.mxu0 0
    %3379 = vmatpush1.bf16.msra.mxu0 0
    %3380 = vmatprep.subr.bf16.mxu0 0
    %3381 = vmatpush1.bf16.msra.mxu0 0
    %3382 = vmatprep.mubr.bf16.mxu0 0
    %3383 = vmatmul.mubr.bf16.gmra.mrb[0].mxu0 %v3348
    %v3384 = vpop.f32.mrb[0].mxu0
    %v3385 = vadd.f32 %v2646, %v3384
    %v3386 = vpop.f32.mrb[0].mxu0
    %v3387 = vpop.f32.mrb[0].mxu0
    %v3388 = vpop.f32.mrb[0].mxu0
    %3389 = vdwg.mxu0
    %3391 = vrot.lane.b32.xlu0 %v561, 64
    %v3392 = vpop.permute.xlu0 %3391
    %v3395 = vsel %vm686, %v2483, 0
    %3397 = vmatprep.subr.bf16.mxu0 0
    %3398 = vmatpush1.bf16.msra.mxu0 %v3392
    %3399 = vmatprep.subr.bf16.mxu0 0
    %3400 = vmatpush1.bf16.msra.mxu0 0
    %3401 = vmatprep.subr.bf16.mxu0 0
    %3402 = vmatpush1.bf16.msra.mxu0 0
    %3403 = vmatprep.subr.bf16.mxu0 0
    %3404 = vmatpush1.bf16.msra.mxu0 0
    %3405 = vmatprep.subr.bf16.mxu0 0
    %3406 = vmatpush1.bf16.msra.mxu0 0
    %3407 = vmatprep.subr.bf16.mxu0 0
    %3408 = vmatpush1.bf16.msra.mxu0 0
    %3409 = vmatprep.subr.bf16.mxu0 0
    %3410 = vmatpush1.bf16.msra.mxu0 0
    %3411 = vmatprep.subr.bf16.mxu0 0
    %3412 = vmatpush1.bf16.msra.mxu0 0
    %3413 = vmatprep.subr.bf16.mxu0 0
    %3414 = vmatpush1.bf16.msra.mxu0 0
    %3415 = vmatprep.subr.bf16.mxu0 0
    %3416 = vmatpush1.bf16.msra.mxu0 0
    %3417 = vmatprep.subr.bf16.mxu0 0
    %3418 = vmatpush1.bf16.msra.mxu0 0
    %3419 = vmatprep.subr.bf16.mxu0 0
    %3420 = vmatpush1.bf16.msra.mxu0 0
    %3421 = vmatprep.subr.bf16.mxu0 0
    %3422 = vmatpush1.bf16.msra.mxu0 0
    %3423 = vmatprep.subr.bf16.mxu0 0
    %3424 = vmatpush1.bf16.msra.mxu0 0
    %3425 = vmatprep.subr.bf16.mxu0 0
    %3426 = vmatpush1.bf16.msra.mxu0 0
    %3427 = vmatprep.subr.bf16.mxu0 0
    %3428 = vmatpush1.bf16.msra.mxu0 0
    %3429 = vmatprep.mubr.bf16.mxu0 0
    %3430 = vmatmul.mubr.bf16.gmra.mrb[0].mxu0 %v3395
    %v3431 = vpop.f32.mrb[0].mxu0
    %v3432 = vadd.f32 %v2692, %v3431
    %v3433 = vpop.f32.mrb[0].mxu0
    %v3434 = vpop.f32.mrb[0].mxu0
    %v3435 = vpop.f32.mrb[0].mxu0
    %3436 = vdwg.mxu0
    %3438 = vrot.lane.b32.xlu0 %v562, 64
    %v3439 = vpop.permute.xlu0 %3438
    %v3442 = vsel %vm686, %v2484, 0
    %3444 = vmatprep.subr.bf16.mxu0 0
    %3445 = vmatpush1.bf16.msra.mxu0 %v3439
    %3446 = vmatprep.subr.bf16.mxu0 0
    %3447 = vmatpush1.bf16.msra.mxu0 0
    %3448 = vmatprep.subr.bf16.mxu0 0
    %3449 = vmatpush1.bf16.msra.mxu0 0
    %3450 = vmatprep.subr.bf16.mxu0 0
    %3451 = vmatpush1.bf16.msra.mxu0 0
    %3452 = vmatprep.subr.bf16.mxu0 0
    %3453 = vmatpush1.bf16.msra.mxu0 0
    %3454 = vmatprep.subr.bf16.mxu0 0
    %3455 = vmatpush1.bf16.msra.mxu0 0
    %3456 = vmatprep.subr.bf16.mxu0 0
    %3457 = vmatpush1.bf16.msra.mxu0 0
    %3458 = vmatprep.subr.bf16.mxu0 0
    %3459 = vmatpush1.bf16.msra.mxu0 0
    %3460 = vmatprep.subr.bf16.mxu0 0
    %3461 = vmatpush1.bf16.msra.mxu0 0
    %3462 = vmatprep.subr.bf16.mxu0 0
    %3463 = vmatpush1.bf16.msra.mxu0 0
    %3464 = vmatprep.subr.bf16.mxu0 0
    %3465 = vmatpush1.bf16.msra.mxu0 0
    %3466 = vmatprep.subr.bf16.mxu0 0
    %3467 = vmatpush1.bf16.msra.mxu0 0
    %3468 = vmatprep.subr.bf16.mxu0 0
    %3469 = vmatpush1.bf16.msra.mxu0 0
    %3470 = vmatprep.subr.bf16.mxu0 0
    %3471 = vmatpush1.bf16.msra.mxu0 0
    %3472 = vmatprep.subr.bf16.mxu0 0
    %3473 = vmatpush1.bf16.msra.mxu0 0
    %3474 = vmatprep.subr.bf16.mxu0 0
    %3475 = vmatpush1.bf16.msra.mxu0 0
    %3476 = vmatprep.mubr.bf16.mxu0 0
    %3477 = vmatmul.mubr.bf16.gmra.mrb[0].mxu0 %v3442
    %v3478 = vpop.f32.mrb[0].mxu0
    %v3479 = vadd.f32 %v2738, %v3478
    %v3480 = vpop.f32.mrb[0].mxu0
    %v3481 = vpop.f32.mrb[0].mxu0
    %v3482 = vpop.f32.mrb[0].mxu0
    %3483 = vdwg.mxu0
    %3485 = vrot.lane.b32.xlu0 %v563, 64
    %v3486 = vpop.permute.xlu0 %3485
    %v3489 = vsel %vm686, %v2485, 0
    %3491 = vmatprep.subr.bf16.mxu0 0
    %3492 = vmatpush1.bf16.msra.mxu0 %v3486
    %3493 = vmatprep.subr.bf16.mxu0 0
    %3494 = vmatpush1.bf16.msra.mxu0 0
    %3495 = vmatprep.subr.bf16.mxu0 0
    %3496 = vmatpush1.bf16.msra.mxu0 0
    %3497 = vmatprep.subr.bf16.mxu0 0
    %3498 = vmatpush1.bf16.msra.mxu0 0
    %3499 = vmatprep.subr.bf16.mxu0 0
    %3500 = vmatpush1.bf16.msra.mxu0 0
    %3501 = vmatprep.subr.bf16.mxu0 0
    %3502 = vmatpush1.bf16.msra.mxu0 0
    %3503 = vmatprep.subr.bf16.mxu0 0
    %3504 = vmatpush1.bf16.msra.mxu0 0
    %3505 = vmatprep.subr.bf16.mxu0 0
    %3506 = vmatpush1.bf16.msra.mxu0 0
    %3507 = vmatprep.subr.bf16.mxu0 0
    %3508 = vmatpush1.bf16.msra.mxu0 0
    %3509 = vmatprep.subr.bf16.mxu0 0
    %3510 = vmatpush1.bf16.msra.mxu0 0
    %3511 = vmatprep.subr.bf16.mxu0 0
    %3512 = vmatpush1.bf16.msra.mxu0 0
    %3513 = vmatprep.subr.bf16.mxu0 0
    %3514 = vmatpush1.bf16.msra.mxu0 0
    %3515 = vmatprep.subr.bf16.mxu0 0
    %3516 = vmatpush1.bf16.msra.mxu0 0
    %3517 = vmatprep.subr.bf16.mxu0 0
    %3518 = vmatpush1.bf16.msra.mxu0 0
    %3519 = vmatprep.subr.bf16.mxu0 0
    %3520 = vmatpush1.bf16.msra.mxu0 0
    %3521 = vmatprep.subr.bf16.mxu0 0
    %3522 = vmatpush1.bf16.msra.mxu0 0
    %3523 = vmatprep.mubr.bf16.mxu0 0
    %3524 = vmatmul.mubr.bf16.gmra.mrb[0].mxu0 %v3489
    %v3525 = vpop.f32.mrb[0].mxu0
    %v3526 = vadd.f32 %v2784, %v3525
    %v3527 = vpop.f32.mrb[0].mxu0
    %v3528 = vpop.f32.mrb[0].mxu0
    %v3529 = vpop.f32.mrb[0].mxu0
    %3530 = vdwg.mxu0
    %3532 = vrot.lane.b32.xlu0 %v564, 64
    %v3533 = vpop.permute.xlu0 %3532
    %v3536 = vsel %vm686, %v2486, 0
    %3538 = vmatprep.subr.bf16.mxu0 0
    %3539 = vmatpush1.bf16.msra.mxu0 %v3533
    %3540 = vmatprep.subr.bf16.mxu0 0
    %3541 = vmatpush1.bf16.msra.mxu0 0
    %3542 = vmatprep.subr.bf16.mxu0 0
    %3543 = vmatpush1.bf16.msra.mxu0 0
    %3544 = vmatprep.subr.bf16.mxu0 0
    %3545 = vmatpush1.bf16.msra.mxu0 0
    %3546 = vmatprep.subr.bf16.mxu0 0
    %3547 = vmatpush1.bf16.msra.mxu0 0
    %3548 = vmatprep.subr.bf16.mxu0 0
    %3549 = vmatpush1.bf16.msra.mxu0 0
    %3550 = vmatprep.subr.bf16.mxu0 0
    %3551 = vmatpush1.bf16.msra.mxu0 0
    %3552 = vmatprep.subr.bf16.mxu0 0
    %3553 = vmatpush1.bf16.msra.mxu0 0
    %3554 = vmatprep.subr.bf16.mxu0 0
    %3555 = vmatpush1.bf16.msra.mxu0 0
    %3556 = vmatprep.subr.bf16.mxu0 0
    %3557 = vmatpush1.bf16.msra.mxu0 0
    %3558 = vmatprep.subr.bf16.mxu0 0
    %3559 = vmatpush1.bf16.msra.mxu0 0
    %3560 = vmatprep.subr.bf16.mxu0 0
    %3561 = vmatpush1.bf16.msra.mxu0 0
    %3562 = vmatprep.subr.bf16.mxu0 0
    %3563 = vmatpush1.bf16.msra.mxu0 0
    %3564 = vmatprep.subr.bf16.mxu0 0
    %3565 = vmatpush1.bf16.msra.mxu0 0
    %3566 = vmatprep.subr.bf16.mxu0 0
    %3567 = vmatpush1.bf16.msra.mxu0 0
    %3568 = vmatprep.subr.bf16.mxu0 0
    %3569 = vmatpush1.bf16.msra.mxu0 0
    %3570 = vmatprep.mubr.bf16.mxu0 0
    %3571 = vmatmul.mubr.bf16.gmra.mrb[0].mxu0 %v3536
    %v3572 = vpop.f32.mrb[0].mxu0
    %v3573 = vadd.f32 %v2830, %v3572
    %v3574 = vpop.f32.mrb[0].mxu0
    %v3575 = vpop.f32.mrb[0].mxu0
    %v3576 = vpop.f32.mrb[0].mxu0
    %3577 = vdwg.mxu0
    %3579 = vrot.lane.b32.xlu0 %v565, 64
    %v3580 = vpop.permute.xlu0 %3579
    %v3583 = vsel %vm686, %v2487, 0
    %3585 = vmatprep.subr.bf16.mxu0 0
    %3586 = vmatpush1.bf16.msra.mxu0 %v3580
    %3587 = vmatprep.subr.bf16.mxu0 0
    %3588 = vmatpush1.bf16.msra.mxu0 0
    %3589 = vmatprep.subr.bf16.mxu0 0
    %3590 = vmatpush1.bf16.msra.mxu0 0
    %3591 = vmatprep.subr.bf16.mxu0 0
    %3592 = vmatpush1.bf16.msra.mxu0 0
    %3593 = vmatprep.subr.bf16.mxu0 0
    %3594 = vmatpush1.bf16.msra.mxu0 0
    %3595 = vmatprep.subr.bf16.mxu0 0
    %3596 = vmatpush1.bf16.msra.mxu0 0
    %3597 = vmatprep.subr.bf16.mxu0 0
    %3598 = vmatpush1.bf16.msra.mxu0 0
    %3599 = vmatprep.subr.bf16.mxu0 0
    %3600 = vmatpush1.bf16.msra.mxu0 0
    %3601 = vmatprep.subr.bf16.mxu0 0
    %3602 = vmatpush1.bf16.msra.mxu0 0
    %3603 = vmatprep.subr.bf16.mxu0 0
    %3604 = vmatpush1.bf16.msra.mxu0 0
    %3605 = vmatprep.subr.bf16.mxu0 0
    %3606 = vmatpush1.bf16.msra.mxu0 0
    %3607 = vmatprep.subr.bf16.mxu0 0
    %3608 = vmatpush1.bf16.msra.mxu0 0
    %3609 = vmatprep.subr.bf16.mxu0 0
    %3610 = vmatpush1.bf16.msra.mxu0 0
    %3611 = vmatprep.subr.bf16.mxu0 0
    %3612 = vmatpush1.bf16.msra.mxu0 0
    %3613 = vmatprep.subr.bf16.mxu0 0
    %3614 = vmatpush1.bf16.msra.mxu0 0
    %3615 = vmatprep.subr.bf16.mxu0 0
    %3616 = vmatpush1.bf16.msra.mxu0 0
    %3617 = vmatprep.mubr.bf16.mxu0 0
    %3618 = vmatmul.mubr.bf16.gmra.mrb[0].mxu0 %v3583
    %v3619 = vpop.f32.mrb[0].mxu0
    %v3620 = vadd.f32 %v2876, %v3619
    %v3621 = vpop.f32.mrb[0].mxu0
    %v3622 = vpop.f32.mrb[0].mxu0
    %v3623 = vpop.f32.mrb[0].mxu0
    %3624 = vdwg.mxu0
    %3626 = vrot.lane.b32.xlu0 %v566, 64
    %v3627 = vpop.permute.xlu0 %3626
    %v3630 = vsel %vm686, %v2488, 0
    %3632 = vmatprep.subr.bf16.mxu0 0
    %3633 = vmatpush1.bf16.msra.mxu0 %v3627
    %3634 = vmatprep.subr.bf16.mxu0 0
    %3635 = vmatpush1.bf16.msra.mxu0 0
    %3636 = vmatprep.subr.bf16.mxu0 0
    %3637 = vmatpush1.bf16.msra.mxu0 0
    %3638 = vmatprep.subr.bf16.mxu0 0
    %3639 = vmatpush1.bf16.msra.mxu0 0
    %3640 = vmatprep.subr.bf16.mxu0 0
    %3641 = vmatpush1.bf16.msra.mxu0 0
    %3642 = vmatprep.subr.bf16.mxu0 0
    %3643 = vmatpush1.bf16.msra.mxu0 0
    %3644 = vmatprep.subr.bf16.mxu0 0
    %3645 = vmatpush1.bf16.msra.mxu0 0
    %3646 = vmatprep.subr.bf16.mxu0 0
    %3647 = vmatpush1.bf16.msra.mxu0 0
    %3648 = vmatprep.subr.bf16.mxu0 0
    %3649 = vmatpush1.bf16.msra.mxu0 0
    %3650 = vmatprep.subr.bf16.mxu0 0
    %3651 = vmatpush1.bf16.msra.mxu0 0
    %3652 = vmatprep.subr.bf16.mxu0 0
    %3653 = vmatpush1.bf16.msra.mxu0 0
    %3654 = vmatprep.subr.bf16.mxu0 0
    %3655 = vmatpush1.bf16.msra.mxu0 0
    %3656 = vmatprep.subr.bf16.mxu0 0
    %3657 = vmatpush1.bf16.msra.mxu0 0
    %3658 = vmatprep.subr.bf16.mxu0 0
    %3659 = vmatpush1.bf16.msra.mxu0 0
    %3660 = vmatprep.subr.bf16.mxu0 0
    %3661 = vmatpush1.bf16.msra.mxu0 0
    %3662 = vmatprep.subr.bf16.mxu0 0
    %3663 = vmatpush1.bf16.msra.mxu0 0
    %3664 = vmatprep.mubr.bf16.mxu0 0
    %3665 = vmatmul.mubr.bf16.gmra.mrb[0].mxu0 %v3630
    %v3666 = vpop.f32.mrb[0].mxu0
    %v3667 = vadd.f32 %v2922, %v3666
    %v3668 = vpop.f32.mrb[0].mxu0
    %v3669 = vpop.f32.mrb[0].mxu0
    %v3670 = vpop.f32.mrb[0].mxu0
    %3671 = vdwg.mxu0
    %3673 = vrot.lane.b32.xlu0 %v567, 64
    %v3674 = vpop.permute.xlu0 %3673
    %v3677 = vsel %vm686, %v2489, 0
    %3679 = vmatprep.subr.bf16.mxu0 0
    %3680 = vmatpush1.bf16.msra.mxu0 %v3674
    %3681 = vmatprep.subr.bf16.mxu0 0
    %3682 = vmatpush1.bf16.msra.mxu0 0
    %3683 = vmatprep.subr.bf16.mxu0 0
    %3684 = vmatpush1.bf16.msra.mxu0 0
    %3685 = vmatprep.subr.bf16.mxu0 0
    %3686 = vmatpush1.bf16.msra.mxu0 0
    %3687 = vmatprep.subr.bf16.mxu0 0
    %3688 = vmatpush1.bf16.msra.mxu0 0
    %3689 = vmatprep.subr.bf16.mxu0 0
    %3690 = vmatpush1.bf16.msra.mxu0 0
    %3691 = vmatprep.subr.bf16.mxu0 0
    %3692 = vmatpush1.bf16.msra.mxu0 0
    %3693 = vmatprep.subr.bf16.mxu0 0
    %3694 = vmatpush1.bf16.msra.mxu0 0
    %3695 = vmatprep.subr.bf16.mxu0 0
    %3696 = vmatpush1.bf16.msra.mxu0 0
    %3697 = vmatprep.subr.bf16.mxu0 0
    %3698 = vmatpush1.bf16.msra.mxu0 0
    %3699 = vmatprep.subr.bf16.mxu0 0
    %3700 = vmatpush1.bf16.msra.mxu0 0
    %3701 = vmatprep.subr.bf16.mxu0 0
    %3702 = vmatpush1.bf16.msra.mxu0 0
    %3703 = vmatprep.subr.bf16.mxu0 0
    %3704 = vmatpush1.bf16.msra.mxu0 0
    %3705 = vmatprep.subr.bf16.mxu0 0
    %3706 = vmatpush1.bf16.msra.mxu0 0
    %3707 = vmatprep.subr.bf16.mxu0 0
    %3708 = vmatpush1.bf16.msra.mxu0 0
    %3709 = vmatprep.subr.bf16.mxu0 0
    %3710 = vmatpush1.bf16.msra.mxu0 0
    %3711 = vmatprep.mubr.bf16.mxu0 0
    %3712 = vmatmul.mubr.bf16.gmra.mrb[0].mxu0 %v3677
    %v3713 = vpop.f32.mrb[0].mxu0
    %v3714 = vadd.f32 %v2968, %v3713
    %v3715 = vpop.f32.mrb[0].mxu0
    %v3716 = vpop.f32.mrb[0].mxu0
    %v3717 = vpop.f32.mrb[0].mxu0
    %3718 = vdwg.mxu0
    %3720 = vrot.lane.b32.xlu0 %v568, 64
    %v3721 = vpop.permute.xlu0 %3720
    %v3724 = vsel %vm686, %v2490, 0
    %3726 = vmatprep.subr.bf16.mxu0 0
    %3727 = vmatpush1.bf16.msra.mxu0 %v3721
    %3728 = vmatprep.subr.bf16.mxu0 0
    %3729 = vmatpush1.bf16.msra.mxu0 0
    %3730 = vmatprep.subr.bf16.mxu0 0
    %3731 = vmatpush1.bf16.msra.mxu0 0
    %3732 = vmatprep.subr.bf16.mxu0 0
    %3733 = vmatpush1.bf16.msra.mxu0 0
    %3734 = vmatprep.subr.bf16.mxu0 0
    %3735 = vmatpush1.bf16.msra.mxu0 0
    %3736 = vmatprep.subr.bf16.mxu0 0
    %3737 = vmatpush1.bf16.msra.mxu0 0
    %3738 = vmatprep.subr.bf16.mxu0 0
    %3739 = vmatpush1.bf16.msra.mxu0 0
    %3740 = vmatprep.subr.bf16.mxu0 0
    %3741 = vmatpush1.bf16.msra.mxu0 0
    %3742 = vmatprep.subr.bf16.mxu0 0
    %3743 = vmatpush1.bf16.msra.mxu0 0
    %3744 = vmatprep.subr.bf16.mxu0 0
    %3745 = vmatpush1.bf16.msra.mxu0 0
    %3746 = vmatprep.subr.bf16.mxu0 0
    %3747 = vmatpush1.bf16.msra.mxu0 0
    %3748 = vmatprep.subr.bf16.mxu0 0
    %3749 = vmatpush1.bf16.msra.mxu0 0
    %3750 = vmatprep.subr.bf16.mxu0 0
    %3751 = vmatpush1.bf16.msra.mxu0 0
    %3752 = vmatprep.subr.bf16.mxu0 0
    %3753 = vmatpush1.bf16.msra.mxu0 0
    %3754 = vmatprep.subr.bf16.mxu0 0
    %3755 = vmatpush1.bf16.msra.mxu0 0
    %3756 = vmatprep.subr.bf16.mxu0 0
    %3757 = vmatpush1.bf16.msra.mxu0 0
    %3758 = vmatprep.mubr.bf16.mxu0 0
    %3759 = vmatmul.mubr.bf16.gmra.mrb[0].mxu0 %v3724
    %v3760 = vpop.f32.mrb[0].mxu0
    %v3761 = vadd.f32 %v3014, %v3760
    %v3762 = vpop.f32.mrb[0].mxu0
    %v3763 = vpop.f32.mrb[0].mxu0
    %v3764 = vpop.f32.mrb[0].mxu0
    %3765 = vdwg.mxu0
    %3767 = vrot.lane.b32.xlu0 %v569, 64
    %v3768 = vpop.permute.xlu0 %3767
    %v3771 = vsel %vm686, %v2491, 0
    %3773 = vmatprep.subr.bf16.mxu0 0
    %3774 = vmatpush1.bf16.msra.mxu0 %v3768
    %3775 = vmatprep.subr.bf16.mxu0 0
    %3776 = vmatpush1.bf16.msra.mxu0 0
    %3777 = vmatprep.subr.bf16.mxu0 0
    %3778 = vmatpush1.bf16.msra.mxu0 0
    %3779 = vmatprep.subr.bf16.mxu0 0
    %3780 = vmatpush1.bf16.msra.mxu0 0
    %3781 = vmatprep.subr.bf16.mxu0 0
    %3782 = vmatpush1.bf16.msra.mxu0 0
    %3783 = vmatprep.subr.bf16.mxu0 0
    %3784 = vmatpush1.bf16.msra.mxu0 0
    %3785 = vmatprep.subr.bf16.mxu0 0
    %3786 = vmatpush1.bf16.msra.mxu0 0
    %3787 = vmatprep.subr.bf16.mxu0 0
    %3788 = vmatpush1.bf16.msra.mxu0 0
    %3789 = vmatprep.subr.bf16.mxu0 0
    %3790 = vmatpush1.bf16.msra.mxu0 0
    %3791 = vmatprep.subr.bf16.mxu0 0
    %3792 = vmatpush1.bf16.msra.mxu0 0
    %3793 = vmatprep.subr.bf16.mxu0 0
    %3794 = vmatpush1.bf16.msra.mxu0 0
    %3795 = vmatprep.subr.bf16.mxu0 0
    %3796 = vmatpush1.bf16.msra.mxu0 0
    %3797 = vmatprep.subr.bf16.mxu0 0
    %3798 = vmatpush1.bf16.msra.mxu0 0
    %3799 = vmatprep.subr.bf16.mxu0 0
    %3800 = vmatpush1.bf16.msra.mxu0 0
    %3801 = vmatprep.subr.bf16.mxu0 0
    %3802 = vmatpush1.bf16.msra.mxu0 0
    %3803 = vmatprep.subr.bf16.mxu0 0
    %3804 = vmatpush1.bf16.msra.mxu0 0
    %3805 = vmatprep.mubr.bf16.mxu0 0
    %3806 = vmatmul.mubr.bf16.gmra.mrb[0].mxu0 %v3771
    %v3807 = vpop.f32.mrb[0].mxu0
    %v3808 = vadd.f32 %v3060, %v3807
    %v3809 = vpop.f32.mrb[0].mxu0
    %v3810 = vpop.f32.mrb[0].mxu0
    %v3811 = vpop.f32.mrb[0].mxu0
    %3812 = vdwg.mxu0
    %3814 = vrot.lane.b32.xlu0 %v570, 64
    %v3815 = vpop.permute.xlu0 %3814
    %v3818 = vsel %vm686, %v2492, 0
    %3820 = vmatprep.subr.bf16.mxu0 0
    %3821 = vmatpush1.bf16.msra.mxu0 %v3815
    %3822 = vmatprep.subr.bf16.mxu0 0
    %3823 = vmatpush1.bf16.msra.mxu0 0
    %3824 = vmatprep.subr.bf16.mxu0 0
    %3825 = vmatpush1.bf16.msra.mxu0 0
    %3826 = vmatprep.subr.bf16.mxu0 0
    %3827 = vmatpush1.bf16.msra.mxu0 0
    %3828 = vmatprep.subr.bf16.mxu0 0
    %3829 = vmatpush1.bf16.msra.mxu0 0
    %3830 = vmatprep.subr.bf16.mxu0 0
    %3831 = vmatpush1.bf16.msra.mxu0 0
    %3832 = vmatprep.subr.bf16.mxu0 0
    %3833 = vmatpush1.bf16.msra.mxu0 0
    %3834 = vmatprep.subr.bf16.mxu0 0
    %3835 = vmatpush1.bf16.msra.mxu0 0
    %3836 = vmatprep.subr.bf16.mxu0 0
    %3837 = vmatpush1.bf16.msra.mxu0 0
    %3838 = vmatprep.subr.bf16.mxu0 0
    %3839 = vmatpush1.bf16.msra.mxu0 0
    %3840 = vmatprep.subr.bf16.mxu0 0
    %3841 = vmatpush1.bf16.msra.mxu0 0
    %3842 = vmatprep.subr.bf16.mxu0 0
    %3843 = vmatpush1.bf16.msra.mxu0 0
    %3844 = vmatprep.subr.bf16.mxu0 0
    %3845 = vmatpush1.bf16.msra.mxu0 0
    %3846 = vmatprep.subr.bf16.mxu0 0
    %3847 = vmatpush1.bf16.msra.mxu0 0
    %3848 = vmatprep.subr.bf16.mxu0 0
    %3849 = vmatpush1.bf16.msra.mxu0 0
    %3850 = vmatprep.subr.bf16.mxu0 0
    %3851 = vmatpush1.bf16.msra.mxu0 0
    %3852 = vmatprep.mubr.bf16.mxu0 0
    %3853 = vmatmul.mubr.bf16.gmra.mrb[0].mxu0 %v3818
    %v3854 = vpop.f32.mrb[0].mxu0
    %v3855 = vadd.f32 %v3106, %v3854
    %v3856 = vpop.f32.mrb[0].mxu0
    %v3857 = vpop.f32.mrb[0].mxu0
    %v3858 = vpop.f32.mrb[0].mxu0
    %3859 = vdwg.mxu0
    %3861 = vrot.lane.b32.xlu0 %v571, 64
    %v3862 = vpop.permute.xlu0 %3861
    %v3865 = vsel %vm686, %v2493, 0
    %3867 = vmatprep.subr.bf16.mxu0 0
    %3868 = vmatpush1.bf16.msra.mxu0 %v3862
    %3869 = vmatprep.subr.bf16.mxu0 0
    %3870 = vmatpush1.bf16.msra.mxu0 0
    %3871 = vmatprep.subr.bf16.mxu0 0
    %3872 = vmatpush1.bf16.msra.mxu0 0
    %3873 = vmatprep.subr.bf16.mxu0 0
    %3874 = vmatpush1.bf16.msra.mxu0 0
    %3875 = vmatprep.subr.bf16.mxu0 0
    %3876 = vmatpush1.bf16.msra.mxu0 0
    %3877 = vmatprep.subr.bf16.mxu0 0
    %3878 = vmatpush1.bf16.msra.mxu0 0
    %3879 = vmatprep.subr.bf16.mxu0 0
    %3880 = vmatpush1.bf16.msra.mxu0 0
    %3881 = vmatprep.subr.bf16.mxu0 0
    %3882 = vmatpush1.bf16.msra.mxu0 0
    %3883 = vmatprep.subr.bf16.mxu0 0
    %3884 = vmatpush1.bf16.msra.mxu0 0
    %3885 = vmatprep.subr.bf16.mxu0 0
    %3886 = vmatpush1.bf16.msra.mxu0 0
    %3887 = vmatprep.subr.bf16.mxu0 0
    %3888 = vmatpush1.bf16.msra.mxu0 0
    %3889 = vmatprep.subr.bf16.mxu0 0
    %3890 = vmatpush1.bf16.msra.mxu0 0
    %3891 = vmatprep.subr.bf16.mxu0 0
    %3892 = vmatpush1.bf16.msra.mxu0 0
    %3893 = vmatprep.subr.bf16.mxu0 0
    %3894 = vmatpush1.bf16.msra.mxu0 0
    %3895 = vmatprep.subr.bf16.mxu0 0
    %3896 = vmatpush1.bf16.msra.mxu0 0
    %3897 = vmatprep.subr.bf16.mxu0 0
    %3898 = vmatpush1.bf16.msra.mxu0 0
    %3899 = vmatprep.mubr.bf16.mxu0 0
    %3900 = vmatmul.mubr.bf16.gmra.mrb[0].mxu0 %v3865
    %v3901 = vpop.f32.mrb[0].mxu0
    %v3902 = vadd.f32 %v3152, %v3901
    %v3903 = vpop.f32.mrb[0].mxu0
    %v3904 = vpop.f32.mrb[0].mxu0
    %v3905 = vpop.f32.mrb[0].mxu0
    %3906 = vdwg.mxu0
    %3908 = vrot.lane.b32.xlu0 %v572, 64
    %v3909 = vpop.permute.xlu0 %3908
    %v3912 = vsel %vm686, %v2494, 0
    %3914 = vmatprep.subr.bf16.mxu0 0
    %3915 = vmatpush1.bf16.msra.mxu0 %v3909
    %3916 = vmatprep.subr.bf16.mxu0 0
    %3917 = vmatpush1.bf16.msra.mxu0 0
    %3918 = vmatprep.subr.bf16.mxu0 0
    %3919 = vmatpush1.bf16.msra.mxu0 0
    %3920 = vmatprep.subr.bf16.mxu0 0
    %3921 = vmatpush1.bf16.msra.mxu0 0
    %3922 = vmatprep.subr.bf16.mxu0 0
    %3923 = vmatpush1.bf16.msra.mxu0 0
    %3924 = vmatprep.subr.bf16.mxu0 0
    %3925 = vmatpush1.bf16.msra.mxu0 0
    %3926 = vmatprep.subr.bf16.mxu0 0
    %3927 = vmatpush1.bf16.msra.mxu0 0
    %3928 = vmatprep.subr.bf16.mxu0 0
    %3929 = vmatpush1.bf16.msra.mxu0 0
    %3930 = vmatprep.subr.bf16.mxu0 0
    %3931 = vmatpush1.bf16.msra.mxu0 0
    %3932 = vmatprep.subr.bf16.mxu0 0
    %3933 = vmatpush1.bf16.msra.mxu0 0
    %3934 = vmatprep.subr.bf16.mxu0 0
    %3935 = vmatpush1.bf16.msra.mxu0 0
    %3936 = vmatprep.subr.bf16.mxu0 0
    %3937 = vmatpush1.bf16.msra.mxu0 0
    %3938 = vmatprep.subr.bf16.mxu0 0
    %3939 = vmatpush1.bf16.msra.mxu0 0
    %3940 = vmatprep.subr.bf16.mxu0 0
    %3941 = vmatpush1.bf16.msra.mxu0 0
    %3942 = vmatprep.subr.bf16.mxu0 0
    %3943 = vmatpush1.bf16.msra.mxu0 0
    %3944 = vmatprep.subr.bf16.mxu0 0
    %3945 = vmatpush1.bf16.msra.mxu0 0
    %3946 = vmatprep.mubr.bf16.mxu0 0
    %3947 = vmatmul.mubr.bf16.gmra.mrb[0].mxu0 %v3912
    %v3948 = vpop.f32.mrb[0].mxu0
    %v3949 = vadd.f32 %v3198, %v3948
    %v3950 = vpop.f32.mrb[0].mxu0
    %v3951 = vpop.f32.mrb[0].mxu0
    %v3952 = vpop.f32.mrb[0].mxu0
    %3953 = vdwg.mxu0
    %3955 = vrot.lane.b32.xlu0 %v573, 64
    %v3956 = vpop.permute.xlu0 %3955
    %v3959 = vsel %vm686, %v2495, 0
    %3961 = vmatprep.subr.bf16.mxu0 0
    %3962 = vmatpush1.bf16.msra.mxu0 %v3956
    %3963 = vmatprep.subr.bf16.mxu0 0
    %3964 = vmatpush1.bf16.msra.mxu0 0
    %3965 = vmatprep.subr.bf16.mxu0 0
    %3966 = vmatpush1.bf16.msra.mxu0 0
    %3967 = vmatprep.subr.bf16.mxu0 0
    %3968 = vmatpush1.bf16.msra.mxu0 0
    %3969 = vmatprep.subr.bf16.mxu0 0
    %3970 = vmatpush1.bf16.msra.mxu0 0
    %3971 = vmatprep.subr.bf16.mxu0 0
    %3972 = vmatpush1.bf16.msra.mxu0 0
    %3973 = vmatprep.subr.bf16.mxu0 0
    %3974 = vmatpush1.bf16.msra.mxu0 0
    %3975 = vmatprep.subr.bf16.mxu0 0
    %3976 = vmatpush1.bf16.msra.mxu0 0
    %3977 = vmatprep.subr.bf16.mxu0 0
    %3978 = vmatpush1.bf16.msra.mxu0 0
    %3979 = vmatprep.subr.bf16.mxu0 0
    %3980 = vmatpush1.bf16.msra.mxu0 0
    %3981 = vmatprep.subr.bf16.mxu0 0
    %3982 = vmatpush1.bf16.msra.mxu0 0
    %3983 = vmatprep.subr.bf16.mxu0 0
    %3984 = vmatpush1.bf16.msra.mxu0 0
    %3985 = vmatprep.subr.bf16.mxu0 0
    %3986 = vmatpush1.bf16.msra.mxu0 0
    %3987 = vmatprep.subr.bf16.mxu0 0
    %3988 = vmatpush1.bf16.msra.mxu0 0
    %3989 = vmatprep.subr.bf16.mxu0 0
    %3990 = vmatpush1.bf16.msra.mxu0 0
    %3991 = vmatprep.subr.bf16.mxu0 0
    %3992 = vmatpush1.bf16.msra.mxu0 0
    %3993 = vmatprep.mubr.bf16.mxu0 0
    %3994 = vmatmul.mubr.bf16.gmra.mrb[0].mxu0 %v3959
    %v3995 = vpop.f32.mrb[0].mxu0
    %v3996 = vadd.f32 %v3244, %v3995
    %v3997 = vpop.f32.mrb[0].mxu0
    %v3998 = vpop.f32.mrb[0].mxu0
    %v3999 = vpop.f32.mrb[0].mxu0
    %4000 = vdwg.mxu0
    %v4001 = vrcp.pop %v2464
    %v4002 = vrcp.pop %v2465
    %v4003 = vrcp.pop %v2466
    %v4004 = vrcp.pop %v2467
    %v4005 = vrcp.pop %v2468
    %v4006 = vrcp.pop %v2469
    %v4007 = vrcp.pop %v2470
    %v4008 = vrcp.pop %v2471
    %v4009 = vrcp.pop %v2472
    %v4010 = vrcp.pop %v2473
    %v4011 = vrcp.pop %v2474
    %v4012 = vrcp.pop %v2475
    %v4013 = vrcp.pop %v2476
    %v4014 = vrcp.pop %v2477
    %v4015 = vrcp.pop %v2478
    %v4016 = vrcp.pop %v2479
    %v4017 = vmul.f32 %v3291, %v4001
    %v4018 = vmul.f32 %v3338, %v4002
    %v4019 = vmul.f32 %v3385, %v4003
    %v4020 = vmul.f32 %v3432, %v4004
    %v4021 = vmul.f32 %v3479, %v4005
    %v4022 = vmul.f32 %v3526, %v4006
    %v4023 = vmul.f32 %v3573, %v4007
    %v4024 = vmul.f32 %v3620, %v4008
    %v4025 = vmul.f32 %v3667, %v4009
    %v4026 = vmul.f32 %v3714, %v4010
    %v4027 = vmul.f32 %v3761, %v4011
    %v4028 = vmul.f32 %v3808, %v4012
    %v4029 = vmul.f32 %v3855, %v4013
    %v4030 = vmul.f32 %v3902, %v4014
    %v4031 = vmul.f32 %v3949, %v4015
    %v4032 = vmul.f32 %v3996, %v4016
    %4037 = vrot.lane.b32.xlu0 %v4021, 16
    %v4038 = vpop.permute.xlu0 %4037
    %4039 = vrot.lane.b32.xlu0 %v4022, 16
    %v4040 = vpop.permute.xlu0 %4039
    %4041 = vrot.lane.b32.xlu0 %v4023, 16
    %v4042 = vpop.permute.xlu0 %4041
    %4043 = vrot.lane.b32.xlu0 %v4024, 16
    %v4044 = vpop.permute.xlu0 %4043
    %4053 = vrot.lane.b32.xlu0 %v4025, 32
    %v4054 = vpop.permute.xlu0 %4053
    %4055 = vrot.lane.b32.xlu0 %v4026, 32
    %v4056 = vpop.permute.xlu0 %4055
    %4057 = vrot.lane.b32.xlu0 %v4027, 32
    %v4058 = vpop.permute.xlu0 %4057
    %4059 = vrot.lane.b32.xlu0 %v4028, 32
    %v4060 = vpop.permute.xlu0 %4059
    %4069 = vrot.lane.b32.xlu0 %v4029, 48
    %v4070 = vpop.permute.xlu0 %4069
    %4071 = vrot.lane.b32.xlu0 %v4030, 48
    %v4072 = vpop.permute.xlu0 %4071
    %4073 = vrot.lane.b32.xlu0 %v4031, 48
    %v4074 = vpop.permute.xlu0 %4073
    %4075 = vrot.lane.b32.xlu0 %v4032, 48
    %v4076 = vpop.permute.xlu0 %4075
    %v4081 = vsel %vm686, %v4017, %v4038
    %v4082 = vsel %vm686, %v4018, %v4040
    %v4083 = vsel %vm686, %v4019, %v4042
    %v4084 = vsel %vm686, %v4020, %v4044
    %v4085 = vsel %vm34, %v4081, %v4054
    %v4086 = vsel %vm34, %v4082, %v4056
    %v4087 = vsel %vm34, %v4083, %v4058
    %v4088 = vsel %vm34, %v4084, %v4060
    %vm4089 = vcmask 392192
    %v4090 = vsel %vm4089, %v4085, %v4070
    %v4091 = vsel %vm4089, %v4086, %v4072
    %v4092 = vsel %vm4089, %v4087, %v4074
    %v4093 = vsel %vm4089, %v4088, %v4076
    %v4094 = vpack.c.bf16 %v4091, %v4090
    %v4095 = vpack.c.bf16 %v4093, %v4092
    %v4096 = vld [vmem:[%s5] sm:$0xf]
    %v4097 = vld [vmem:[%s5 + $0x4] sm:$0xf]
    %v4098 = vld [vmem:[%s5 + $0x8] sm:$0xf]
    %v4099 = vld [vmem:[%s5 + $0xc] sm:$0xf]
    %v4100 = vld [vmem:[%s5 + $0x10] sm:$0xf]
    %v4101 = vld [vmem:[%s5 + $0x14] sm:$0xf]
    %v4102 = vld [vmem:[%s5 + $0x18] sm:$0xf]
    %v4103 = vld [vmem:[%s5 + $0x1c] sm:$0xf]
    %v4112 = vunpack.c.l.b16 %v4096
    %v4113 = vunpack.c.l.b16 %v4097
    %v4114 = vunpack.c.l.b16 %v4098
    %v4115 = vunpack.c.l.b16 %v4099
    %v4116 = vunpack.c.l.b16 %v4100
    %v4117 = vunpack.c.l.b16 %v4101
    %v4118 = vunpack.c.l.b16 %v4102
    %v4119 = vunpack.c.l.b16 %v4103
    %v4120 = vpack.c.b16 %v4113, %v4112
    %v4121 = vpack.c.b16 %v4115, %v4114
    %v4122 = vpack.c.b16 %v4117, %v4116
    %v4123 = vpack.c.b16 %v4119, %v4118
    %vm4128 = vcmask 523264
    %v4130 = vsel %vm4128, %v4094, 0
    %v4133 = vsel %vm4128, %v4095, 0
    %4135 = vmatprep.subr.bf16.mxu0 0
    %4136 = vmatpush1.bf16.msra.mxu0 %v4120
    %4137 = vmatprep.subr.bf16.mxu0 0
    %4138 = vmatpush1.bf16.msra.mxu0 %v4121
    %4139 = vmatprep.subr.bf16.mxu0 0
    %4140 = vmatpush1.bf16.msra.mxu0 %v4122
    %4141 = vmatprep.subr.bf16.mxu0 0
    %4142 = vmatpush1.bf16.msra.mxu0 %v4123
    %4143 = vmatprep.subr.bf16.mxu0 0
    %4144 = vmatpush1.bf16.msra.mxu0 0
    %4145 = vmatprep.subr.bf16.mxu0 0
    %4146 = vmatpush1.bf16.msra.mxu0 0
    %4147 = vmatprep.subr.bf16.mxu0 0
    %4148 = vmatpush1.bf16.msra.mxu0 0
    %4149 = vmatprep.subr.bf16.mxu0 0
    %4150 = vmatpush1.bf16.msra.mxu0 0
    %4151 = vmatprep.subr.bf16.mxu0 0
    %4152 = vmatpush1.bf16.msra.mxu0 0
    %4153 = vmatprep.subr.bf16.mxu0 0
    %4154 = vmatpush1.bf16.msra.mxu0 0
    %4155 = vmatprep.subr.bf16.mxu0 0
    %4156 = vmatpush1.bf16.msra.mxu0 0
    %4157 = vmatprep.subr.bf16.mxu0 0
    %4158 = vmatpush1.bf16.msra.mxu0 0
    %4159 = vmatprep.subr.bf16.mxu0 0
    %4160 = vmatpush1.bf16.msra.mxu0 0
    %4161 = vmatprep.subr.bf16.mxu0 0
    %4162 = vmatpush1.bf16.msra.mxu0 0
    %4163 = vmatprep.subr.bf16.mxu0 0
    %4164 = vmatpush1.bf16.msra.mxu0 0
    %4165 = vmatprep.subr.bf16.mxu0 0
    %4166 = vmatpush1.bf16.msra.mxu0 0
    %4167 = vmatprep.mubr.bf16.mxu0 0
    %4168 = vmatmul.mubr.bf16.gmra.mrb[0].mxu0 %v4130
    %v4169 = vpop.f32.mrb[0].mxu0
    %v4170 = vadd.f32 0.0, %v4169
    %v4171 = vpop.f32.mrb[0].mxu0
    %v4172 = vpop.f32.mrb[0].mxu0
    %v4173 = vadd.f32 0.0, %v4172
    %v4174 = vpop.f32.mrb[0].mxu0
    %4175 = vmatprep.mubr.bf16.mxu0 0
    %4176 = vmatmul.mubr.bf16.gmra.mrb[0].mxu0 %v4133
    %v4177 = vpop.f32.mrb[0].mxu0
    %v4178 = vadd.f32 0.0, %v4177
    %v4179 = vpop.f32.mrb[0].mxu0
    %v4180 = vpop.f32.mrb[0].mxu0
    %v4181 = vadd.f32 0.0, %v4180
    %v4182 = vpop.f32.mrb[0].mxu0
    %4183 = vdwg.mxu0
    %v4184 = vsel %vm34, %v4170, 0.0
    %4185 = vadd.xlane.f32.xlu0 %v4184
    %v4186 = vpop.xlane.xlu0 %4185
    %v4187 = vsel %vm34, %v4173, 0.0
    %4188 = vadd.xlane.f32.xlu0 %v4187
    %v4189 = vpop.xlane.xlu0 %4188
    %v4190 = vsel %vm34, %v4178, 0.0
    %4191 = vadd.xlane.f32.xlu0 %v4190
    %v4192 = vpop.xlane.xlu0 %4191
    %v4193 = vsel %vm34, %v4181, 0.0
    %4194 = vadd.xlane.f32.xlu0 %v4193
    %v4195 = vpop.xlane.xlu0 %4194
    %v4196 = vmul.f32 %v4186, %v59
    %v4197 = vmul.f32 %v4189, %v59
    %v4198 = vmul.f32 %v4192, %v59
    %v4199 = vmul.f32 %v4195, %v59
    %v4200 = vsub.f32 %v4170, %v4196
    %v4201 = vsub.f32 %v4173, %v4197
    %v4202 = vsub.f32 %v4178, %v4198
    %v4203 = vsub.f32 %v4181, %v4199
    %v4204 = vmul.f32 %v4200, %v4200
    %v4205 = vmul.f32 %v4201, %v4201
    %v4206 = vmul.f32 %v4202, %v4202
    %v4207 = vmul.f32 %v4203, %v4203
    %v4208 = vsel %vm34, %v4204, 0.0
    %4209 = vadd.xlane.f32.xlu0 %v4208
    %v4210 = vpop.xlane.xlu0 %4209
    %v4211 = vsel %vm34, %v4205, 0.0
    %4212 = vadd.xlane.f32.xlu0 %v4211
    %v4213 = vpop.xlane.xlu0 %4212
    %v4214 = vsel %vm34, %v4206, 0.0
    %4215 = vadd.xlane.f32.xlu0 %v4214
    %v4216 = vpop.xlane.xlu0 %4215
    %v4217 = vsel %vm34, %v4207, 0.0
    %4218 = vadd.xlane.f32.xlu0 %v4217
    %v4219 = vpop.xlane.xlu0 %4218
    %v4220 = vmul.f32 %v4210, %v59
    %v4221 = vmul.f32 %v4213, %v59
    %v4222 = vmul.f32 %v4216, %v59
    %v4223 = vmul.f32 %v4219, %v59
    %v4224 = vadd.f32 %v4220, 1e-05
    %v4225 = vadd.f32 %v4221, 1e-05
    %v4226 = vadd.f32 %v4222, 1e-05
    %v4227 = vadd.f32 %v4223, 1e-05
    %v4228 = vrsqrt.pop %v4224
    %v4229 = vrsqrt.pop %v4225
    %v4230 = vrsqrt.pop %v4226
    %v4231 = vrsqrt.pop %v4227
    %v4232 = vmul.f32 %v4200, %v4228
    %v4233 = vmul.f32 %v4201, %v4229
    %v4234 = vmul.f32 %v4202, %v4230
    %v4235 = vmul.f32 %v4203, %v4231
    %v4236 = vlaneseq
    %v4237 = vshrl.u32 %v4236, 7
    %v4238 = vsub.s32 4, %v4237
    %v4239 = vrot.slane %v25, %v4238
    %v4240 = vmul.f32 %v4232, %v4239
    %v4241 = vmul.f32 %v4233, %v4239
    %v4242 = vmul.f32 %v4234, %v4239
    %v4243 = vmul.f32 %v4235, %v4239
    %v4244 = vlaneseq
    %v4245 = vshrl.u32 %v4244, 7
    %v4246 = vsub.s32 5, %v4245
    %v4247 = vrot.slane %v25, %v4246
    %v4248 = vadd.f32 %v4240, %v4247
    %v4249 = vadd.f32 %v4241, %v4247
    %v4250 = vadd.f32 %v4242, %v4247
    %v4251 = vadd.f32 %v4243, %v4247
    %4252 = vst.msk [vmem:[#allocation2] sm:$0xff] %vm34, %v4248
    %4253 = vst.msk [vmem:[#allocation2 + $0x8] sm:$0xff] %vm34, %v4249
    %4254 = vst.msk [vmem:[#allocation2 + $0x10] sm:$0xff] %vm34, %v4250
    %4255 = vst.msk [vmem:[#allocation2 + $0x18] sm:$0xff] %vm34, %v4251
    // Predicated region
    $region26: #{tpu_custom_call.1} parent=1 // pred_check
      _
    $region27: #{tpu_custom_call.1} parent=1 // pred_check_branch
      %4257 = sbr.rel (0) target = $region29
    $region28: #{tpu_custom_call.1} parent=1 // pred_region
      %s4259 = ssub.s32 512, 512
      %4260 = vsyncadd [#allocation3], %s4259
      %s4261 = sshll.u32 [#allocation2], 4
      %s4262 = int_to_ptr.vmem [resolvable:$true] %s4261
      %4267 = dma.vmem_to_hbm [thread:$0]  %s4262, 512, %s6, [#allocation3], 128, 128, 8
    $region29: #{tpu_custom_call.1} parent=1 // pred_fallthru
      _
    // Predicated region
    $region30: #{tpu_custom_call.1} parent=1 // pred_check
      _
    $region31: #{tpu_custom_call.1} parent=1 // pred_check_branch
      %4269 = sbr.rel (0) target = $region33
    $region32: #{tpu_custom_call.1} parent=1 // pred_region
      %4270 = dma.done [#allocation3], 512
    $region33: #{tpu_custom_call.1} parent=1 // pred_fallthru
      _
    %4271 = vsyncpa [#allocation3], 1

</llo_original>
